<compile_context>
chip_gen: v6e
topology: v6e:2x2x1
jax: 0.10.0
libtpu: 0.0.40
codegen_flags: <defaults>
</compile_context>

<pallas_src>
import numpy as np
import jax
import jax.numpy as jnp
from jax.experimental import pallas as pl
from jax.experimental.pallas import tpu as pltpu

EPS = 1e-5          # BatchNorm2d default eps
NEG_SLOPE = 0.2     # LeakyReLU(0.2)
CPAD = 8            # each conv tap's Cin block is padded to 8 sublanes


# --------------------------- static planning --------------------------------

def _build_plan(batch, wt_shapes, upsample_sizes):
    """Static per-layer geometry.

    Layer i's input sits in a zero-padded buffer of spatial (Hp, Wp) with
    padding = k-1-torch_pad (equivalent-conv padding), flattened per batch as
    b*Hp*Wp + h*Wp + w, so conv tap (di, dj) is the constant column offset di*Wp+dj.
    """
    n_layers = len(wt_shapes)
    plan = []
    H, W = 1, 1                                   # latent enters as 1x1 spatial
    for i, (cin, cout, k, _) in enumerate(wt_shapes):
        torch_pad = 0 if i == 0 else k // 2       # module: first ConvT has no padding
        cp = k - 1 - torch_pad                    # equivalent-conv padding
        if i > 0:
            tH, tW = (int(s) for s in upsample_sizes[i - 1])
            assert tH % H == 0 and tW % W == 0, "nearest upsample must be integer"
            H, W = tH, tW                         # spatial after nn.Upsample
        Hp, Wp = H + 2 * cp, W + 2 * cp
        Ho, Wo = Hp - k + 1, Wp - k + 1
        plan.append(dict(
            k=k, cin=cin, cout=cout, pad=cp,
            Hp=Hp, Wp=Wp, Ho=Ho, Wo=Wo,
            NC=batch * Hp * Wp,                   # columns the conv computes over
            marg=(k - 1) * Wp + (k - 1),          # tail margin keeps shifted reads in-bounds
            cnt=float(batch * Ho * Wo),           # valid elements/channel for BN stats
        ))
        H, W = Ho, Wo
    for i in range(1, n_layers):
        assert plan[i]['cin'] == plan[i - 1]['cout']
    # how layer i's output is repacked (de-junked, upsampled, re-padded) into layer i+1
    for i, lay in enumerate(plan):
        if i + 1 < n_layers:
            nxt = plan[i + 1]
            nH, nW = nxt['Hp'] - 2 * nxt['pad'], nxt['Wp'] - 2 * nxt['pad']
            s_h, s_w = nH // lay['Ho'], nW // lay['Wo']
            assert s_h * lay['Ho'] == nH and s_w * lay['Wo'] == nW
            lay['rep'] = dict(s_h=s_h, s_w=s_w,
                              dHp=nxt['Hp'], dWp=nxt['Wp'], dpad=nxt['pad'])
            lay['dst_w'] = nxt['NC'] + nxt['marg']
        else:  # last conv layer feeds the compact (unpadded) to_rgb buffer
            lay['rep'] = dict(s_h=1, s_w=1, dHp=lay['Ho'], dWp=lay['Wo'], dpad=0)
            lay['dst_w'] = batch * lay['Ho'] * lay['Wo']
    return plan, (H, W)


def _valid_mask(batch, Hp, Wp, Ho, Wo):
    """(1, batch*Hp*Wp) f32 mask: 1 where a computed conv column is a real output."""
    m = np.zeros((Hp, Wp), np.float32)
    m[:Ho, :Wo] = 1.0
    return jnp.asarray(np.tile(m.reshape(-1), batch)[None, :])


def _placement_matrix(batch, lay0):
    """(B, NC0+marg0) 0/1 matrix: xT @ P places each latent column at its padded centre."""
    Hp, Wp, pad = lay0['Hp'], lay0['Wp'], lay0['pad']
    P = np.zeros((batch, lay0['NC'] + lay0['marg']), np.float32)
    for b in range(batch):
        P[b, b * Hp * Wp + pad * Wp + pad] = 1.0
    return P


def _scatter_matrix(batch, lay):
    """(NC_src, dst_w) 0/1 matrix: y @ S = de-junk + nearest-upsample + re-pad (+zero fill)."""
    rep = lay['rep']
    Hp, Wp, Ho, Wo = lay['Hp'], lay['Wp'], lay['Ho'], lay['Wo']
    s_h, s_w = rep['s_h'], rep['s_w']
    dHp, dWp, dpad = rep['dHp'], rep['dWp'], rep['dpad']
    S = np.zeros((batch * Hp * Wp, lay['dst_w']), np.float32)
    for b in range(batch):
        for ho in range(Ho):
            for wo in range(Wo):
                s = b * Hp * Wp + ho * Wp + wo
                for rh in range(s_h):
                    for rw in range(s_w):
                        d = (b * dHp * dWp
                             + (dpad + ho * s_h + rh) * dWp
                             + (dpad + wo * s_w + rw))
                        S[s, d] = 1.0
    return S


def _convT_weight_flat(wt):
    """ConvTranspose2d weight [Cin,Cout,k,k] -> flat equivalent-conv weight (Cout, k*k*CPAD).

    Column t*CPAD + ci (tap t = di*k+dj) holds W_eq[co, ci] = wt[ci, co, k-1-di, k-1-dj];
    the Cin block is zero-padded to CPAD so stacked-operand sublane offsets stay aligned.
    """
    cin, cout, k, _ = (int(s) for s in wt.shape)
    w_flip = jnp.flip(wt, axis=(2, 3))
    w_eq = jnp.transpose(w_flip, (2, 3, 1, 0)).reshape(k * k, cout, cin)   # [t, co, ci]
    if cin < CPAD:
        w_eq = jnp.pad(w_eq, ((0, 0), (0, 0), (0, CPAD - cin)))
    return jnp.transpose(w_eq, (1, 0, 2)).reshape(cout, k * k * CPAD)      # [co, t*CPAD+ci]


# --------------------------- the fused Pallas kernel -------------------------

def _make_decoder_kernel(plan, batch, final_hw, stk_shape):
    n_layers = len(plan)
    Hf, Wf = final_hw
    HWf = Hf * Wf

    def kernel(*refs):
        # ---- unpack: inputs..., output, scratch ----
        pos = 0
        xT_ref, p0_ref = refs[pos], refs[pos + 1]; pos += 2
        layer_refs = []
        for _ in range(n_layers):
            layer_refs.append(refs[pos:pos + 6]); pos += 6
        wrgb_ref, brgb_ref = refs[pos], refs[pos + 1]; pos += 2
        out_ref = refs[pos]; pos += 1
        bufA, bufB, stk = refs[pos], refs[pos + 1], refs[pos + 2]
        bufs = (bufA, bufB)

        # zero the stacked-operand scratch ONCE (padded channel rows must hold finite 0s,
        # not stale-VMEM NaNs); activation buffers are fully written by matmuls -> no init.
        stk[...] = jnp.zeros(stk_shape, jnp.bfloat16)

        # ---- latent placement: one matmul + one lane-dense store ----
        lat = plan[0]['cin']
        w0 = plan[0]['NC'] + plan[0]['marg']
        bufs[0][:lat, :w0] = jnp.dot(xT_ref[...], p0_ref[...],
                                     preferred_element_type=jnp.float32)

        # ---- fused ConvT + bias + LeakyReLU + BatchNorm + repack, per layer ----
        for i, lay in enumerate(plan):
            w_ref, b_ref, g_ref, be_ref, m_ref, s_ref = layer_refs[i]
            src, dst = bufs[i % 2], bufs[(i + 1) % 2]
            k, cin, cout = lay['k'], lay['cin'], lay['cout']
            Wp, NC = lay['Wp'], lay['NC']
            kkp = k * k * CPAD

            # stack the k*k shifted windows along the contraction (sublane) axis, bf16
            for t in range(k * k):
                off = (t // k) * Wp + (t % k)
                stk[t * CPAD:t * CPAD + cin, :NC] = \
                    src[:cin, off:off + NC].astype(jnp.bfloat16)

            # ONE wide-contraction bf16 matmul on the MXU (f32 accumulate)
            y = jnp.dot(w_ref[...], stk[:kkp, :NC],
                        preferred_element_type=jnp.float32)          # (Cout, NC) f32
            y = y + b_ref[...]                                        # conv bias
            y = jnp.maximum(y, NEG_SLOPE * y)                         # LeakyReLU(0.2)

            # single-pass masked BatchNorm (train-mode batch statistics, f32)
            m = m_ref[...]                                            # (1, NC) validity mask
            ym = y * m
            inv_cnt = 1.0 / lay['cnt']
            mean = jnp.sum(ym, axis=1, keepdims=True) * inv_cnt
            var = jnp.maximum(
                jnp.sum(ym * y, axis=1, keepdims=True) * inv_cnt - mean * mean, 0.0)
            scale = g_ref[...] * jax.lax.rsqrt(var + EPS)
            shift = be_ref[...] - mean * scale
            y = y * scale + shift

            # de-junk + nearest-upsample + re-pad (+ zero pad ring & margin) in ONE
            # lane-dense scatter matmul into the next ping-pong buffer.
            dw = lay['dst_w']
            dst[:cout, :dw] = jnp.dot(y.astype(jnp.bfloat16), s_ref[...],
                                      preferred_element_type=jnp.float32)

        # ---- to_rgb head: 1x1 conv + sigmoid, emitted as [B*3, H*W] ----
        act = bufs[n_layers % 2]
        c_last = plan[-1]['cout']
        rgb = jnp.dot(wrgb_ref[...], act[:c_last, :batch * HWf].astype(jnp.bfloat16),
                      preferred_element_type=jnp.float32)
        rgb = jax.nn.sigmoid(rgb + brgb_ref[...])
        for b in range(batch):
            out_ref[b * 3:(b + 1) * 3, :] = rgb[:, b * HWf:(b + 1) * HWf]

    return kernel


# --------------------------- host wrapper ------------------------------------

def cnn_decoder_forward(x, layers, w_rgb, b_rgb, upsample_sizes):
    """x: [B, latent] -> rgb [B, 3, H, W] (NCHW, like the PyTorch module)."""
    batch, latent = x.shape
    wt_shapes = [tuple(int(s) for s in p['wt'].shape) for p in layers]
    plan, (Hf, Wf) = _build_plan(batch, wt_shapes, upsample_sizes)
    assert plan[0]['cin'] == latent
    n_layers = len(plan)
    c_last = plan[-1]['cout']
    HWf = Hf * Wf

    # kernel inputs (tiny one-time parameter reshapes; matmul operands in bf16)
    inputs = [jnp.transpose(x).astype(jnp.bfloat16),                       # (latent, B)
              jnp.asarray(_placement_matrix(batch, plan[0]), jnp.bfloat16)]
    for p, lay in zip(layers, plan):
        cout = lay['cout']
        inputs += [
            _convT_weight_flat(p['wt']).astype(jnp.bfloat16),              # (Cout, k*k*CPAD)
            p['b'].reshape(cout, 1).astype(jnp.float32),
            p['g'].reshape(cout, 1).astype(jnp.float32),
            p['be'].reshape(cout, 1).astype(jnp.float32),
            _valid_mask(batch, lay['Hp'], lay['Wp'], lay['Ho'], lay['Wo']),
            jnp.asarray(_scatter_matrix(batch, lay), jnp.bfloat16),
        ]
    inputs += [jnp.transpose(w_rgb).astype(jnp.bfloat16),                  # (3, C_last)
               b_rgb.reshape(3, 1).astype(jnp.float32)]

    # two ping-pong activation buffers sized to the largest layer + one stacked-operand
    # scratch reused by every conv (keeps peak region-0 VMEM small; matters on v7x).
    buf_rows = max(max(l['cin'] for l in plan), c_last)
    buf_cols = max(max(l['NC'] + l['marg'] for l in plan), batch * HWf)
    stk_shape = (max(l['k'] * l['k'] for l in plan) * CPAD, max(l['NC'] for l in plan))
    scratch = [pltpu.VMEM((buf_rows, buf_cols), jnp.float32),
               pltpu.VMEM((buf_rows, buf_cols), jnp.float32),
               pltpu.VMEM(stk_shape, jnp.bfloat16)]

    flops = sum(2 * l['k'] * l['k'] * CPAD * l['cout'] * l['NC']
                + 2 * l['NC'] * l['cout'] * l['dst_w'] for l in plan)
    flops += 2 * 3 * c_last * batch * HWf
    flops += 2 * batch * latent * (plan[0]['NC'] + plan[0]['marg'])
    nbytes = sum(int(np.prod(a.shape)) * a.dtype.itemsize for a in inputs)
    nbytes += 4 * 3 * batch * HWf
    cost = pl.CostEstimate(flops=int(flops),
                           transcendentals=int(3 * batch * HWf + 8 * n_layers),
                           bytes_accessed=int(nbytes))

    out2d = pl.pallas_call(
        _make_decoder_kernel(plan, batch, (Hf, Wf), stk_shape),
        out_shape=jax.ShapeDtypeStruct((batch * 3, HWf), jnp.float32),
        in_specs=[pl.BlockSpec(memory_space=pltpu.MemorySpace.VMEM)] * len(inputs),
        out_specs=pl.BlockSpec(memory_space=pltpu.MemorySpace.VMEM),
        scratch_shapes=scratch,
        compiler_params=pltpu.CompilerParams(vmem_limit_bytes=32 * 1024 * 1024),
        cost_estimate=cost,
    )(*inputs)
    return out2d.reshape(batch, 3, Hf, Wf)                                 # NCHW, no transpose


# --------------------------- module glue / params ----------------------------

def build_upsample_sizes(output_shape, kernel_size, upsampling):
    """Replicates the upsampling_shapes logic in CNNDecoder.__init__."""
    shapes = [tuple(int(s) for s in output_shape)]
    cur = tuple(int(s) for s in output_shape)
    for u, _k in zip(reversed(upsampling), reversed(kernel_size[1:-1])):
        cur = tuple(c // u for c in cur)
        shapes.append(cur)
    shapes.reverse()
    return shapes


def init_params(key, latent, kernel_size, channels):
    keys = iter(jax.random.split(key, 4 * len(kernel_size) + 2))
    layers = []
    in_chs = [latent] + list(channels[:-1])
    for i, k in enumerate(kernel_size):
        cin, cout = in_chs[i], channels[i]
        layers.append(dict(
            wt=0.1 * jax.random.normal(next(keys), (cin, cout, k, k), jnp.float32),
            b=0.1 * jax.random.normal(next(keys), (cout,), jnp.float32),
            g=1.0 + 0.1 * jax.random.normal(next(keys), (cout,), jnp.float32),
            be=0.1 * jax.random.normal(next(keys), (cout,), jnp.float32),
        ))
    w_rgb = 0.1 * jax.random.normal(next(keys), (channels[-1], 3), jnp.float32)
    b_rgb = 0.1 * jax.random.normal(next(keys), (3,), jnp.float32)
    return layers, w_rgb, b_rgb


# --------------------------- pure-JAX reference ------------------------------

def _nearest_upsample(x, size):
    B, H, W, C = x.shape
    assert size[0] % H == 0 and size[1] % W == 0
    return jnp.repeat(jnp.repeat(x, size[0] // H, axis=1), size[1] // W, axis=2)


def _ref_convT(xn, wt, b, p):
    """Direct scatter-add definition of ConvTranspose2d (stride=1, padding=p)."""
    B, H, W, Ci = xn.shape
    _, Co, k, _ = wt.shape
    Hf, Wf = H + k - 1, W + k - 1
    out = jnp.zeros((B, Hf, Wf, Co), jnp.float32)
    for i in range(k):
        for j in range(k):
            out = out.at[:, i:i + H, j:j + W, :].add(
                jnp.einsum('nhwc,cd->nhwd', xn, wt[:, :, i, j]))
    return out[:, p:Hf - p, p:Wf - p, :] + b


def _ref_lrelu_bn(y, g, be):
    y = jnp.where(y >= 0, y, NEG_SLOPE * y)
    mean = y.mean(axis=(0, 1, 2), keepdims=True)
    var = ((y - mean) ** 2).mean(axis=(0, 1, 2), keepdims=True)
    return g * (y - mean) * jax.lax.rsqrt(var + EPS) + be


def ref_forward(x, layers, w_rgb, b_rgb, upsample_sizes):
    B, L = x.shape
    h = x.reshape(B, 1, 1, L)
    for i, p in enumerate(layers):
        if i > 0:
            h = _nearest_upsample(h, upsample_sizes[i - 1])
        pad = 0 if i == 0 else p['wt'].shape[2] // 2
        h = _ref_convT(h, p['wt'], p['b'], pad)
        h = _ref_lrelu_bn(h, p['g'], p['be'])
    rgb = jax.nn.sigmoid(jnp.einsum('nhwc,cd->nhwd', h, w_rgb) + b_rgb)
    return jnp.transpose(rgb, (0, 3, 1, 2))


# --------------------------- main --------------------------------------------

if __name__ == "__main__":
    # Small hyper-params consistent with CNNDecoder.__init__:
    output_shape = (16, 16)
    latent_size = 8
    kernel_size = [4, 3, 3]       # first ConvT (no pad) + two "same" ConvT layers
    channels = [8, 6, 4]
    upsampling = [4]
    B = 2

    key = jax.random.PRNGKey(0)
    kx, kp = jax.random.split(key)
    x = jax.random.normal(kx, (B, latent_size), jnp.float32)

    layers, w_rgb, b_rgb = init_params(kp, latent_size, kernel_size, channels)
    upsample_sizes = build_upsample_sizes(output_shape, kernel_size, upsampling)

    rgb = cnn_decoder_forward(x, layers, w_rgb, b_rgb, upsample_sizes)
    rgb = jax.block_until_ready(rgb)

    assert rgb.shape == (B, 3, output_shape[0], output_shape[1]), rgb.shape
    ref = ref_forward(x, layers, w_rgb, b_rgb, upsample_sizes)
    err = float(jnp.max(jnp.abs(rgb - ref)))
    # bf16 MXU operands (f32 accumulate/BN) vs the all-f32 reference: ~1e-2 level.
    assert err < 4e-2, f"mismatch vs reference: {err}"

    print("KERNEL_OK")
</pallas_src>

<mosaic_0001>
module attributes {stable_mosaic.version = 11 : i64} {
  func.func @kernel(%arg0: memref<8x2xbf16, #tpu.memory_space<vmem>>, %arg1: memref<2x122xbf16, #tpu.memory_space<vmem>>, %arg2: memref<8x128xbf16, #tpu.memory_space<vmem>>, %arg3: memref<8x1xf32, #tpu.memory_space<vmem>>, %arg4: memref<8x1xf32, #tpu.memory_space<vmem>>, %arg5: memref<8x1xf32, #tpu.memory_space<vmem>>, %arg6: memref<1x98xf32, #tpu.memory_space<vmem>>, %arg7: memref<98x86xbf16, #tpu.memory_space<vmem>>, %arg8: memref<6x72xbf16, #tpu.memory_space<vmem>>, %arg9: memref<6x1xf32, #tpu.memory_space<vmem>>, %arg10: memref<6x1xf32, #tpu.memory_space<vmem>>, %arg11: memref<6x1xf32, #tpu.memory_space<vmem>>, %arg12: memref<1x72xf32, #tpu.memory_space<vmem>>, %arg13: memref<72x686xbf16, #tpu.memory_space<vmem>>, %arg14: memref<4x72xbf16, #tpu.memory_space<vmem>>, %arg15: memref<4x1xf32, #tpu.memory_space<vmem>>, %arg16: memref<4x1xf32, #tpu.memory_space<vmem>>, %arg17: memref<4x1xf32, #tpu.memory_space<vmem>>, %arg18: memref<1x648xf32, #tpu.memory_space<vmem>>, %arg19: memref<648x512xbf16, #tpu.memory_space<vmem>>, %arg20: memref<3x4xbf16, #tpu.memory_space<vmem>>, %arg21: memref<3x1xf32, #tpu.memory_space<vmem>>, %arg22: memref<6x256xf32, #tpu.memory_space<vmem>>, %arg23: memref<8x686xf32, #tpu.memory_space<vmem>>, %arg24: memref<8x686xf32, #tpu.memory_space<vmem>>, %arg25: memref<128x648xbf16, #tpu.memory_space<vmem>>) attributes {dimension_semantics = [], scalar_prefetch = 0 : i64, scratch_operands = 3 : i64, tpu.core_type = #tpu.core_type<tc>} {
    %cst = arith.constant 0.000000e+00 : bf16
    %0 = vector.broadcast %cst : bf16 to vector<128x648xbf16>
    %c0 = arith.constant 0 : index
    %c0_0 = arith.constant 0 : index
    %1 = vector.load %arg25[%c0, %c0_0] : memref<128x648xbf16, #tpu.memory_space<vmem>>, vector<128x648xbf16>
    tpu.vector_store %arg25[%c0, %c0_0], %0 {strides = array<i32>} : memref<128x648xbf16, #tpu.memory_space<vmem>>, vector<128x648xbf16>,
    %c0_1 = arith.constant 0 : index
    %c0_2 = arith.constant 0 : index
    %2 = vector.load %arg0[%c0_1, %c0_2] : memref<8x2xbf16, #tpu.memory_space<vmem>>, vector<8x2xbf16>
    %c0_3 = arith.constant 0 : index
    %c0_4 = arith.constant 0 : index
    %3 = vector.load %arg1[%c0_3, %c0_4] : memref<2x122xbf16, #tpu.memory_space<vmem>>, vector<2x122xbf16>
    %cst_5 = arith.constant dense<0.000000e+00> : vector<8x122xf32>
    %4 = tpu.matmul %2, %3, %cst_5 {dimension_numbers = #tpu.dot_dimension_numbers<[1], [0], [0], [1], [0, 0, 1, 1], [], []>} : vector<8x2xbf16>, vector<2x122xbf16>, vector<8x122xf32> -> vector<8x122xf32>
    %c0_6 = arith.constant 0 : index
    %c0_7 = arith.constant 0 : index
    %5 = vector.load %arg23[%c0_6, %c0_7] : memref<8x686xf32, #tpu.memory_space<vmem>>, vector<8x122xf32>
    tpu.vector_store %arg23[%c0_6, %c0_7], %4 {strides = array<i32>} : memref<8x686xf32, #tpu.memory_space<vmem>>, vector<8x122xf32>,
    %c0_8 = arith.constant 0 : index
    %c0_9 = arith.constant 0 : index
    %6 = vector.load %arg23[%c0_8, %c0_9] : memref<8x686xf32, #tpu.memory_space<vmem>>, vector<8x98xf32>
    %7 = arith.truncf %6 : vector<8x98xf32> to vector<8x98xbf16>
    %c0_10 = arith.constant 0 : index
    %c0_11 = arith.constant 0 : index
    %8 = vector.load %arg25[%c0_10, %c0_11] : memref<128x648xbf16, #tpu.memory_space<vmem>>, vector<8x98xbf16>
    tpu.vector_store %arg25[%c0_10, %c0_11], %7 {strides = array<i32>} : memref<128x648xbf16, #tpu.memory_space<vmem>>, vector<8x98xbf16>,
    %c0_12 = arith.constant 0 : index
    %c1 = arith.constant 1 : index
    %9 = vector.load %arg23[%c0_12, %c1] : memref<8x686xf32, #tpu.memory_space<vmem>>, vector<8x98xf32>
    %10 = arith.truncf %9 : vector<8x98xf32> to vector<8x98xbf16>
    %c8 = arith.constant 8 : index
    %c0_13 = arith.constant 0 : index
    %11 = vector.load %arg25[%c8, %c0_13] : memref<128x648xbf16, #tpu.memory_space<vmem>>, vector<8x98xbf16>
    tpu.vector_store %arg25[%c8, %c0_13], %10 {strides = array<i32>} : memref<128x648xbf16, #tpu.memory_space<vmem>>, vector<8x98xbf16>,
    %c0_14 = arith.constant 0 : index
    %c2 = arith.constant 2 : index
    %12 = vector.load %arg23[%c0_14, %c2] : memref<8x686xf32, #tpu.memory_space<vmem>>, vector<8x98xf32>
    %13 = arith.truncf %12 : vector<8x98xf32> to vector<8x98xbf16>
    %c16 = arith.constant 16 : index
    %c0_15 = arith.constant 0 : index
    %14 = vector.load %arg25[%c16, %c0_15] : memref<128x648xbf16, #tpu.memory_space<vmem>>, vector<8x98xbf16>
    tpu.vector_store %arg25[%c16, %c0_15], %13 {strides = array<i32>} : memref<128x648xbf16, #tpu.memory_space<vmem>>, vector<8x98xbf16>,
    %c0_16 = arith.constant 0 : index
    %c3 = arith.constant 3 : index
    %15 = vector.load %arg23[%c0_16, %c3] : memref<8x686xf32, #tpu.memory_space<vmem>>, vector<8x98xf32>
    %16 = arith.truncf %15 : vector<8x98xf32> to vector<8x98xbf16>
    %c24 = arith.constant 24 : index
    %c0_17 = arith.constant 0 : index
    %17 = vector.load %arg25[%c24, %c0_17] : memref<128x648xbf16, #tpu.memory_space<vmem>>, vector<8x98xbf16>
    tpu.vector_store %arg25[%c24, %c0_17], %16 {strides = array<i32>} : memref<128x648xbf16, #tpu.memory_space<vmem>>, vector<8x98xbf16>,
    %c0_18 = arith.constant 0 : index
    %c7 = arith.constant 7 : index
    %18 = vector.load %arg23[%c0_18, %c7] : memref<8x686xf32, #tpu.memory_space<vmem>>, vector<8x98xf32>
    %19 = arith.truncf %18 : vector<8x98xf32> to vector<8x98xbf16>
    %c32 = arith.constant 32 : index
    %c0_19 = arith.constant 0 : index
    %20 = vector.load %arg25[%c32, %c0_19] : memref<128x648xbf16, #tpu.memory_space<vmem>>, vector<8x98xbf16>
    tpu.vector_store %arg25[%c32, %c0_19], %19 {strides = array<i32>} : memref<128x648xbf16, #tpu.memory_space<vmem>>, vector<8x98xbf16>,
    %c0_20 = arith.constant 0 : index
    %c8_21 = arith.constant 8 : index
    %21 = vector.load %arg23[%c0_20, %c8_21] : memref<8x686xf32, #tpu.memory_space<vmem>>, vector<8x98xf32>
    %22 = arith.truncf %21 : vector<8x98xf32> to vector<8x98xbf16>
    %c40 = arith.constant 40 : index
    %c0_22 = arith.constant 0 : index
    %23 = vector.load %arg25[%c40, %c0_22] : memref<128x648xbf16, #tpu.memory_space<vmem>>, vector<8x98xbf16>
    tpu.vector_store %arg25[%c40, %c0_22], %22 {strides = array<i32>} : memref<128x648xbf16, #tpu.memory_space<vmem>>, vector<8x98xbf16>,
    %c0_23 = arith.constant 0 : index
    %c9 = arith.constant 9 : index
    %24 = vector.load %arg23[%c0_23, %c9] : memref<8x686xf32, #tpu.memory_space<vmem>>, vector<8x98xf32>
    %25 = arith.truncf %24 : vector<8x98xf32> to vector<8x98xbf16>
    %c48 = arith.constant 48 : index
    %c0_24 = arith.constant 0 : index
    %26 = vector.load %arg25[%c48, %c0_24] : memref<128x648xbf16, #tpu.memory_space<vmem>>, vector<8x98xbf16>
    tpu.vector_store %arg25[%c48, %c0_24], %25 {strides = array<i32>} : memref<128x648xbf16, #tpu.memory_space<vmem>>, vector<8x98xbf16>,
    %c0_25 = arith.constant 0 : index
    %c10 = arith.constant 10 : index
    %27 = vector.load %arg23[%c0_25, %c10] : memref<8x686xf32, #tpu.memory_space<vmem>>, vector<8x98xf32>
    %28 = arith.truncf %27 : vector<8x98xf32> to vector<8x98xbf16>
    %c56 = arith.constant 56 : index
    %c0_26 = arith.constant 0 : index
    %29 = vector.load %arg25[%c56, %c0_26] : memref<128x648xbf16, #tpu.memory_space<vmem>>, vector<8x98xbf16>
    tpu.vector_store %arg25[%c56, %c0_26], %28 {strides = array<i32>} : memref<128x648xbf16, #tpu.memory_space<vmem>>, vector<8x98xbf16>,
    %c0_27 = arith.constant 0 : index
    %c14 = arith.constant 14 : index
    %30 = vector.load %arg23[%c0_27, %c14] : memref<8x686xf32, #tpu.memory_space<vmem>>, vector<8x98xf32>
    %31 = arith.truncf %30 : vector<8x98xf32> to vector<8x98xbf16>
    %c64 = arith.constant 64 : index
    %c0_28 = arith.constant 0 : index
    %32 = vector.load %arg25[%c64, %c0_28] : memref<128x648xbf16, #tpu.memory_space<vmem>>, vector<8x98xbf16>
    tpu.vector_store %arg25[%c64, %c0_28], %31 {strides = array<i32>} : memref<128x648xbf16, #tpu.memory_space<vmem>>, vector<8x98xbf16>,
    %c0_29 = arith.constant 0 : index
    %c15 = arith.constant 15 : index
    %33 = vector.load %arg23[%c0_29, %c15] : memref<8x686xf32, #tpu.memory_space<vmem>>, vector<8x98xf32>
    %34 = arith.truncf %33 : vector<8x98xf32> to vector<8x98xbf16>
    %c72 = arith.constant 72 : index
    %c0_30 = arith.constant 0 : index
    %35 = vector.load %arg25[%c72, %c0_30] : memref<128x648xbf16, #tpu.memory_space<vmem>>, vector<8x98xbf16>
    tpu.vector_store %arg25[%c72, %c0_30], %34 {strides = array<i32>} : memref<128x648xbf16, #tpu.memory_space<vmem>>, vector<8x98xbf16>,
    %c0_31 = arith.constant 0 : index
    %c16_32 = arith.constant 16 : index
    %36 = vector.load %arg23[%c0_31, %c16_32] : memref<8x686xf32, #tpu.memory_space<vmem>>, vector<8x98xf32>
    %37 = arith.truncf %36 : vector<8x98xf32> to vector<8x98xbf16>
    %c80 = arith.constant 80 : index
    %c0_33 = arith.constant 0 : index
    %38 = vector.load %arg25[%c80, %c0_33] : memref<128x648xbf16, #tpu.memory_space<vmem>>, vector<8x98xbf16>
    tpu.vector_store %arg25[%c80, %c0_33], %37 {strides = array<i32>} : memref<128x648xbf16, #tpu.memory_space<vmem>>, vector<8x98xbf16>,
    %c0_34 = arith.constant 0 : index
    %c17 = arith.constant 17 : index
    %39 = vector.load %arg23[%c0_34, %c17] : memref<8x686xf32, #tpu.memory_space<vmem>>, vector<8x98xf32>
    %40 = arith.truncf %39 : vector<8x98xf32> to vector<8x98xbf16>
    %c88 = arith.constant 88 : index
    %c0_35 = arith.constant 0 : index
    %41 = vector.load %arg25[%c88, %c0_35] : memref<128x648xbf16, #tpu.memory_space<vmem>>, vector<8x98xbf16>
    tpu.vector_store %arg25[%c88, %c0_35], %40 {strides = array<i32>} : memref<128x648xbf16, #tpu.memory_space<vmem>>, vector<8x98xbf16>,
    %c0_36 = arith.constant 0 : index
    %c21 = arith.constant 21 : index
    %42 = vector.load %arg23[%c0_36, %c21] : memref<8x686xf32, #tpu.memory_space<vmem>>, vector<8x98xf32>
    %43 = arith.truncf %42 : vector<8x98xf32> to vector<8x98xbf16>
    %c96 = arith.constant 96 : index
    %c0_37 = arith.constant 0 : index
    %44 = vector.load %arg25[%c96, %c0_37] : memref<128x648xbf16, #tpu.memory_space<vmem>>, vector<8x98xbf16>
    tpu.vector_store %arg25[%c96, %c0_37], %43 {strides = array<i32>} : memref<128x648xbf16, #tpu.memory_space<vmem>>, vector<8x98xbf16>,
    %c0_38 = arith.constant 0 : index
    %c22 = arith.constant 22 : index
    %45 = vector.load %arg23[%c0_38, %c22] : memref<8x686xf32, #tpu.memory_space<vmem>>, vector<8x98xf32>
    %46 = arith.truncf %45 : vector<8x98xf32> to vector<8x98xbf16>
    %c104 = arith.constant 104 : index
    %c0_39 = arith.constant 0 : index
    %47 = vector.load %arg25[%c104, %c0_39] : memref<128x648xbf16, #tpu.memory_space<vmem>>, vector<8x98xbf16>
    tpu.vector_store %arg25[%c104, %c0_39], %46 {strides = array<i32>} : memref<128x648xbf16, #tpu.memory_space<vmem>>, vector<8x98xbf16>,
    %c0_40 = arith.constant 0 : index
    %c23 = arith.constant 23 : index
    %48 = vector.load %arg23[%c0_40, %c23] : memref<8x686xf32, #tpu.memory_space<vmem>>, vector<8x98xf32>
    %49 = arith.truncf %48 : vector<8x98xf32> to vector<8x98xbf16>
    %c112 = arith.constant 112 : index
    %c0_41 = arith.constant 0 : index
    %50 = vector.load %arg25[%c112, %c0_41] : memref<128x648xbf16, #tpu.memory_space<vmem>>, vector<8x98xbf16>
    tpu.vector_store %arg25[%c112, %c0_41], %49 {strides = array<i32>} : memref<128x648xbf16, #tpu.memory_space<vmem>>, vector<8x98xbf16>,
    %c0_42 = arith.constant 0 : index
    %c24_43 = arith.constant 24 : index
    %51 = vector.load %arg23[%c0_42, %c24_43] : memref<8x686xf32, #tpu.memory_space<vmem>>, vector<8x98xf32>
    %52 = arith.truncf %51 : vector<8x98xf32> to vector<8x98xbf16>
    %c120 = arith.constant 120 : index
    %c0_44 = arith.constant 0 : index
    %53 = vector.load %arg25[%c120, %c0_44] : memref<128x648xbf16, #tpu.memory_space<vmem>>, vector<8x98xbf16>
    tpu.vector_store %arg25[%c120, %c0_44], %52 {strides = array<i32>} : memref<128x648xbf16, #tpu.memory_space<vmem>>, vector<8x98xbf16>,
    %c0_45 = arith.constant 0 : index
    %c0_46 = arith.constant 0 : index
    %54 = vector.load %arg2[%c0_45, %c0_46] : memref<8x128xbf16, #tpu.memory_space<vmem>>, vector<8x128xbf16>
    %c0_47 = arith.constant 0 : index
    %c0_48 = arith.constant 0 : index
    %55 = vector.load %arg25[%c0_47, %c0_48] : memref<128x648xbf16, #tpu.memory_space<vmem>>, vector<128x98xbf16>
    %cst_49 = arith.constant dense<0.000000e+00> : vector<8x98xf32>
    %56 = tpu.matmul %54, %55, %cst_49 {dimension_numbers = #tpu.dot_dimension_numbers<[1], [0], [0], [1], [0, 0, 1, 1], [], []>} : vector<8x128xbf16>, vector<128x98xbf16>, vector<8x98xf32> -> vector<8x98xf32>
    %c0_50 = arith.constant 0 : index
    %c0_51 = arith.constant 0 : index
    %57 = vector.load %arg3[%c0_50, %c0_51] : memref<8x1xf32, #tpu.memory_space<vmem>>, vector<8x1xf32>
    %58 = vector.broadcast %57 : vector<8x1xf32> to vector<8x98xf32>
    %59 = arith.addf %56, %58 : vector<8x98xf32>
    %cst_52 = arith.constant 2.000000e-01 : f32
    %60 = vector.broadcast %cst_52 : f32 to vector<8x98xf32>
    %61 = arith.mulf %60, %59 : vector<8x98xf32>
    %62 = arith.maximumf %59, %61 : vector<8x98xf32>
    %c0_53 = arith.constant 0 : index
    %c0_54 = arith.constant 0 : index
    %63 = vector.load %arg6[%c0_53, %c0_54] : memref<1x98xf32, #tpu.memory_space<vmem>>, vector<1x98xf32>
    %64 = vector.broadcast %63 : vector<1x98xf32> to vector<8x98xf32>
    %65 = arith.mulf %62, %64 : vector<8x98xf32>
    %cst_55 = arith.constant dense<0.000000e+00> : vector<8xf32>
    %66 = vector.multi_reduction <add>, %65, %cst_55 [1] : vector<8x98xf32> to vector<8xf32>
    %67 = vector.shape_cast %66 : vector<8xf32> to vector<8x1xf32>
    %cst_56 = arith.constant 3.125000e-02 : f32
    %68 = vector.broadcast %cst_56 : f32 to vector<8x1xf32>
    %69 = arith.mulf %67, %68 : vector<8x1xf32>
    %70 = arith.mulf %65, %62 : vector<8x98xf32>
    %cst_57 = arith.constant dense<0.000000e+00> : vector<8xf32>
    %71 = vector.multi_reduction <add>, %70, %cst_57 [1] : vector<8x98xf32> to vector<8xf32>
    %72 = vector.shape_cast %71 : vector<8xf32> to vector<8x1xf32>
    %cst_58 = arith.constant 3.125000e-02 : f32
    %73 = vector.broadcast %cst_58 : f32 to vector<8x1xf32>
    %74 = arith.mulf %72, %73 : vector<8x1xf32>
    %75 = arith.mulf %69, %69 : vector<8x1xf32>
    %76 = arith.subf %74, %75 : vector<8x1xf32>
    %cst_59 = arith.constant 0.000000e+00 : f32
    %77 = vector.broadcast %cst_59 : f32 to vector<8x1xf32>
    %78 = arith.maximumf %76, %77 : vector<8x1xf32>
    %c0_60 = arith.constant 0 : index
    %c0_61 = arith.constant 0 : index
    %79 = vector.load %arg4[%c0_60, %c0_61] : memref<8x1xf32, #tpu.memory_space<vmem>>, vector<8x1xf32>
    %cst_62 = arith.constant 9.99999974E-6 : f32
    %80 = vector.broadcast %cst_62 : f32 to vector<8x1xf32>
    %81 = arith.addf %78, %80 : vector<8x1xf32>
    %82 = math.rsqrt %81 : vector<8x1xf32>
    %83 = arith.mulf %79, %82 : vector<8x1xf32>
    %c0_63 = arith.constant 0 : index
    %c0_64 = arith.constant 0 : index
    %84 = vector.load %arg5[%c0_63, %c0_64] : memref<8x1xf32, #tpu.memory_space<vmem>>, vector<8x1xf32>
    %85 = arith.mulf %69, %83 : vector<8x1xf32>
    %86 = arith.subf %84, %85 : vector<8x1xf32>
    %87 = vector.broadcast %83 : vector<8x1xf32> to vector<8x98xf32>
    %88 = arith.mulf %62, %87 : vector<8x98xf32>
    %89 = vector.broadcast %86 : vector<8x1xf32> to vector<8x98xf32>
    %90 = arith.addf %88, %89 : vector<8x98xf32>
    %91 = arith.truncf %90 : vector<8x98xf32> to vector<8x98xbf16>
    %c0_65 = arith.constant 0 : index
    %c0_66 = arith.constant 0 : index
    %92 = vector.load %arg7[%c0_65, %c0_66] : memref<98x86xbf16, #tpu.memory_space<vmem>>, vector<98x86xbf16>
    %cst_67 = arith.constant dense<0.000000e+00> : vector<8x86xf32>
    %93 = tpu.matmul %91, %92, %cst_67 {dimension_numbers = #tpu.dot_dimension_numbers<[1], [0], [0], [1], [0, 0, 1, 1], [], []>} : vector<8x98xbf16>, vector<98x86xbf16>, vector<8x86xf32> -> vector<8x86xf32>
    %c0_68 = arith.constant 0 : index
    %c0_69 = arith.constant 0 : index
    %94 = vector.load %arg24[%c0_68, %c0_69] : memref<8x686xf32, #tpu.memory_space<vmem>>, vector<8x86xf32>
    tpu.vector_store %arg24[%c0_68, %c0_69], %93 {strides = array<i32>} : memref<8x686xf32, #tpu.memory_space<vmem>>, vector<8x86xf32>,
    %c0_70 = arith.constant 0 : index
    %c0_71 = arith.constant 0 : index
    %95 = vector.load %arg24[%c0_70, %c0_71] : memref<8x686xf32, #tpu.memory_space<vmem>>, vector<8x72xf32>
    %96 = arith.truncf %95 : vector<8x72xf32> to vector<8x72xbf16>
    %c0_72 = arith.constant 0 : index
    %c0_73 = arith.constant 0 : index
    %97 = vector.load %arg25[%c0_72, %c0_73] : memref<128x648xbf16, #tpu.memory_space<vmem>>, vector<8x72xbf16>
    tpu.vector_store %arg25[%c0_72, %c0_73], %96 {strides = array<i32>} : memref<128x648xbf16, #tpu.memory_space<vmem>>, vector<8x72xbf16>,
    %c0_74 = arith.constant 0 : index
    %c1_75 = arith.constant 1 : index
    %98 = vector.load %arg24[%c0_74, %c1_75] : memref<8x686xf32, #tpu.memory_space<vmem>>, vector<8x72xf32>
    %99 = arith.truncf %98 : vector<8x72xf32> to vector<8x72xbf16>
    %c8_76 = arith.constant 8 : index
    %c0_77 = arith.constant 0 : index
    %100 = vector.load %arg25[%c8_76, %c0_77] : memref<128x648xbf16, #tpu.memory_space<vmem>>, vector<8x72xbf16>
    tpu.vector_store %arg25[%c8_76, %c0_77], %99 {strides = array<i32>} : memref<128x648xbf16, #tpu.memory_space<vmem>>, vector<8x72xbf16>,
    %c0_78 = arith.constant 0 : index
    %c2_79 = arith.constant 2 : index
    %101 = vector.load %arg24[%c0_78, %c2_79] : memref<8x686xf32, #tpu.memory_space<vmem>>, vector<8x72xf32>
    %102 = arith.truncf %101 : vector<8x72xf32> to vector<8x72xbf16>
    %c16_80 = arith.constant 16 : index
    %c0_81 = arith.constant 0 : index
    %103 = vector.load %arg25[%c16_80, %c0_81] : memref<128x648xbf16, #tpu.memory_space<vmem>>, vector<8x72xbf16>
    tpu.vector_store %arg25[%c16_80, %c0_81], %102 {strides = array<i32>} : memref<128x648xbf16, #tpu.memory_space<vmem>>, vector<8x72xbf16>,
    %c0_82 = arith.constant 0 : index
    %c6 = arith.constant 6 : index
    %104 = vector.load %arg24[%c0_82, %c6] : memref<8x686xf32, #tpu.memory_space<vmem>>, vector<8x72xf32>
    %105 = arith.truncf %104 : vector<8x72xf32> to vector<8x72xbf16>
    %c24_83 = arith.constant 24 : index
    %c0_84 = arith.constant 0 : index
    %106 = vector.load %arg25[%c24_83, %c0_84] : memref<128x648xbf16, #tpu.memory_space<vmem>>, vector<8x72xbf16>
    tpu.vector_store %arg25[%c24_83, %c0_84], %105 {strides = array<i32>} : memref<128x648xbf16, #tpu.memory_space<vmem>>, vector<8x72xbf16>,
    %c0_85 = arith.constant 0 : index
    %c7_86 = arith.constant 7 : index
    %107 = vector.load %arg24[%c0_85, %c7_86] : memref<8x686xf32, #tpu.memory_space<vmem>>, vector<8x72xf32>
    %108 = arith.truncf %107 : vector<8x72xf32> to vector<8x72xbf16>
    %c32_87 = arith.constant 32 : index
    %c0_88 = arith.constant 0 : index
    %109 = vector.load %arg25[%c32_87, %c0_88] : memref<128x648xbf16, #tpu.memory_space<vmem>>, vector<8x72xbf16>
    tpu.vector_store %arg25[%c32_87, %c0_88], %108 {strides = array<i32>} : memref<128x648xbf16, #tpu.memory_space<vmem>>, vector<8x72xbf16>,
    %c0_89 = arith.constant 0 : index
    %c8_90 = arith.constant 8 : index
    %110 = vector.load %arg24[%c0_89, %c8_90] : memref<8x686xf32, #tpu.memory_space<vmem>>, vector<8x72xf32>
    %111 = arith.truncf %110 : vector<8x72xf32> to vector<8x72xbf16>
    %c40_91 = arith.constant 40 : index
    %c0_92 = arith.constant 0 : index
    %112 = vector.load %arg25[%c40_91, %c0_92] : memref<128x648xbf16, #tpu.memory_space<vmem>>, vector<8x72xbf16>
    tpu.vector_store %arg25[%c40_91, %c0_92], %111 {strides = array<i32>} : memref<128x648xbf16, #tpu.memory_space<vmem>>, vector<8x72xbf16>,
    %c0_93 = arith.constant 0 : index
    %c12 = arith.constant 12 : index
    %113 = vector.load %arg24[%c0_93, %c12] : memref<8x686xf32, #tpu.memory_space<vmem>>, vector<8x72xf32>
    %114 = arith.truncf %113 : vector<8x72xf32> to vector<8x72xbf16>
    %c48_94 = arith.constant 48 : index
    %c0_95 = arith.constant 0 : index
    %115 = vector.load %arg25[%c48_94, %c0_95] : memref<128x648xbf16, #tpu.memory_space<vmem>>, vector<8x72xbf16>
    tpu.vector_store %arg25[%c48_94, %c0_95], %114 {strides = array<i32>} : memref<128x648xbf16, #tpu.memory_space<vmem>>, vector<8x72xbf16>,
    %c0_96 = arith.constant 0 : index
    %c13 = arith.constant 13 : index
    %116 = vector.load %arg24[%c0_96, %c13] : memref<8x686xf32, #tpu.memory_space<vmem>>, vector<8x72xf32>
    %117 = arith.truncf %116 : vector<8x72xf32> to vector<8x72xbf16>
    %c56_97 = arith.constant 56 : index
    %c0_98 = arith.constant 0 : index
    %118 = vector.load %arg25[%c56_97, %c0_98] : memref<128x648xbf16, #tpu.memory_space<vmem>>, vector<8x72xbf16>
    tpu.vector_store %arg25[%c56_97, %c0_98], %117 {strides = array<i32>} : memref<128x648xbf16, #tpu.memory_space<vmem>>, vector<8x72xbf16>,
    %c0_99 = arith.constant 0 : index
    %c14_100 = arith.constant 14 : index
    %119 = vector.load %arg24[%c0_99, %c14_100] : memref<8x686xf32, #tpu.memory_space<vmem>>, vector<8x72xf32>
    %120 = arith.truncf %119 : vector<8x72xf32> to vector<8x72xbf16>
    %c64_101 = arith.constant 64 : index
    %c0_102 = arith.constant 0 : index
    %121 = vector.load %arg25[%c64_101, %c0_102] : memref<128x648xbf16, #tpu.memory_space<vmem>>, vector<8x72xbf16>
    tpu.vector_store %arg25[%c64_101, %c0_102], %120 {strides = array<i32>} : memref<128x648xbf16, #tpu.memory_space<vmem>>, vector<8x72xbf16>,
    %c0_103 = arith.constant 0 : index
    %c0_104 = arith.constant 0 : index
    %122 = vector.load %arg8[%c0_103, %c0_104] : memref<6x72xbf16, #tpu.memory_space<vmem>>, vector<6x72xbf16>
    %c0_105 = arith.constant 0 : index
    %c0_106 = arith.constant 0 : index
    %123 = vector.load %arg25[%c0_105, %c0_106] : memref<128x648xbf16, #tpu.memory_space<vmem>>, vector<72x72xbf16>
    %cst_107 = arith.constant dense<0.000000e+00> : vector<6x72xf32>
    %124 = tpu.matmul %122, %123, %cst_107 {dimension_numbers = #tpu.dot_dimension_numbers<[1], [0], [0], [1], [0, 0, 1, 1], [], []>} : vector<6x72xbf16>, vector<72x72xbf16>, vector<6x72xf32> -> vector<6x72xf32>
    %c0_108 = arith.constant 0 : index
    %c0_109 = arith.constant 0 : index
    %125 = vector.load %arg9[%c0_108, %c0_109] : memref<6x1xf32, #tpu.memory_space<vmem>>, vector<6x1xf32>
    %126 = vector.broadcast %125 : vector<6x1xf32> to vector<6x72xf32>
    %127 = arith.addf %124, %126 : vector<6x72xf32>
    %cst_110 = arith.constant 2.000000e-01 : f32
    %128 = vector.broadcast %cst_110 : f32 to vector<6x72xf32>
    %129 = arith.mulf %128, %127 : vector<6x72xf32>
    %130 = arith.maximumf %127, %129 : vector<6x72xf32>
    %c0_111 = arith.constant 0 : index
    %c0_112 = arith.constant 0 : index
    %131 = vector.load %arg12[%c0_111, %c0_112] : memref<1x72xf32, #tpu.memory_space<vmem>>, vector<1x72xf32>
    %132 = vector.broadcast %131 : vector<1x72xf32> to vector<6x72xf32>
    %133 = arith.mulf %130, %132 : vector<6x72xf32>
    %cst_113 = arith.constant dense<0.000000e+00> : vector<6xf32>
    %134 = vector.multi_reduction <add>, %133, %cst_113 [1] : vector<6x72xf32> to vector<6xf32>
    %135 = vector.shape_cast %134 : vector<6xf32> to vector<6x1xf32>
    %cst_114 = arith.constant 3.125000e-02 : f32
    %136 = vector.broadcast %cst_114 : f32 to vector<6x1xf32>
    %137 = arith.mulf %135, %136 : vector<6x1xf32>
    %138 = arith.mulf %133, %130 : vector<6x72xf32>
    %cst_115 = arith.constant dense<0.000000e+00> : vector<6xf32>
    %139 = vector.multi_reduction <add>, %138, %cst_115 [1] : vector<6x72xf32> to vector<6xf32>
    %140 = vector.shape_cast %139 : vector<6xf32> to vector<6x1xf32>
    %cst_116 = arith.constant 3.125000e-02 : f32
    %141 = vector.broadcast %cst_116 : f32 to vector<6x1xf32>
    %142 = arith.mulf %140, %141 : vector<6x1xf32>
    %143 = arith.mulf %137, %137 : vector<6x1xf32>
    %144 = arith.subf %142, %143 : vector<6x1xf32>
    %cst_117 = arith.constant 0.000000e+00 : f32
    %145 = vector.broadcast %cst_117 : f32 to vector<6x1xf32>
    %146 = arith.maximumf %144, %145 : vector<6x1xf32>
    %c0_118 = arith.constant 0 : index
    %c0_119 = arith.constant 0 : index
    %147 = vector.load %arg10[%c0_118, %c0_119] : memref<6x1xf32, #tpu.memory_space<vmem>>, vector<6x1xf32>
    %cst_120 = arith.constant 9.99999974E-6 : f32
    %148 = vector.broadcast %cst_120 : f32 to vector<6x1xf32>
    %149 = arith.addf %146, %148 : vector<6x1xf32>
    %150 = math.rsqrt %149 : vector<6x1xf32>
    %151 = arith.mulf %147, %150 : vector<6x1xf32>
    %c0_121 = arith.constant 0 : index
    %c0_122 = arith.constant 0 : index
    %152 = vector.load %arg11[%c0_121, %c0_122] : memref<6x1xf32, #tpu.memory_space<vmem>>, vector<6x1xf32>
    %153 = arith.mulf %137, %151 : vector<6x1xf32>
    %154 = arith.subf %152, %153 : vector<6x1xf32>
    %155 = vector.broadcast %151 : vector<6x1xf32> to vector<6x72xf32>
    %156 = arith.mulf %130, %155 : vector<6x72xf32>
    %157 = vector.broadcast %154 : vector<6x1xf32> to vector<6x72xf32>
    %158 = arith.addf %156, %157 : vector<6x72xf32>
    %159 = arith.truncf %158 : vector<6x72xf32> to vector<6x72xbf16>
    %c0_123 = arith.constant 0 : index
    %c0_124 = arith.constant 0 : index
    %160 = vector.load %arg13[%c0_123, %c0_124] : memref<72x686xbf16, #tpu.memory_space<vmem>>, vector<72x686xbf16>
    %cst_125 = arith.constant dense<0.000000e+00> : vector<6x686xf32>
    %161 = tpu.matmul %159, %160, %cst_125 {dimension_numbers = #tpu.dot_dimension_numbers<[1], [0], [0], [1], [0, 0, 1, 1], [], []>} : vector<6x72xbf16>, vector<72x686xbf16>, vector<6x686xf32> -> vector<6x686xf32>
    %c0_126 = arith.constant 0 : index
    %c0_127 = arith.constant 0 : index
    %162 = vector.load %arg23[%c0_126, %c0_127] : memref<8x686xf32, #tpu.memory_space<vmem>>, vector<6x686xf32>
    tpu.vector_store %arg23[%c0_126, %c0_127], %161 {strides = array<i32>} : memref<8x686xf32, #tpu.memory_space<vmem>>, vector<6x686xf32>,
    %c0_128 = arith.constant 0 : index
    %c0_129 = arith.constant 0 : index
    %163 = vector.load %arg23[%c0_128, %c0_129] : memref<8x686xf32, #tpu.memory_space<vmem>>, vector<6x648xf32>
    %164 = arith.truncf %163 : vector<6x648xf32> to vector<6x648xbf16>
    %c0_130 = arith.constant 0 : index
    %c0_131 = arith.constant 0 : index
    %165 = vector.load %arg25[%c0_130, %c0_131] : memref<128x648xbf16, #tpu.memory_space<vmem>>, vector<6x648xbf16>
    tpu.vector_store %arg25[%c0_130, %c0_131], %164 {strides = array<i32>} : memref<128x648xbf16, #tpu.memory_space<vmem>>, vector<6x648xbf16>,
    %c0_132 = arith.constant 0 : index
    %c1_133 = arith.constant 1 : index
    %166 = vector.load %arg23[%c0_132, %c1_133] : memref<8x686xf32, #tpu.memory_space<vmem>>, vector<6x648xf32>
    %167 = arith.truncf %166 : vector<6x648xf32> to vector<6x648xbf16>
    %c8_134 = arith.constant 8 : index
    %c0_135 = arith.constant 0 : index
    %168 = vector.load %arg25[%c8_134, %c0_135] : memref<128x648xbf16, #tpu.memory_space<vmem>>, vector<6x648xbf16>
    tpu.vector_store %arg25[%c8_134, %c0_135], %167 {strides = array<i32>} : memref<128x648xbf16, #tpu.memory_space<vmem>>, vector<6x648xbf16>,
    %c0_136 = arith.constant 0 : index
    %c2_137 = arith.constant 2 : index
    %169 = vector.load %arg23[%c0_136, %c2_137] : memref<8x686xf32, #tpu.memory_space<vmem>>, vector<6x648xf32>
    %170 = arith.truncf %169 : vector<6x648xf32> to vector<6x648xbf16>
    %c16_138 = arith.constant 16 : index
    %c0_139 = arith.constant 0 : index
    %171 = vector.load %arg25[%c16_138, %c0_139] : memref<128x648xbf16, #tpu.memory_space<vmem>>, vector<6x648xbf16>
    tpu.vector_store %arg25[%c16_138, %c0_139], %170 {strides = array<i32>} : memref<128x648xbf16, #tpu.memory_space<vmem>>, vector<6x648xbf16>,
    %c0_140 = arith.constant 0 : index
    %c18 = arith.constant 18 : index
    %172 = vector.load %arg23[%c0_140, %c18] : memref<8x686xf32, #tpu.memory_space<vmem>>, vector<6x648xf32>
    %173 = arith.truncf %172 : vector<6x648xf32> to vector<6x648xbf16>
    %c24_141 = arith.constant 24 : index
    %c0_142 = arith.constant 0 : index
    %174 = vector.load %arg25[%c24_141, %c0_142] : memref<128x648xbf16, #tpu.memory_space<vmem>>, vector<6x648xbf16>
    tpu.vector_store %arg25[%c24_141, %c0_142], %173 {strides = array<i32>} : memref<128x648xbf16, #tpu.memory_space<vmem>>, vector<6x648xbf16>,
    %c0_143 = arith.constant 0 : index
    %c19 = arith.constant 19 : index
    %175 = vector.load %arg23[%c0_143, %c19] : memref<8x686xf32, #tpu.memory_space<vmem>>, vector<6x648xf32>
    %176 = arith.truncf %175 : vector<6x648xf32> to vector<6x648xbf16>
    %c32_144 = arith.constant 32 : index
    %c0_145 = arith.constant 0 : index
    %177 = vector.load %arg25[%c32_144, %c0_145] : memref<128x648xbf16, #tpu.memory_space<vmem>>, vector<6x648xbf16>
    tpu.vector_store %arg25[%c32_144, %c0_145], %176 {strides = array<i32>} : memref<128x648xbf16, #tpu.memory_space<vmem>>, vector<6x648xbf16>,
    %c0_146 = arith.constant 0 : index
    %c20 = arith.constant 20 : index
    %178 = vector.load %arg23[%c0_146, %c20] : memref<8x686xf32, #tpu.memory_space<vmem>>, vector<6x648xf32>
    %179 = arith.truncf %178 : vector<6x648xf32> to vector<6x648xbf16>
    %c40_147 = arith.constant 40 : index
    %c0_148 = arith.constant 0 : index
    %180 = vector.load %arg25[%c40_147, %c0_148] : memref<128x648xbf16, #tpu.memory_space<vmem>>, vector<6x648xbf16>
    tpu.vector_store %arg25[%c40_147, %c0_148], %179 {strides = array<i32>} : memref<128x648xbf16, #tpu.memory_space<vmem>>, vector<6x648xbf16>,
    %c0_149 = arith.constant 0 : index
    %c36 = arith.constant 36 : index
    %181 = vector.load %arg23[%c0_149, %c36] : memref<8x686xf32, #tpu.memory_space<vmem>>, vector<6x648xf32>
    %182 = arith.truncf %181 : vector<6x648xf32> to vector<6x648xbf16>
    %c48_150 = arith.constant 48 : index
    %c0_151 = arith.constant 0 : index
    %183 = vector.load %arg25[%c48_150, %c0_151] : memref<128x648xbf16, #tpu.memory_space<vmem>>, vector<6x648xbf16>
    tpu.vector_store %arg25[%c48_150, %c0_151], %182 {strides = array<i32>} : memref<128x648xbf16, #tpu.memory_space<vmem>>, vector<6x648xbf16>,
    %c0_152 = arith.constant 0 : index
    %c37 = arith.constant 37 : index
    %184 = vector.load %arg23[%c0_152, %c37] : memref<8x686xf32, #tpu.memory_space<vmem>>, vector<6x648xf32>
    %185 = arith.truncf %184 : vector<6x648xf32> to vector<6x648xbf16>
    %c56_153 = arith.constant 56 : index
    %c0_154 = arith.constant 0 : index
    %186 = vector.load %arg25[%c56_153, %c0_154] : memref<128x648xbf16, #tpu.memory_space<vmem>>, vector<6x648xbf16>
    tpu.vector_store %arg25[%c56_153, %c0_154], %185 {strides = array<i32>} : memref<128x648xbf16, #tpu.memory_space<vmem>>, vector<6x648xbf16>,
    %c0_155 = arith.constant 0 : index
    %c38 = arith.constant 38 : index
    %187 = vector.load %arg23[%c0_155, %c38] : memref<8x686xf32, #tpu.memory_space<vmem>>, vector<6x648xf32>
    %188 = arith.truncf %187 : vector<6x648xf32> to vector<6x648xbf16>
    %c64_156 = arith.constant 64 : index
    %c0_157 = arith.constant 0 : index
    %189 = vector.load %arg25[%c64_156, %c0_157] : memref<128x648xbf16, #tpu.memory_space<vmem>>, vector<6x648xbf16>
    tpu.vector_store %arg25[%c64_156, %c0_157], %188 {strides = array<i32>} : memref<128x648xbf16, #tpu.memory_space<vmem>>, vector<6x648xbf16>,
    %c0_158 = arith.constant 0 : index
    %c0_159 = arith.constant 0 : index
    %190 = vector.load %arg14[%c0_158, %c0_159] : memref<4x72xbf16, #tpu.memory_space<vmem>>, vector<4x72xbf16>
    %c0_160 = arith.constant 0 : index
    %c0_161 = arith.constant 0 : index
    %191 = vector.load %arg25[%c0_160, %c0_161] : memref<128x648xbf16, #tpu.memory_space<vmem>>, vector<72x648xbf16>
    %cst_162 = arith.constant dense<0.000000e+00> : vector<4x648xf32>
    %192 = tpu.matmul %190, %191, %cst_162 {dimension_numbers = #tpu.dot_dimension_numbers<[1], [0], [0], [1], [0, 0, 1, 1], [], []>} : vector<4x72xbf16>, vector<72x648xbf16>, vector<4x648xf32> -> vector<4x648xf32>
    %c0_163 = arith.constant 0 : index
    %c0_164 = arith.constant 0 : index
    %193 = vector.load %arg15[%c0_163, %c0_164] : memref<4x1xf32, #tpu.memory_space<vmem>>, vector<4x1xf32>
    %194 = vector.broadcast %193 : vector<4x1xf32> to vector<4x648xf32>
    %195 = arith.addf %192, %194 : vector<4x648xf32>
    %cst_165 = arith.constant 2.000000e-01 : f32
    %196 = vector.broadcast %cst_165 : f32 to vector<4x648xf32>
    %197 = arith.mulf %196, %195 : vector<4x648xf32>
    %198 = arith.maximumf %195, %197 : vector<4x648xf32>
    %c0_166 = arith.constant 0 : index
    %c0_167 = arith.constant 0 : index
    %199 = vector.load %arg18[%c0_166, %c0_167] : memref<1x648xf32, #tpu.memory_space<vmem>>, vector<1x648xf32>
    %200 = vector.broadcast %199 : vector<1x648xf32> to vector<4x648xf32>
    %201 = arith.mulf %198, %200 : vector<4x648xf32>
    %cst_168 = arith.constant dense<0.000000e+00> : vector<4xf32>
    %202 = vector.multi_reduction <add>, %201, %cst_168 [1] : vector<4x648xf32> to vector<4xf32>
    %203 = vector.shape_cast %202 : vector<4xf32> to vector<4x1xf32>
    %cst_169 = arith.constant 0.001953125 : f32
    %204 = vector.broadcast %cst_169 : f32 to vector<4x1xf32>
    %205 = arith.mulf %203, %204 : vector<4x1xf32>
    %206 = arith.mulf %201, %198 : vector<4x648xf32>
    %cst_170 = arith.constant dense<0.000000e+00> : vector<4xf32>
    %207 = vector.multi_reduction <add>, %206, %cst_170 [1] : vector<4x648xf32> to vector<4xf32>
    %208 = vector.shape_cast %207 : vector<4xf32> to vector<4x1xf32>
    %cst_171 = arith.constant 0.001953125 : f32
    %209 = vector.broadcast %cst_171 : f32 to vector<4x1xf32>
    %210 = arith.mulf %208, %209 : vector<4x1xf32>
    %211 = arith.mulf %205, %205 : vector<4x1xf32>
    %212 = arith.subf %210, %211 : vector<4x1xf32>
    %cst_172 = arith.constant 0.000000e+00 : f32
    %213 = vector.broadcast %cst_172 : f32 to vector<4x1xf32>
    %214 = arith.maximumf %212, %213 : vector<4x1xf32>
    %c0_173 = arith.constant 0 : index
    %c0_174 = arith.constant 0 : index
    %215 = vector.load %arg16[%c0_173, %c0_174] : memref<4x1xf32, #tpu.memory_space<vmem>>, vector<4x1xf32>
    %cst_175 = arith.constant 9.99999974E-6 : f32
    %216 = vector.broadcast %cst_175 : f32 to vector<4x1xf32>
    %217 = arith.addf %214, %216 : vector<4x1xf32>
    %218 = math.rsqrt %217 : vector<4x1xf32>
    %219 = arith.mulf %215, %218 : vector<4x1xf32>
    %c0_176 = arith.constant 0 : index
    %c0_177 = arith.constant 0 : index
    %220 = vector.load %arg17[%c0_176, %c0_177] : memref<4x1xf32, #tpu.memory_space<vmem>>, vector<4x1xf32>
    %221 = arith.mulf %205, %219 : vector<4x1xf32>
    %222 = arith.subf %220, %221 : vector<4x1xf32>
    %223 = vector.broadcast %219 : vector<4x1xf32> to vector<4x648xf32>
    %224 = arith.mulf %198, %223 : vector<4x648xf32>
    %225 = vector.broadcast %222 : vector<4x1xf32> to vector<4x648xf32>
    %226 = arith.addf %224, %225 : vector<4x648xf32>
    %227 = arith.truncf %226 : vector<4x648xf32> to vector<4x648xbf16>
    %c0_178 = arith.constant 0 : index
    %c0_179 = arith.constant 0 : index
    %228 = vector.load %arg19[%c0_178, %c0_179] : memref<648x512xbf16, #tpu.memory_space<vmem>>, vector<648x512xbf16>
    %cst_180 = arith.constant dense<0.000000e+00> : vector<4x512xf32>
    %229 = tpu.matmul %227, %228, %cst_180 {dimension_numbers = #tpu.dot_dimension_numbers<[1], [0], [0], [1], [0, 0, 1, 1], [], []>} : vector<4x648xbf16>, vector<648x512xbf16>, vector<4x512xf32> -> vector<4x512xf32>
    %c0_181 = arith.constant 0 : index
    %c0_182 = arith.constant 0 : index
    %230 = vector.load %arg24[%c0_181, %c0_182] : memref<8x686xf32, #tpu.memory_space<vmem>>, vector<4x512xf32>
    tpu.vector_store %arg24[%c0_181, %c0_182], %229 {strides = array<i32>} : memref<8x686xf32, #tpu.memory_space<vmem>>, vector<4x512xf32>,
    %c0_183 = arith.constant 0 : index
    %c0_184 = arith.constant 0 : index
    %231 = vector.load %arg20[%c0_183, %c0_184] : memref<3x4xbf16, #tpu.memory_space<vmem>>, vector<3x4xbf16>
    %c0_185 = arith.constant 0 : index
    %c0_186 = arith.constant 0 : index
    %232 = vector.load %arg24[%c0_185, %c0_186] : memref<8x686xf32, #tpu.memory_space<vmem>>, vector<4x512xf32>
    %233 = arith.truncf %232 : vector<4x512xf32> to vector<4x512xbf16>
    %cst_187 = arith.constant dense<0.000000e+00> : vector<3x512xf32>
    %234 = tpu.matmul %231, %233, %cst_187 {dimension_numbers = #tpu.dot_dimension_numbers<[1], [0], [0], [1], [0, 0, 1, 1], [], []>} : vector<3x4xbf16>, vector<4x512xbf16>, vector<3x512xf32> -> vector<3x512xf32>
    %c0_188 = arith.constant 0 : index
    %c0_189 = arith.constant 0 : index
    %235 = vector.load %arg21[%c0_188, %c0_189] : memref<3x1xf32, #tpu.memory_space<vmem>>, vector<3x1xf32>
    %236 = vector.broadcast %235 : vector<3x1xf32> to vector<3x512xf32>
    %237 = arith.addf %234, %236 : vector<3x512xf32>
    %238 = arith.negf %237 : vector<3x512xf32>
    %239 = math.exp %238 : vector<3x512xf32>
    %cst_190 = arith.constant 1.000000e+00 : f32
    %240 = vector.broadcast %cst_190 : f32 to vector<3x512xf32>
    %241 = arith.addf %240, %239 : vector<3x512xf32>
    %242 = arith.divf %240, %241 : vector<3x512xf32>
    %243 = vector.extract_strided_slice %242 {offsets = [0, 0], sizes = [3, 256], strides = [1, 1]} : vector<3x512xf32> to vector<3x256xf32>
    %c0_191 = arith.constant 0 : index
    %c0_192 = arith.constant 0 : index
    %244 = vector.load %arg22[%c0_191, %c0_192] : memref<6x256xf32, #tpu.memory_space<vmem>>, vector<3x256xf32>
    tpu.vector_store %arg22[%c0_191, %c0_192], %243 {strides = array<i32>} : memref<6x256xf32, #tpu.memory_space<vmem>>, vector<3x256xf32>,
    %245 = vector.extract_strided_slice %242 {offsets = [0, 256], sizes = [3, 256], strides = [1, 1]} : vector<3x512xf32> to vector<3x256xf32>
    %c3_193 = arith.constant 3 : index
    %c0_194 = arith.constant 0 : index
    %246 = vector.load %arg22[%c3_193, %c0_194] : memref<6x256xf32, #tpu.memory_space<vmem>>, vector<3x256xf32>
    tpu.vector_store %arg22[%c3_193, %c0_194], %245 {strides = array<i32>} : memref<6x256xf32, #tpu.memory_space<vmem>>, vector<3x256xf32>,
    return
  }
}

</mosaic_0001>

<llo_original>
// kernel: tpu_custom_call.1
$region0: #{tpu_custom_call.1}
  #allocation0 [shape = 'u32[]', space=smem, size = 0x4, offset = 0x4, fixed_abs, tag = 'smem constant byte address 0x4 - core index']
  #allocation1 [shape = 'u32[144,128]{1,0:T(1,128)}', space=vmem, size = 0x12000, scoped, tag = 'internal scratch']
  #allocation2 [shape = 'f32[8,686]{1,0:T(8,128)}', space=vmem, size = 0x6000, scoped, tag = 'scratch operand']
  #allocation3 [shape = 'f32[8,686]{1,0:T(8,128)}', space=vmem, size = 0x6000, scoped, tag = 'scratch operand']
  #allocation4 [shape = 'bf16[128,648]{1,0:T(8,128)(2,1)}', space=vmem, size = 0x30000, scoped, tag = 'scratch operand']
  %s0 = inlined_call_operand.vmem [shape: bf16[8,2], index: 0, kind: input, shape index: {}]
  %s1 = inlined_call_operand.vmem [shape: bf16[2,122], index: 1, kind: input, shape index: {}]
  %s2 = inlined_call_operand.vmem [shape: bf16[8,128], index: 2, kind: input, shape index: {}]
  %s3 = inlined_call_operand.vmem [shape: f32[8,1], index: 3, kind: input, shape index: {}]
  %s4 = inlined_call_operand.vmem [shape: f32[8,1], index: 4, kind: input, shape index: {}]
  %s5 = inlined_call_operand.vmem [shape: f32[8,1], index: 5, kind: input, shape index: {}]
  %s6 = inlined_call_operand.vmem [shape: f32[1,98], index: 6, kind: input, shape index: {}]
  %s7 = inlined_call_operand.vmem [shape: bf16[98,86], index: 7, kind: input, shape index: {}]
  %s8 = inlined_call_operand.vmem [shape: bf16[6,72], index: 8, kind: input, shape index: {}]
  %s9 = inlined_call_operand.vmem [shape: f32[6,1], index: 9, kind: input, shape index: {}]
  %s10 = inlined_call_operand.vmem [shape: f32[6,1], index: 10, kind: input, shape index: {}]
  %s11 = inlined_call_operand.vmem [shape: f32[6,1], index: 11, kind: input, shape index: {}]
  %s12 = inlined_call_operand.vmem [shape: f32[1,72], index: 12, kind: input, shape index: {}]
  %s13 = inlined_call_operand.hbm [shape: bf16[72,686], index: 13, kind: input, shape index: {}]
  %s14 = inlined_call_operand.vmem [shape: bf16[4,72], index: 14, kind: input, shape index: {}]
  %s15 = inlined_call_operand.vmem [shape: f32[4,1], index: 15, kind: input, shape index: {}]
  %s16 = inlined_call_operand.vmem [shape: f32[4,1], index: 16, kind: input, shape index: {}]
  %s17 = inlined_call_operand.vmem [shape: f32[4,1], index: 17, kind: input, shape index: {}]
  %s18 = inlined_call_operand.vmem [shape: f32[1,648], index: 18, kind: input, shape index: {}]
  %s19 = inlined_call_operand.hbm [shape: bf16[648,512], index: 19, kind: input, shape index: {}]
  %s20 = inlined_call_operand.vmem [shape: bf16[3,4], index: 20, kind: input, shape index: {}]
  %s21 = inlined_call_operand.vmem [shape: f32[3,1], index: 21, kind: input, shape index: {}]
  %s22 = inlined_call_operand.hbm [shape: f32[6,256], index: 22, kind: output, shape index: {}]
  %s23 = sld [smem:[#allocation0]]
  $region106: #{tpu_custom_call.1} parent=0
    _
  %s25 = ssub.s32 1, %s23
  %s26 = scalar_select 0, %s25, %s23
  $region1: #{tpu_custom_call.1} parent=0
    #allocation5 [shape = 'u8[110592]{0}', space=vmem, size = 0x1b000, scoped, tag = 'input window, operand 13, single buffered']
    #allocation6 [shape = 's32[1]{0}', space=sflag, size = 0x4, scoped, tag = 'scoped memory for tpu_custom_call.1']
    #allocation7 [shape = 's32[1]{0}', space=sflag, size = 0x4, scoped, tag = 'scoped memory for tpu_custom_call.1']
    #allocation8 [shape = 'u8[663552]{0}', space=vmem, size = 0xa2000, scoped, tag = 'input window, operand 19, single buffered']
    #allocation9 [shape = 's32[1]{0}', space=sflag, size = 0x4, scoped, tag = 'scoped memory for tpu_custom_call.1']
    #allocation10 [shape = 'u8[8192]{0}', space=vmem, size = 0x2000, scoped, tag = 'output window, operand 0, single buffered']
    %27 = vsyncpa [#allocation6], 0
    %28 = vsyncpa [#allocation9], 0
    %29 = vsyncpa [#allocation7], 0
    // Predicated region
    $region2: #{tpu_custom_call.1} parent=1 // pred_check
      _
    $region3: #{tpu_custom_call.1} parent=1 // pred_check_branch
      %31 = sbr.rel (0) target = $region5
    $region4: #{tpu_custom_call.1} parent=1 // pred_region
      _
    $region5: #{tpu_custom_call.1} parent=1 // pred_fallthru
      _
    // Predicated region
    $region6: #{tpu_custom_call.1} parent=1 // pred_check
      _
    $region7: #{tpu_custom_call.1} parent=1 // pred_check_branch
      %33 = sbr.rel (0) target = $region9
    $region8: #{tpu_custom_call.1} parent=1 // pred_region
      _
    $region9: #{tpu_custom_call.1} parent=1 // pred_fallthru
      _
    // Predicated region
    $region10: #{tpu_custom_call.1} parent=1 // pred_check
      _
    $region11: #{tpu_custom_call.1} parent=1 // pred_check_branch
      %35 = sbr.rel (0) target = $region13
    $region12: #{tpu_custom_call.1} parent=1 // pred_region
      _
    $region13: #{tpu_custom_call.1} parent=1 // pred_fallthru
      _
    // Predicated region
    $region14: #{tpu_custom_call.1} parent=1 // pred_check
      _
    $region15: #{tpu_custom_call.1} parent=1 // pred_check_branch
      %37 = sbr.rel (0) target = $region17
    $region16: #{tpu_custom_call.1} parent=1 // pred_region
      _
    $region17: #{tpu_custom_call.1} parent=1 // pred_fallthru
      _
    // Predicated region
    $region18: #{tpu_custom_call.1} parent=1 // pred_check
      _
    $region19: #{tpu_custom_call.1} parent=1 // pred_check_branch
      %39 = sbr.rel (0) target = $region21
    $region20: #{tpu_custom_call.1} parent=1 // pred_region
      _
    $region21: #{tpu_custom_call.1} parent=1 // pred_fallthru
      _
    // Predicated region
    $region22: #{tpu_custom_call.1} parent=1 // pred_check
      _
    $region23: #{tpu_custom_call.1} parent=1 // pred_check_branch
      %41 = sbr.rel (0) target = $region25
    $region24: #{tpu_custom_call.1} parent=1 // pred_region
      _
    $region25: #{tpu_custom_call.1} parent=1 // pred_fallthru
      _
    // Predicated region
    $region26: #{tpu_custom_call.1} parent=1 // pred_check
      _
    $region27: #{tpu_custom_call.1} parent=1 // pred_check_branch
      %43 = sbr.rel (0) target = $region29
    $region28: #{tpu_custom_call.1} parent=1 // pred_region
      _
    $region29: #{tpu_custom_call.1} parent=1 // pred_fallthru
      _
    // Predicated region
    $region30: #{tpu_custom_call.1} parent=1 // pred_check
      _
    $region31: #{tpu_custom_call.1} parent=1 // pred_check_branch
      %45 = sbr.rel (0) target = $region33
    $region32: #{tpu_custom_call.1} parent=1 // pred_region
      _
    $region33: #{tpu_custom_call.1} parent=1 // pred_fallthru
      _
    // Predicated region
    $region34: #{tpu_custom_call.1} parent=1 // pred_check
      _
    $region35: #{tpu_custom_call.1} parent=1 // pred_check_branch
      %47 = sbr.rel (0) target = $region37
    $region36: #{tpu_custom_call.1} parent=1 // pred_region
      _
    $region37: #{tpu_custom_call.1} parent=1 // pred_fallthru
      _
    // Predicated region
    $region38: #{tpu_custom_call.1} parent=1 // pred_check
      _
    $region39: #{tpu_custom_call.1} parent=1 // pred_check_branch
      %49 = sbr.rel (0) target = $region41
    $region40: #{tpu_custom_call.1} parent=1 // pred_region
      _
    $region41: #{tpu_custom_call.1} parent=1 // pred_fallthru
      _
    // Predicated region
    $region42: #{tpu_custom_call.1} parent=1 // pred_check
      _
    $region43: #{tpu_custom_call.1} parent=1 // pred_check_branch
      %51 = sbr.rel (0) target = $region45
    $region44: #{tpu_custom_call.1} parent=1 // pred_region
      _
    $region45: #{tpu_custom_call.1} parent=1 // pred_fallthru
      _
    // Predicated region
    $region46: #{tpu_custom_call.1} parent=1 // pred_check
      _
    $region47: #{tpu_custom_call.1} parent=1 // pred_check_branch
      %53 = sbr.rel (0) target = $region49
    $region48: #{tpu_custom_call.1} parent=1 // pred_region
      _
    $region49: #{tpu_custom_call.1} parent=1 // pred_fallthru
      _
    // Predicated region
    $region50: #{tpu_custom_call.1} parent=1 // pred_check
      _
    $region51: #{tpu_custom_call.1} parent=1 // pred_check_branch
      %55 = sbr.rel (0) target = $region53
    $region52: #{tpu_custom_call.1} parent=1 // pred_region
      _
    $region53: #{tpu_custom_call.1} parent=1 // pred_fallthru
      _
    // Predicated region
    $region54: #{tpu_custom_call.1} parent=1 // pred_check
      _
    $region55: #{tpu_custom_call.1} parent=1 // pred_check_branch
      %57 = sbr.rel (0) target = $region57
    $region56: #{tpu_custom_call.1} parent=1 // pred_region
      %s59 = ssub.s32 3456, 3456
      %60 = vsyncadd [#allocation6], %s59
      %s61 = sshll.u32 [#allocation5], 4
      %s62 = int_to_ptr.vmem [resolvable:$true] %s61
      %67 = dma.hbm_to_vmem [thread:$0]  %s13, 3456, %s62, [#allocation6], 384, 384, 24
    $region57: #{tpu_custom_call.1} parent=1 // pred_fallthru
      _
    // Predicated region
    $region58: #{tpu_custom_call.1} parent=1 // pred_check
      _
    $region59: #{tpu_custom_call.1} parent=1 // pred_check_branch
      %69 = sbr.rel (0) target = $region61
    $region60: #{tpu_custom_call.1} parent=1 // pred_region
      _
    $region61: #{tpu_custom_call.1} parent=1 // pred_fallthru
      _
    // Predicated region
    $region62: #{tpu_custom_call.1} parent=1 // pred_check
      _
    $region63: #{tpu_custom_call.1} parent=1 // pred_check_branch
      %71 = sbr.rel (0) target = $region65
    $region64: #{tpu_custom_call.1} parent=1 // pred_region
      _
    $region65: #{tpu_custom_call.1} parent=1 // pred_fallthru
      _
    // Predicated region
    $region66: #{tpu_custom_call.1} parent=1 // pred_check
      _
    $region67: #{tpu_custom_call.1} parent=1 // pred_check_branch
      %73 = sbr.rel (0) target = $region69
    $region68: #{tpu_custom_call.1} parent=1 // pred_region
      _
    $region69: #{tpu_custom_call.1} parent=1 // pred_fallthru
      _
    // Predicated region
    $region70: #{tpu_custom_call.1} parent=1 // pred_check
      _
    $region71: #{tpu_custom_call.1} parent=1 // pred_check_branch
      %75 = sbr.rel (0) target = $region73
    $region72: #{tpu_custom_call.1} parent=1 // pred_region
      _
    $region73: #{tpu_custom_call.1} parent=1 // pred_fallthru
      _
    // Predicated region
    $region74: #{tpu_custom_call.1} parent=1 // pred_check
      _
    $region75: #{tpu_custom_call.1} parent=1 // pred_check_branch
      %77 = sbr.rel (0) target = $region77
    $region76: #{tpu_custom_call.1} parent=1 // pred_region
      _
    $region77: #{tpu_custom_call.1} parent=1 // pred_fallthru
      _
    // Predicated region
    $region78: #{tpu_custom_call.1} parent=1 // pred_check
      _
    $region79: #{tpu_custom_call.1} parent=1 // pred_check_branch
      %79 = sbr.rel (0) target = $region81
    $region80: #{tpu_custom_call.1} parent=1 // pred_region
      %s81 = ssub.s32 20736, 20736
      %82 = vsyncadd [#allocation9], %s81
      %s83 = sshll.u32 [#allocation8], 4
      %s84 = int_to_ptr.vmem [resolvable:$true] %s83
      %89 = dma.hbm_to_vmem [thread:$0]  %s19, 20736, %s84, [#allocation9], 256, 256, 16
    $region81: #{tpu_custom_call.1} parent=1 // pred_fallthru
      _
    // Predicated region
    $region82: #{tpu_custom_call.1} parent=1 // pred_check
      _
    $region83: #{tpu_custom_call.1} parent=1 // pred_check_branch
      %91 = sbr.rel (0) target = $region85
    $region84: #{tpu_custom_call.1} parent=1 // pred_region
      _
    $region85: #{tpu_custom_call.1} parent=1 // pred_fallthru
      _
    // Predicated region
    $region86: #{tpu_custom_call.1} parent=1 // pred_check
      _
    $region87: #{tpu_custom_call.1} parent=1 // pred_check_branch
      %93 = sbr.rel (0) target = $region89
    $region88: #{tpu_custom_call.1} parent=1 // pred_region
      _
    $region89: #{tpu_custom_call.1} parent=1 // pred_fallthru
      _
    // Predicated region
    $region90: #{tpu_custom_call.1} parent=1 // pred_check
      _
    $region91: #{tpu_custom_call.1} parent=1 // pred_check_branch
      %95 = sbr.rel (0) target = $region93
    $region92: #{tpu_custom_call.1} parent=1 // pred_region
      %96 = dma.done [#allocation6], 3456
    $region93: #{tpu_custom_call.1} parent=1 // pred_fallthru
      _
    // Predicated region
    $region94: #{tpu_custom_call.1} parent=1 // pred_check
      _
    $region95: #{tpu_custom_call.1} parent=1 // pred_check_branch
      %98 = sbr.rel (0) target = $region97
    $region96: #{tpu_custom_call.1} parent=1 // pred_region
      %99 = dma.done [#allocation9], 20736
    $region97: #{tpu_custom_call.1} parent=1 // pred_fallthru
      _
    %101 = vst [vmem:[#allocation4] sm:$0xff] 0
    %102 = vst [vmem:[#allocation4 + $0x8] sm:$0xff] 0
    %vm103 = vcmask 1043456
    %vm104 = vcmask 64516
    %vm105 = vmor %vm104, %vm103
    %106 = vst.msk [vmem:[#allocation4 + $0x10] sm:$0xff] %vm105, 0
    %107 = vst [vmem:[#allocation4 + $0x18] sm:$0xff] 0
    %108 = vst [vmem:[#allocation4 + $0x20] sm:$0xff] 0
    %109 = vst.msk [vmem:[#allocation4 + $0x28] sm:$0xff] %vm105, 0
    %110 = vst [vmem:[#allocation4 + $0x30] sm:$0xff] 0
    %111 = vst [vmem:[#allocation4 + $0x38] sm:$0xff] 0
    %112 = vst.msk [vmem:[#allocation4 + $0x40] sm:$0xff] %vm105, 0
    %113 = vst [vmem:[#allocation4 + $0x48] sm:$0xff] 0
    %114 = vst [vmem:[#allocation4 + $0x50] sm:$0xff] 0
    %115 = vst.msk [vmem:[#allocation4 + $0x58] sm:$0xff] %vm105, 0
    %116 = vst [vmem:[#allocation4 + $0x60] sm:$0xff] 0
    %117 = vst [vmem:[#allocation4 + $0x68] sm:$0xff] 0
    %118 = vst.msk [vmem:[#allocation4 + $0x70] sm:$0xff] %vm105, 0
    %119 = vst [vmem:[#allocation4 + $0x78] sm:$0xff] 0
    %120 = vst [vmem:[#allocation4 + $0x80] sm:$0xff] 0
    %121 = vst.msk [vmem:[#allocation4 + $0x88] sm:$0xff] %vm105, 0
    %122 = vst [vmem:[#allocation4 + $0x90] sm:$0xff] 0
    %123 = vst [vmem:[#allocation4 + $0x98] sm:$0xff] 0
    %124 = vst.msk [vmem:[#allocation4 + $0xa0] sm:$0xff] %vm105, 0
    %125 = vst [vmem:[#allocation4 + $0xa8] sm:$0xff] 0
    %126 = vst [vmem:[#allocation4 + $0xb0] sm:$0xff] 0
    %127 = vst.msk [vmem:[#allocation4 + $0xb8] sm:$0xff] %vm105, 0
    %128 = vst [vmem:[#allocation4 + $0xc0] sm:$0xff] 0
    %129 = vst [vmem:[#allocation4 + $0xc8] sm:$0xff] 0
    %130 = vst.msk [vmem:[#allocation4 + $0xd0] sm:$0xff] %vm105, 0
    %131 = vst [vmem:[#allocation4 + $0xd8] sm:$0xff] 0
    %132 = vst [vmem:[#allocation4 + $0xe0] sm:$0xff] 0
    %133 = vst.msk [vmem:[#allocation4 + $0xe8] sm:$0xff] %vm105, 0
    %134 = vst [vmem:[#allocation4 + $0xf0] sm:$0xff] 0
    %135 = vst [vmem:[#allocation4 + $0xf8] sm:$0xff] 0
    %136 = vst.msk [vmem:[#allocation4 + $0x100] sm:$0xff] %vm105, 0
    %137 = vst [vmem:[#allocation4 + $0x108] sm:$0xff] 0
    %138 = vst [vmem:[#allocation4 + $0x110] sm:$0xff] 0
    %139 = vst.msk [vmem:[#allocation4 + $0x118] sm:$0xff] %vm105, 0
    %140 = vst [vmem:[#allocation4 + $0x120] sm:$0xff] 0
    %141 = vst [vmem:[#allocation4 + $0x128] sm:$0xff] 0
    %142 = vst.msk [vmem:[#allocation4 + $0x130] sm:$0xff] %vm105, 0
    %143 = vst [vmem:[#allocation4 + $0x138] sm:$0xff] 0
    %144 = vst [vmem:[#allocation4 + $0x140] sm:$0xff] 0
    %145 = vst.msk [vmem:[#allocation4 + $0x148] sm:$0xff] %vm105, 0
    %146 = vst [vmem:[#allocation4 + $0x150] sm:$0xff] 0
    %147 = vst [vmem:[#allocation4 + $0x158] sm:$0xff] 0
    %148 = vst.msk [vmem:[#allocation4 + $0x160] sm:$0xff] %vm105, 0
    %149 = vst [vmem:[#allocation4 + $0x168] sm:$0xff] 0
    %150 = vst [vmem:[#allocation4 + $0x170] sm:$0xff] 0
    %151 = vst.msk [vmem:[#allocation4 + $0x178] sm:$0xff] %vm105, 0
    %v152 = vld [vmem:[%s0] sm:$0xf]
    %v153 = vld [vmem:[%s1] sm:$0x1]
    %vm154 = vcmask 15360
    %v156 = vsel %vm154, %v152, 0
    %vm158 = vcmask 1040384
    %v160 = vsel %vm158, %v153, 0
    %162 = vmatprep.subr.bf16.mxu0 0
    %163 = vmatpush1.bf16.msra.mxu0 0
    %164 = vmatprep.subr.bf16.mxu0 0
    %165 = vmatpush1.bf16.msra.mxu0 0
    %166 = vmatprep.subr.bf16.mxu0 0
    %167 = vmatpush1.bf16.msra.mxu0 0
    %168 = vmatprep.subr.bf16.mxu0 0
    %169 = vmatpush1.bf16.msra.mxu0 0
    %170 = vmatprep.subr.bf16.mxu0 0
    %171 = vmatpush1.bf16.msra.mxu0 0
    %172 = vmatprep.subr.bf16.mxu0 0
    %173 = vmatpush1.bf16.msra.mxu0 0
    %174 = vmatprep.subr.bf16.mxu0 0
    %175 = vmatpush1.bf16.msra.mxu0 0
    %176 = vmatprep.subr.bf16.mxu0 0
    %177 = vmatpush1.bf16.msra.mxu0 %v160
    %178 = vmatprep.subr.bf16.mxu0 0
    %179 = vmatpush2.bf16.msra.mxu0 0
    %180 = vmatprep.subr.bf16.mxu0 0
    %181 = vmatpush2.bf16.msra.mxu0 0
    %182 = vmatprep.subr.bf16.mxu0 0
    %183 = vmatpush2.bf16.msra.mxu0 0
    %184 = vmatprep.subr.bf16.mxu0 0
    %185 = vmatpush2.bf16.msra.mxu0 0
    %186 = vmatprep.subr.bf16.mxu0 0
    %187 = vmatpush2.bf16.msra.mxu0 0
    %188 = vmatprep.subr.bf16.mxu0 0
    %189 = vmatpush2.bf16.msra.mxu0 0
    %190 = vmatprep.subr.bf16.mxu0 0
    %191 = vmatpush2.bf16.msra.mxu0 0
    %192 = vmatprep.subr.bf16.mxu0 0
    %193 = vmatpush2.bf16.msra.mxu0 0
    %194 = vmatprep.mubr.bf16.mxu0 0
    %195 = vmatmul.mubr.bf16.gmra.mxu0 %v156
    %v196 = vpop.f32.mrf.mxu0
    %v197 = vadd.f32 0.0, %v196
    %v198 = vpop.f32.mrf.mxu0
    %v199 = vpop.f32.mrf.mxu0
    %v200 = vpop.f32.mrf.mxu0
    %201 = vdwg.mxu0
    %vm202 = vcmask 998400
    %203 = vst.msk [vmem:[#allocation2] sm:$0xff] %vm202, %v197
    %v204 = vld [vmem:[#allocation2] sm:$0xff]
    %v205 = vpack.c.bf16 %v204, %v204
    %vm206 = vcmask 797696
    %207 = vst.msk [vmem:[#allocation4] sm:$0xf] %vm206, %v205
    %v208 = vld [vmem:[#allocation2] sm:$0xff]
    %v209 = vpack.c.bf16 %v208, %v208
    %v211 = vunpack.c.l.b16 %v209
    %v212 = vpack.c.b16 %v211, %v211
    %213 = vrot.lane.b32.xlu0 %v212, 127
    %v214 = vpop.permute.xlu0 %213
    %216 = vst.msk [vmem:[#allocation4 + $0x18] sm:$0xf] %vm206, %v214
    %v217 = vld [vmem:[#allocation2] sm:$0xff]
    %v218 = vpack.c.bf16 %v217, %v217
    %v220 = vunpack.c.l.b16 %v218
    %v221 = vpack.c.b16 %v220, %v220
    %222 = vrot.lane.b32.xlu0 %v221, 126
    %v223 = vpop.permute.xlu0 %222
    %225 = vst.msk [vmem:[#allocation4 + $0x30] sm:$0xf] %vm206, %v223
    %v226 = vld [vmem:[#allocation2] sm:$0xff]
    %v227 = vpack.c.bf16 %v226, %v226
    %v229 = vunpack.c.l.b16 %v227
    %v230 = vpack.c.b16 %v229, %v229
    %231 = vrot.lane.b32.xlu0 %v230, 125
    %v232 = vpop.permute.xlu0 %231
    %234 = vst.msk [vmem:[#allocation4 + $0x48] sm:$0xf] %vm206, %v232
    %v235 = vld [vmem:[#allocation2] sm:$0xff]
    %v236 = vpack.c.bf16 %v235, %v235
    %v238 = vunpack.c.l.b16 %v236
    %v239 = vpack.c.b16 %v238, %v238
    %240 = vrot.lane.b32.xlu0 %v239, 121
    %v241 = vpop.permute.xlu0 %240
    %243 = vst.msk [vmem:[#allocation4 + $0x60] sm:$0xf] %vm206, %v241
    %v244 = vld [vmem:[#allocation2] sm:$0xff]
    %v245 = vpack.c.bf16 %v244, %v244
    %v247 = vunpack.c.l.b16 %v245
    %v248 = vpack.c.b16 %v247, %v247
    %249 = vrot.lane.b32.xlu0 %v248, 120
    %v250 = vpop.permute.xlu0 %249
    %252 = vst.msk [vmem:[#allocation4 + $0x78] sm:$0xf] %vm206, %v250
    %v253 = vld [vmem:[#allocation2] sm:$0xff]
    %v254 = vpack.c.bf16 %v253, %v253
    %v256 = vunpack.c.l.b16 %v254
    %v257 = vpack.c.b16 %v256, %v256
    %258 = vrot.lane.b32.xlu0 %v257, 119
    %v259 = vpop.permute.xlu0 %258
    %261 = vst.msk [vmem:[#allocation4 + $0x90] sm:$0xf] %vm206, %v259
    %v262 = vld [vmem:[#allocation2] sm:$0xff]
    %v263 = vpack.c.bf16 %v262, %v262
    %v265 = vunpack.c.l.b16 %v263
    %v266 = vpack.c.b16 %v265, %v265
    %267 = vrot.lane.b32.xlu0 %v266, 118
    %v268 = vpop.permute.xlu0 %267
    %270 = vst.msk [vmem:[#allocation4 + $0xa8] sm:$0xf] %vm206, %v268
    %v271 = vld [vmem:[#allocation2] sm:$0xff]
    %v272 = vpack.c.bf16 %v271, %v271
    %v274 = vunpack.c.l.b16 %v272
    %v275 = vpack.c.b16 %v274, %v274
    %276 = vrot.lane.b32.xlu0 %v275, 114
    %v277 = vpop.permute.xlu0 %276
    %279 = vst.msk [vmem:[#allocation4 + $0xc0] sm:$0xf] %vm206, %v277
    %v280 = vld [vmem:[#allocation2] sm:$0xff]
    %v281 = vpack.c.bf16 %v280, %v280
    %v283 = vunpack.c.l.b16 %v281
    %v284 = vpack.c.b16 %v283, %v283
    %285 = vrot.lane.b32.xlu0 %v284, 113
    %v286 = vpop.permute.xlu0 %285
    %288 = vst.msk [vmem:[#allocation4 + $0xd8] sm:$0xf] %vm206, %v286
    %v289 = vld [vmem:[#allocation2] sm:$0xff]
    %v290 = vpack.c.bf16 %v289, %v289
    %v292 = vunpack.c.l.b16 %v290
    %v293 = vpack.c.b16 %v292, %v292
    %294 = vrot.lane.b32.xlu0 %v293, 112
    %v295 = vpop.permute.xlu0 %294
    %297 = vst.msk [vmem:[#allocation4 + $0xf0] sm:$0xf] %vm206, %v295
    %v298 = vld [vmem:[#allocation2] sm:$0xff]
    %v299 = vpack.c.bf16 %v298, %v298
    %v301 = vunpack.c.l.b16 %v299
    %v302 = vpack.c.b16 %v301, %v301
    %303 = vrot.lane.b32.xlu0 %v302, 111
    %v304 = vpop.permute.xlu0 %303
    %306 = vst.msk [vmem:[#allocation4 + $0x108] sm:$0xf] %vm206, %v304
    %v307 = vld [vmem:[#allocation2] sm:$0xff]
    %v308 = vpack.c.bf16 %v307, %v307
    %v310 = vunpack.c.l.b16 %v308
    %v311 = vpack.c.b16 %v310, %v310
    %312 = vrot.lane.b32.xlu0 %v311, 107
    %v313 = vpop.permute.xlu0 %312
    %315 = vst.msk [vmem:[#allocation4 + $0x120] sm:$0xf] %vm206, %v313
    %v316 = vld [vmem:[#allocation2] sm:$0xff]
    %v317 = vpack.c.bf16 %v316, %v316
    %v319 = vunpack.c.l.b16 %v317
    %v320 = vpack.c.b16 %v319, %v319
    %321 = vrot.lane.b32.xlu0 %v320, 106
    %v322 = vpop.permute.xlu0 %321
    %324 = vst.msk [vmem:[#allocation4 + $0x138] sm:$0xf] %vm206, %v322
    %v325 = vld [vmem:[#allocation2] sm:$0xff]
    %v326 = vpack.c.bf16 %v325, %v325
    %v328 = vunpack.c.l.b16 %v326
    %v329 = vpack.c.b16 %v328, %v328
    %330 = vrot.lane.b32.xlu0 %v329, 105
    %v331 = vpop.permute.xlu0 %330
    %333 = vst.msk [vmem:[#allocation4 + $0x150] sm:$0xf] %vm206, %v331
    %v334 = vld [vmem:[#allocation2] sm:$0xff]
    %v335 = vpack.c.bf16 %v334, %v334
    %v337 = vunpack.c.l.b16 %v335
    %v338 = vpack.c.b16 %v337, %v337
    %339 = vrot.lane.b32.xlu0 %v338, 104
    %v340 = vpop.permute.xlu0 %339
    %342 = vst.msk [vmem:[#allocation4 + $0x168] sm:$0xf] %vm206, %v340
    %v343 = vld [vmem:[%s2] sm:$0xf]
    %v344 = vld [vmem:[#allocation4] sm:$0xf]
    %v345 = vld [vmem:[#allocation4 + $0x18] sm:$0xf]
    %v346 = vld [vmem:[#allocation4 + $0x30] sm:$0xf]
    %v347 = vld [vmem:[#allocation4 + $0x48] sm:$0xf]
    %v348 = vld [vmem:[#allocation4 + $0x60] sm:$0xf]
    %v349 = vld [vmem:[#allocation4 + $0x78] sm:$0xf]
    %v350 = vld [vmem:[#allocation4 + $0x90] sm:$0xf]
    %v351 = vld [vmem:[#allocation4 + $0xa8] sm:$0xf]
    %v352 = vld [vmem:[#allocation4 + $0xc0] sm:$0xf]
    %v353 = vld [vmem:[#allocation4 + $0xd8] sm:$0xf]
    %v354 = vld [vmem:[#allocation4 + $0xf0] sm:$0xf]
    %v355 = vld [vmem:[#allocation4 + $0x108] sm:$0xf]
    %v356 = vld [vmem:[#allocation4 + $0x120] sm:$0xf]
    %v357 = vld [vmem:[#allocation4 + $0x138] sm:$0xf]
    %v358 = vld [vmem:[#allocation4 + $0x150] sm:$0xf]
    %v359 = vld [vmem:[#allocation4 + $0x168] sm:$0xf]
    %v360 = vld [vmem:[%s3] sm:$0xff]
    %362 = vset.pattern.permute.xlu0 0
    %363 = vperm.xlu0 %362, %v360
    %v364 = vpop.permute.xlu0 %363
    %v382 = vunpack.c.l.b16 %v344
    %v383 = vunpack.c.l.b16 %v345
    %v384 = vunpack.c.l.b16 %v346
    %v385 = vunpack.c.l.b16 %v347
    %v386 = vunpack.c.l.b16 %v348
    %v387 = vunpack.c.l.b16 %v349
    %v388 = vunpack.c.l.b16 %v350
    %v389 = vunpack.c.l.b16 %v351
    %v390 = vunpack.c.l.b16 %v352
    %v391 = vunpack.c.l.b16 %v353
    %v392 = vunpack.c.l.b16 %v354
    %v393 = vunpack.c.l.b16 %v355
    %v394 = vunpack.c.l.b16 %v356
    %v395 = vunpack.c.l.b16 %v357
    %v396 = vunpack.c.l.b16 %v358
    %v397 = vunpack.c.l.b16 %v359
    %v398 = vpack.c.b16 %v383, %v382
    %v399 = vpack.c.b16 %v385, %v384
    %v400 = vpack.c.b16 %v387, %v386
    %v401 = vpack.c.b16 %v389, %v388
    %v402 = vpack.c.b16 %v391, %v390
    %v403 = vpack.c.b16 %v393, %v392
    %v404 = vpack.c.b16 %v395, %v394
    %v405 = vpack.c.b16 %v397, %v396
    %414 = vmatprep.subr.bf16.mxu0 0
    %415 = vmatpush1.bf16.msra.mxu0 %v405
    %416 = vmatprep.subr.bf16.mxu0 0
    %417 = vmatpush1.bf16.msra.mxu0 %v404
    %418 = vmatprep.subr.bf16.mxu0 0
    %419 = vmatpush1.bf16.msra.mxu0 %v403
    %420 = vmatprep.subr.bf16.mxu0 0
    %421 = vmatpush1.bf16.msra.mxu0 %v402
    %422 = vmatprep.subr.bf16.mxu0 0
    %423 = vmatpush1.bf16.msra.mxu0 %v401
    %424 = vmatprep.subr.bf16.mxu0 0
    %425 = vmatpush1.bf16.msra.mxu0 %v400
    %426 = vmatprep.subr.bf16.mxu0 0
    %427 = vmatpush1.bf16.msra.mxu0 %v399
    %428 = vmatprep.subr.bf16.mxu0 0
    %429 = vmatpush1.bf16.msra.mxu0 %v398
    %430 = vmatprep.subr.bf16.mxu0 0
    %431 = vmatpush2.bf16.msra.mxu0 0
    %432 = vmatprep.subr.bf16.mxu0 0
    %433 = vmatpush2.bf16.msra.mxu0 0
    %434 = vmatprep.subr.bf16.mxu0 0
    %435 = vmatpush2.bf16.msra.mxu0 0
    %436 = vmatprep.subr.bf16.mxu0 0
    %437 = vmatpush2.bf16.msra.mxu0 0
    %438 = vmatprep.subr.bf16.mxu0 0
    %439 = vmatpush2.bf16.msra.mxu0 0
    %440 = vmatprep.subr.bf16.mxu0 0
    %441 = vmatpush2.bf16.msra.mxu0 0
    %442 = vmatprep.subr.bf16.mxu0 0
    %443 = vmatpush2.bf16.msra.mxu0 0
    %444 = vmatprep.subr.bf16.mxu0 0
    %445 = vmatpush2.bf16.msra.mxu0 0
    %446 = vmatprep.mubr.bf16.mxu0 0
    %447 = vmatmul.mubr.bf16.gmra.mxu0 %v343
    %v448 = vpop.f32.mrf.mxu0
    %v449 = vadd.f32 %v364, %v448
    %v450 = vpop.f32.mrf.mxu0
    %v451 = vpop.f32.mrf.mxu0
    %v452 = vpop.f32.mrf.mxu0
    %453 = vdwg.mxu0
    %v454 = vmul.f32 %v449, 0.2
    %v455 = vmax.f32 %v449, %v454
    %v456 = vld [vmem:[%s6] sm:$0x1]
    %v458 = vlaneseq
    %v459 = vshrl.u32 %v458, 7
    %v460 = vsub.s32 0, %v459
    %v461 = vrot.slane %v456, %v460
    %v463 = vmul.f32 %v455, %v461
    %vm464 = vcmask 801792
    %v465 = vsel %vm464, %v463, 0.0
    %466 = vadd.xlane.f32.xlu0 %v465
    %v467 = vpop.xlane.xlu0 %466
    %v468 = vmul.f32 %v467, 0.03125
    %v469 = vmul.f32 %v463, %v455
    %v470 = vsel %vm464, %v469, 0.0
    %471 = vadd.xlane.f32.xlu0 %v470
    %v472 = vpop.xlane.xlu0 %471
    %v473 = vmul.f32 %v472, 0.03125
    %v474 = vmul.f32 %v468, %v468
    %v475 = vsub.f32 %v473, %v474
    %v476 = vmax.f32 %v475, 0.0
    %v477 = vld [vmem:[%s4] sm:$0xff]
    %v478 = vadd.f32 %v476, 1e-05
    %v479 = vrsqrt.pop %v478
    %v480 = vmul.f32 %v477, %v479
    %v481 = vld [vmem:[%s5] sm:$0xff]
    %v482 = vmul.f32 %v468, %v480
    %v483 = vsub.f32 %v481, %v482
    %485 = vset.pattern.permute.xlu0 0
    %486 = vperm.xlu0 %485, %v480
    %v487 = vpop.permute.xlu0 %486
    %v489 = vmul.f32 %v455, %v487
    %491 = vset.pattern.permute.xlu0 0
    %492 = vperm.xlu0 %491, %v483
    %v493 = vpop.permute.xlu0 %492
    %v495 = vadd.f32 %v489, %v493
    %v496 = vpack.c.bf16 %v495, %v495
    %v497 = vld [vmem:[%s7] sm:$0xf]
    %v498 = vld [vmem:[%s7 + $0x4] sm:$0xf]
    %v499 = vld [vmem:[%s7 + $0x8] sm:$0xf]
    %v500 = vld [vmem:[%s7 + $0xc] sm:$0xf]
    %v501 = vld [vmem:[%s7 + $0x10] sm:$0xf]
    %v502 = vld [vmem:[%s7 + $0x14] sm:$0xf]
    %v503 = vld [vmem:[%s7 + $0x18] sm:$0xf]
    %v504 = vld [vmem:[%s7 + $0x1c] sm:$0xf]
    %v505 = vld [vmem:[%s7 + $0x20] sm:$0xf]
    %v506 = vld [vmem:[%s7 + $0x24] sm:$0xf]
    %v507 = vld [vmem:[%s7 + $0x28] sm:$0xf]
    %v508 = vld [vmem:[%s7 + $0x2c] sm:$0xf]
    %v509 = vld [vmem:[%s7 + $0x30] sm:$0x1]
    %v523 = vunpack.c.l.b16 %v497
    %v524 = vunpack.c.l.b16 %v498
    %v525 = vunpack.c.l.b16 %v499
    %v526 = vunpack.c.l.b16 %v500
    %v527 = vunpack.c.l.b16 %v501
    %v528 = vunpack.c.l.b16 %v502
    %v529 = vunpack.c.l.b16 %v503
    %v530 = vunpack.c.l.b16 %v504
    %v531 = vunpack.c.l.b16 %v505
    %v532 = vunpack.c.l.b16 %v506
    %v533 = vunpack.c.l.b16 %v507
    %v534 = vunpack.c.l.b16 %v508
    %v535 = vunpack.c.l.b16 %v509
    %v536 = vpack.c.b16 %v524, %v523
    %v537 = vpack.c.b16 %v526, %v525
    %v538 = vpack.c.b16 %v528, %v527
    %v539 = vpack.c.b16 %v530, %v529
    %v540 = vpack.c.b16 %v532, %v531
    %v541 = vpack.c.b16 %v534, %v533
    %v542 = vpack.c.b16 %v535, %v535
    %v550 = vsel %vm464, %v496, 0
    %v553 = vsel %vm158, %v542, 0
    %555 = vmatprep.subr.bf16.mxu0 0
    %556 = vmatpush1.bf16.msra.mxu0 0
    %557 = vmatprep.subr.bf16.mxu0 0
    %558 = vmatpush1.bf16.msra.mxu0 %v553
    %559 = vmatprep.subr.bf16.mxu0 0
    %560 = vmatpush1.bf16.msra.mxu0 %v541
    %561 = vmatprep.subr.bf16.mxu0 0
    %562 = vmatpush1.bf16.msra.mxu0 %v540
    %563 = vmatprep.subr.bf16.mxu0 0
    %564 = vmatpush1.bf16.msra.mxu0 %v539
    %565 = vmatprep.subr.bf16.mxu0 0
    %566 = vmatpush1.bf16.msra.mxu0 %v538
    %567 = vmatprep.subr.bf16.mxu0 0
    %568 = vmatpush1.bf16.msra.mxu0 %v537
    %569 = vmatprep.subr.bf16.mxu0 0
    %570 = vmatpush1.bf16.msra.mxu0 %v536
    %571 = vmatprep.subr.bf16.mxu0 0
    %572 = vmatpush2.bf16.msra.mxu0 0
    %573 = vmatprep.subr.bf16.mxu0 0
    %574 = vmatpush2.bf16.msra.mxu0 0
    %575 = vmatprep.subr.bf16.mxu0 0
    %576 = vmatpush2.bf16.msra.mxu0 0
    %577 = vmatprep.subr.bf16.mxu0 0
    %578 = vmatpush2.bf16.msra.mxu0 0
    %579 = vmatprep.subr.bf16.mxu0 0
    %580 = vmatpush2.bf16.msra.mxu0 0
    %581 = vmatprep.subr.bf16.mxu0 0
    %582 = vmatpush2.bf16.msra.mxu0 0
    %583 = vmatprep.subr.bf16.mxu0 0
    %584 = vmatpush2.bf16.msra.mxu0 0
    %585 = vmatprep.subr.bf16.mxu0 0
    %586 = vmatpush2.bf16.msra.mxu0 0
    %587 = vmatprep.mubr.bf16.mxu0 0
    %588 = vmatmul.mubr.bf16.gmra.mxu0 %v550
    %v589 = vpop.f32.mrf.mxu0
    %v590 = vadd.f32 0.0, %v589
    %v591 = vpop.f32.mrf.mxu0
    %v592 = vpop.f32.mrf.mxu0
    %v593 = vpop.f32.mrf.mxu0
    %594 = vdwg.mxu0
    %vm595 = vcmask 703488
    %596 = vst.msk [vmem:[#allocation3] sm:$0xff] %vm595, %v590
    %v597 = vld [vmem:[#allocation3] sm:$0xff]
    %v598 = vpack.c.bf16 %v597, %v597
    %vm599 = vcmask 584704
    %600 = vst.msk [vmem:[#allocation4] sm:$0xf] %vm599, %v598
    %v601 = vld [vmem:[#allocation3] sm:$0xff]
    %v602 = vpack.c.bf16 %v601, %v601
    %v604 = vunpack.c.l.b16 %v602
    %v605 = vpack.c.b16 %v604, %v604
    %606 = vrot.lane.b32.xlu0 %v605, 127
    %v607 = vpop.permute.xlu0 %606
    %609 = vst.msk [vmem:[#allocation4 + $0x18] sm:$0xf] %vm599, %v607
    %v610 = vld [vmem:[#allocation3] sm:$0xff]
    %v611 = vpack.c.bf16 %v610, %v610
    %v613 = vunpack.c.l.b16 %v611
    %v614 = vpack.c.b16 %v613, %v613
    %615 = vrot.lane.b32.xlu0 %v614, 126
    %v616 = vpop.permute.xlu0 %615
    %618 = vst.msk [vmem:[#allocation4 + $0x30] sm:$0xf] %vm599, %v616
    %v619 = vld [vmem:[#allocation3] sm:$0xff]
    %v620 = vpack.c.bf16 %v619, %v619
    %v622 = vunpack.c.l.b16 %v620
    %v623 = vpack.c.b16 %v622, %v622
    %624 = vrot.lane.b32.xlu0 %v623, 122
    %v625 = vpop.permute.xlu0 %624
    %627 = vst.msk [vmem:[#allocation4 + $0x48] sm:$0xf] %vm599, %v625
    %v628 = vld [vmem:[#allocation3] sm:$0xff]
    %v629 = vpack.c.bf16 %v628, %v628
    %v631 = vunpack.c.l.b16 %v629
    %v632 = vpack.c.b16 %v631, %v631
    %633 = vrot.lane.b32.xlu0 %v632, 121
    %v634 = vpop.permute.xlu0 %633
    %636 = vst.msk [vmem:[#allocation4 + $0x60] sm:$0xf] %vm599, %v634
    %v637 = vld [vmem:[#allocation3] sm:$0xff]
    %v638 = vpack.c.bf16 %v637, %v637
    %v640 = vunpack.c.l.b16 %v638
    %v641 = vpack.c.b16 %v640, %v640
    %642 = vrot.lane.b32.xlu0 %v641, 120
    %v643 = vpop.permute.xlu0 %642
    %645 = vst.msk [vmem:[#allocation4 + $0x78] sm:$0xf] %vm599, %v643
    %v646 = vld [vmem:[#allocation3] sm:$0xff]
    %v647 = vpack.c.bf16 %v646, %v646
    %v649 = vunpack.c.l.b16 %v647
    %v650 = vpack.c.b16 %v649, %v649
    %651 = vrot.lane.b32.xlu0 %v650, 116
    %v652 = vpop.permute.xlu0 %651
    %654 = vst.msk [vmem:[#allocation4 + $0x90] sm:$0xf] %vm599, %v652
    %v655 = vld [vmem:[#allocation3] sm:$0xff]
    %v656 = vpack.c.bf16 %v655, %v655
    %v658 = vunpack.c.l.b16 %v656
    %v659 = vpack.c.b16 %v658, %v658
    %660 = vrot.lane.b32.xlu0 %v659, 115
    %v661 = vpop.permute.xlu0 %660
    %663 = vst.msk [vmem:[#allocation4 + $0xa8] sm:$0xf] %vm599, %v661
    %v664 = vld [vmem:[#allocation3] sm:$0xff]
    %v665 = vpack.c.bf16 %v664, %v664
    %v667 = vunpack.c.l.b16 %v665
    %v668 = vpack.c.b16 %v667, %v667
    %669 = vrot.lane.b32.xlu0 %v668, 114
    %v670 = vpop.permute.xlu0 %669
    %672 = vst.msk [vmem:[#allocation4 + $0xc0] sm:$0xf] %vm599, %v670
    %v673 = vld [vmem:[%s8] sm:$0x7]
    %v674 = vld [vmem:[#allocation4] sm:$0xf]
    %v675 = vld [vmem:[#allocation4 + $0x18] sm:$0xf]
    %v676 = vld [vmem:[#allocation4 + $0x30] sm:$0xf]
    %v677 = vld [vmem:[#allocation4 + $0x48] sm:$0xf]
    %v678 = vld [vmem:[#allocation4 + $0x60] sm:$0xf]
    %v679 = vld [vmem:[#allocation4 + $0x78] sm:$0xf]
    %v680 = vld [vmem:[#allocation4 + $0x90] sm:$0xf]
    %v681 = vld [vmem:[#allocation4 + $0xa8] sm:$0xf]
    %v682 = vld [vmem:[#allocation4 + $0xc0] sm:$0xf]
    %v683 = vld [vmem:[%s9] sm:$0x3f]
    %685 = vset.pattern.permute.xlu0 0
    %686 = vperm.xlu0 %685, %v683
    %v687 = vpop.permute.xlu0 %686
    %v698 = vunpack.c.l.b16 %v674
    %v699 = vunpack.c.l.b16 %v675
    %v700 = vunpack.c.l.b16 %v676
    %v701 = vunpack.c.l.b16 %v677
    %v702 = vunpack.c.l.b16 %v678
    %v703 = vunpack.c.l.b16 %v679
    %v704 = vunpack.c.l.b16 %v680
    %v705 = vunpack.c.l.b16 %v681
    %v706 = vunpack.c.l.b16 %v682
    %v707 = vpack.c.b16 %v699, %v698
    %v708 = vpack.c.b16 %v701, %v700
    %v709 = vpack.c.b16 %v703, %v702
    %v710 = vpack.c.b16 %v705, %v704
    %v711 = vpack.c.b16 %v706, %v706
    %vm716 = vcmask 588800
    %v718 = vsel %vm716, %v673, 0
    %v721 = vsel %vm103, %v711, 0
    %723 = vmatprep.subr.bf16.mxu0 0
    %724 = vmatpush1.bf16.msra.mxu0 0
    %725 = vmatprep.subr.bf16.mxu0 0
    %726 = vmatpush1.bf16.msra.mxu0 0
    %727 = vmatprep.subr.bf16.mxu0 0
    %728 = vmatpush1.bf16.msra.mxu0 0
    %729 = vmatprep.subr.bf16.mxu0 0
    %730 = vmatpush1.bf16.msra.mxu0 %v721
    %731 = vmatprep.subr.bf16.mxu0 0
    %732 = vmatpush1.bf16.msra.mxu0 %v710
    %733 = vmatprep.subr.bf16.mxu0 0
    %734 = vmatpush1.bf16.msra.mxu0 %v709
    %735 = vmatprep.subr.bf16.mxu0 0
    %736 = vmatpush1.bf16.msra.mxu0 %v708
    %737 = vmatprep.subr.bf16.mxu0 0
    %738 = vmatpush1.bf16.msra.mxu0 %v707
    %739 = vmatprep.subr.bf16.mxu0 0
    %740 = vmatpush2.bf16.msra.mxu0 0
    %741 = vmatprep.subr.bf16.mxu0 0
    %742 = vmatpush2.bf16.msra.mxu0 0
    %743 = vmatprep.subr.bf16.mxu0 0
    %744 = vmatpush2.bf16.msra.mxu0 0
    %745 = vmatprep.subr.bf16.mxu0 0
    %746 = vmatpush2.bf16.msra.mxu0 0
    %747 = vmatprep.subr.bf16.mxu0 0
    %748 = vmatpush2.bf16.msra.mxu0 0
    %749 = vmatprep.subr.bf16.mxu0 0
    %750 = vmatpush2.bf16.msra.mxu0 0
    %751 = vmatprep.subr.bf16.mxu0 0
    %752 = vmatpush2.bf16.msra.mxu0 0
    %753 = vmatprep.subr.bf16.mxu0 0
    %754 = vmatpush2.bf16.msra.mxu0 0
    %755 = vmatprep.mubr.bf16.mxu0 0
    %756 = vmatmul.mubr.bf16.gmra.mxu0 %v718
    %v757 = vpop.f32.mrf.mxu0
    %v758 = vadd.f32 %v687, %v757
    %v759 = vpop.f32.mrf.mxu0
    %v760 = vpop.f32.mrf.mxu0
    %v761 = vpop.f32.mrf.mxu0
    %762 = vdwg.mxu0
    %v763 = vmul.f32 %v758, 0.2
    %v764 = vmax.f32 %v758, %v763
    %v765 = vld [vmem:[%s12] sm:$0x1]
    %v767 = vlaneseq
    %v768 = vshrl.u32 %v767, 7
    %v769 = vsub.s32 0, %v768
    %v770 = vrot.slane %v765, %v769
    %v772 = vmul.f32 %v764, %v770
    %vm773 = vcmask 586752
    %v774 = vsel %vm773, %v772, 0.0
    %775 = vadd.xlane.f32.xlu0 %v774
    %v776 = vpop.xlane.xlu0 %775
    %v777 = vmul.f32 %v776, 0.03125
    %v778 = vmul.f32 %v772, %v764
    %v779 = vsel %vm773, %v778, 0.0
    %780 = vadd.xlane.f32.xlu0 %v779
    %v781 = vpop.xlane.xlu0 %780
    %v782 = vmul.f32 %v781, 0.03125
    %v783 = vmul.f32 %v777, %v777
    %v784 = vsub.f32 %v782, %v783
    %v785 = vmax.f32 %v784, 0.0
    %v786 = vld [vmem:[%s10] sm:$0x3f]
    %v787 = vadd.f32 %v785, 1e-05
    %v788 = vrsqrt.pop %v787
    %v789 = vmul.f32 %v786, %v788
    %v790 = vld [vmem:[%s11] sm:$0x3f]
    %v791 = vmul.f32 %v777, %v789
    %v792 = vsub.f32 %v790, %v791
    %794 = vset.pattern.permute.xlu0 0
    %795 = vperm.xlu0 %794, %v789
    %v796 = vpop.permute.xlu0 %795
    %v798 = vmul.f32 %v764, %v796
    %800 = vset.pattern.permute.xlu0 0
    %801 = vperm.xlu0 %800, %v792
    %v802 = vpop.permute.xlu0 %801
    %v804 = vadd.f32 %v798, %v802
    %v805 = vpack.c.bf16 %v804, %v804
    %v806 = vld [vmem:[#allocation5] sm:$0xff]
    %v807 = vld [vmem:[#allocation5 + $0x8] sm:$0xff]
    %v808 = vld [vmem:[#allocation5 + $0x10] sm:$0xff]
    %v809 = vld [vmem:[#allocation5 + $0x18] sm:$0xff]
    %v810 = vld [vmem:[#allocation5 + $0x20] sm:$0xff]
    %v811 = vld [vmem:[#allocation5 + $0x28] sm:$0xff]
    %v812 = vld [vmem:[#allocation5 + $0x30] sm:$0xff]
    %v813 = vld [vmem:[#allocation5 + $0x38] sm:$0xff]
    %v814 = vld [vmem:[#allocation5 + $0x40] sm:$0xff]
    %v815 = vld [vmem:[#allocation5 + $0x48] sm:$0xff]
    %v816 = vld [vmem:[#allocation5 + $0x50] sm:$0xff]
    %v817 = vld [vmem:[#allocation5 + $0x58] sm:$0xff]
    %v818 = vld [vmem:[#allocation5 + $0x60] sm:$0xff]
    %v819 = vld [vmem:[#allocation5 + $0x68] sm:$0xff]
    %v820 = vld [vmem:[#allocation5 + $0x70] sm:$0xff]
    %v821 = vld [vmem:[#allocation5 + $0x78] sm:$0xff]
    %v822 = vld [vmem:[#allocation5 + $0x80] sm:$0xff]
    %v823 = vld [vmem:[#allocation5 + $0x88] sm:$0xff]
    %v824 = vld [vmem:[#allocation5 + $0x90] sm:$0xff]
    %v825 = vld [vmem:[#allocation5 + $0x98] sm:$0xff]
    %v826 = vld [vmem:[#allocation5 + $0xa0] sm:$0xff]
    %v827 = vld [vmem:[#allocation5 + $0xa8] sm:$0xff]
    %v828 = vld [vmem:[#allocation5 + $0xb0] sm:$0xff]
    %v829 = vld [vmem:[#allocation5 + $0xb8] sm:$0xff]
    %v830 = vld [vmem:[#allocation5 + $0xc0] sm:$0xff]
    %v831 = vld [vmem:[#allocation5 + $0xc8] sm:$0xff]
    %v832 = vld [vmem:[#allocation5 + $0xd0] sm:$0xff]
    %v860 = vunpack.c.l.b16 %v806
    %v861 = vunpack.c.h.b16 %v806
    %v862 = vunpack.c.l.b16 %v807
    %v863 = vunpack.c.h.b16 %v807
    %v864 = vunpack.c.l.b16 %v808
    %v865 = vunpack.c.h.b16 %v808
    %v866 = vunpack.c.l.b16 %v809
    %v867 = vunpack.c.h.b16 %v809
    %v868 = vunpack.c.l.b16 %v810
    %v869 = vunpack.c.h.b16 %v810
    %v870 = vunpack.c.l.b16 %v811
    %v871 = vunpack.c.h.b16 %v811
    %v872 = vunpack.c.l.b16 %v812
    %v873 = vunpack.c.h.b16 %v812
    %v874 = vunpack.c.l.b16 %v813
    %v875 = vunpack.c.h.b16 %v813
    %v876 = vunpack.c.l.b16 %v814
    %v877 = vunpack.c.h.b16 %v814
    %v878 = vunpack.c.l.b16 %v815
    %v879 = vunpack.c.h.b16 %v815
    %v880 = vunpack.c.l.b16 %v816
    %v881 = vunpack.c.h.b16 %v816
    %v882 = vunpack.c.l.b16 %v817
    %v883 = vunpack.c.h.b16 %v817
    %v884 = vunpack.c.l.b16 %v818
    %v885 = vunpack.c.h.b16 %v818
    %v886 = vunpack.c.l.b16 %v819
    %v887 = vunpack.c.h.b16 %v819
    %v888 = vunpack.c.l.b16 %v820
    %v889 = vunpack.c.h.b16 %v820
    %v890 = vunpack.c.l.b16 %v821
    %v891 = vunpack.c.h.b16 %v821
    %v892 = vunpack.c.l.b16 %v822
    %v893 = vunpack.c.h.b16 %v822
    %v894 = vunpack.c.l.b16 %v823
    %v895 = vunpack.c.h.b16 %v823
    %v896 = vunpack.c.l.b16 %v824
    %v897 = vunpack.c.h.b16 %v824
    %v898 = vunpack.c.l.b16 %v825
    %v899 = vunpack.c.h.b16 %v825
    %v900 = vunpack.c.l.b16 %v826
    %v901 = vunpack.c.h.b16 %v826
    %v902 = vunpack.c.l.b16 %v827
    %v903 = vunpack.c.h.b16 %v827
    %v904 = vunpack.c.l.b16 %v828
    %v905 = vunpack.c.h.b16 %v828
    %v906 = vunpack.c.l.b16 %v829
    %v907 = vunpack.c.h.b16 %v829
    %v908 = vunpack.c.l.b16 %v830
    %v909 = vunpack.c.h.b16 %v830
    %v910 = vunpack.c.l.b16 %v831
    %v911 = vunpack.c.h.b16 %v831
    %v912 = vunpack.c.l.b16 %v832
    %v913 = vunpack.c.h.b16 %v832
    %v914 = vpack.c.b16 %v866, %v860
    %v915 = vpack.c.b16 %v867, %v861
    %v916 = vpack.c.b16 %v868, %v862
    %v917 = vpack.c.b16 %v869, %v863
    %v918 = vpack.c.b16 %v870, %v864
    %v919 = vpack.c.b16 %v871, %v865
    %v920 = vpack.c.b16 %v878, %v872
    %v921 = vpack.c.b16 %v879, %v873
    %v922 = vpack.c.b16 %v880, %v874
    %v923 = vpack.c.b16 %v881, %v875
    %v924 = vpack.c.b16 %v882, %v876
    %v925 = vpack.c.b16 %v883, %v877
    %v926 = vpack.c.b16 %v890, %v884
    %v927 = vpack.c.b16 %v891, %v885
    %v928 = vpack.c.b16 %v892, %v886
    %v929 = vpack.c.b16 %v893, %v887
    %v930 = vpack.c.b16 %v894, %v888
    %v931 = vpack.c.b16 %v895, %v889
    %v932 = vpack.c.b16 %v902, %v896
    %v933 = vpack.c.b16 %v903, %v897
    %v934 = vpack.c.b16 %v904, %v898
    %v935 = vpack.c.b16 %v905, %v899
    %v936 = vpack.c.b16 %v906, %v900
    %v937 = vpack.c.b16 %v907, %v901
    %v938 = vpack.c.b16 %v908, %v908
    %v939 = vpack.c.b16 %v909, %v909
    %v940 = vpack.c.b16 %v910, %v910
    %v941 = vpack.c.b16 %v911, %v911
    %v942 = vpack.c.b16 %v912, %v912
    %v943 = vpack.c.b16 %v913, %v913
    %v969 = vsel %vm716, %v805, 0
    %v972 = vsel %vm103, %v938, 0
    %v975 = vsel %vm103, %v939, 0
    %v978 = vsel %vm103, %v940, 0
    %v981 = vsel %vm103, %v941, 0
    %v984 = vsel %vm103, %v942, 0
    %v987 = vsel %vm103, %v943, 0
    %989 = vmatprep.subr.bf16.mxu0 0
    %990 = vmatpush1.bf16.msra.mxu0 0
    %991 = vmatprep.subr.bf16.mxu0 0
    %992 = vmatpush1.bf16.msra.mxu0 0
    %993 = vmatprep.subr.bf16.mxu0 0
    %994 = vmatpush1.bf16.msra.mxu0 0
    %995 = vmatprep.subr.bf16.mxu0 %v975
    %996 = vmatpush1.bf16.msra.mxu0 %v972
    %997 = vmatprep.subr.bf16.mxu0 %v933
    %998 = vmatpush1.bf16.msra.mxu0 %v932
    %999 = vmatprep.subr.bf16.mxu0 %v927
    %1000 = vmatpush1.bf16.msra.mxu0 %v926
    %1001 = vmatprep.subr.bf16.mxu0 %v921
    %1002 = vmatpush1.bf16.msra.mxu0 %v920
    %1003 = vmatprep.subr.bf16.mxu0 %v915
    %1004 = vmatpush1.bf16.msra.mxu0 %v914
    %1005 = vmatprep.subr.bf16.mxu0 0
    %1006 = vmatpush2.bf16.msra.mxu0 0
    %1007 = vmatprep.subr.bf16.mxu0 0
    %1008 = vmatpush2.bf16.msra.mxu0 0
    %1009 = vmatprep.subr.bf16.mxu0 0
    %1010 = vmatpush2.bf16.msra.mxu0 0
    %1011 = vmatprep.subr.bf16.mxu0 0
    %1012 = vmatpush2.bf16.msra.mxu0 0
    %1013 = vmatprep.subr.bf16.mxu0 0
    %1014 = vmatpush2.bf16.msra.mxu0 0
    %1015 = vmatprep.subr.bf16.mxu0 0
    %1016 = vmatpush2.bf16.msra.mxu0 0
    %1017 = vmatprep.subr.bf16.mxu0 0
    %1018 = vmatpush2.bf16.msra.mxu0 0
    %1019 = vmatprep.subr.bf16.mxu0 0
    %1020 = vmatpush2.bf16.msra.mxu0 0
    %1021 = vmatprep.mubr.bf16.mxu0 0
    %1022 = vmatmul.mubr.bf16.gmra.mxu0 %v969
    %v1023 = vpop.f32.mrf.mxu0
    %v1024 = vadd.f32 0.0, %v1023
    %v1025 = vpop.f32.mrf.mxu0
    %v1026 = vadd.f32 0.0, %v1025
    %v1027 = vpop.f32.mrf.mxu0
    %v1028 = vpop.f32.mrf.mxu0
    %1029 = vdwg.mxu0
    %1030 = vmatprep.subr.bf16.mxu0 0
    %1031 = vmatpush1.bf16.msra.mxu0 0
    %1032 = vmatprep.subr.bf16.mxu0 0
    %1033 = vmatpush1.bf16.msra.mxu0 0
    %1034 = vmatprep.subr.bf16.mxu0 0
    %1035 = vmatpush1.bf16.msra.mxu0 0
    %1036 = vmatprep.subr.bf16.mxu0 %v981
    %1037 = vmatpush1.bf16.msra.mxu0 %v978
    %1038 = vmatprep.subr.bf16.mxu0 %v935
    %1039 = vmatpush1.bf16.msra.mxu0 %v934
    %1040 = vmatprep.subr.bf16.mxu0 %v929
    %1041 = vmatpush1.bf16.msra.mxu0 %v928
    %1042 = vmatprep.subr.bf16.mxu0 %v923
    %1043 = vmatpush1.bf16.msra.mxu0 %v922
    %1044 = vmatprep.subr.bf16.mxu0 %v917
    %1045 = vmatpush1.bf16.msra.mxu0 %v916
    %1046 = vmatprep.subr.bf16.mxu0 0
    %1047 = vmatpush2.bf16.msra.mxu0 0
    %1048 = vmatprep.subr.bf16.mxu0 0
    %1049 = vmatpush2.bf16.msra.mxu0 0
    %1050 = vmatprep.subr.bf16.mxu0 0
    %1051 = vmatpush2.bf16.msra.mxu0 0
    %1052 = vmatprep.subr.bf16.mxu0 0
    %1053 = vmatpush2.bf16.msra.mxu0 0
    %1054 = vmatprep.subr.bf16.mxu0 0
    %1055 = vmatpush2.bf16.msra.mxu0 0
    %1056 = vmatprep.subr.bf16.mxu0 0
    %1057 = vmatpush2.bf16.msra.mxu0 0
    %1058 = vmatprep.subr.bf16.mxu0 0
    %1059 = vmatpush2.bf16.msra.mxu0 0
    %1060 = vmatprep.subr.bf16.mxu0 0
    %1061 = vmatpush2.bf16.msra.mxu0 0
    %1062 = vmatprep.mubr.bf16.mxu0 0
    %1063 = vmatmul.mubr.bf16.gmra.mxu0 %v969
    %v1064 = vpop.f32.mrf.mxu0
    %v1065 = vadd.f32 0.0, %v1064
    %v1066 = vpop.f32.mrf.mxu0
    %v1067 = vadd.f32 0.0, %v1066
    %v1068 = vpop.f32.mrf.mxu0
    %v1069 = vpop.f32.mrf.mxu0
    %1070 = vdwg.mxu0
    %1071 = vmatprep.subr.bf16.mxu0 0
    %1072 = vmatpush1.bf16.msra.mxu0 0
    %1073 = vmatprep.subr.bf16.mxu0 0
    %1074 = vmatpush1.bf16.msra.mxu0 0
    %1075 = vmatprep.subr.bf16.mxu0 0
    %1076 = vmatpush1.bf16.msra.mxu0 0
    %1077 = vmatprep.subr.bf16.mxu0 %v987
    %1078 = vmatpush1.bf16.msra.mxu0 %v984
    %1079 = vmatprep.subr.bf16.mxu0 %v937
    %1080 = vmatpush1.bf16.msra.mxu0 %v936
    %1081 = vmatprep.subr.bf16.mxu0 %v931
    %1082 = vmatpush1.bf16.msra.mxu0 %v930
    %1083 = vmatprep.subr.bf16.mxu0 %v925
    %1084 = vmatpush1.bf16.msra.mxu0 %v924
    %1085 = vmatprep.subr.bf16.mxu0 %v919
    %1086 = vmatpush1.bf16.msra.mxu0 %v918
    %1087 = vmatprep.subr.bf16.mxu0 0
    %1088 = vmatpush2.bf16.msra.mxu0 0
    %1089 = vmatprep.subr.bf16.mxu0 0
    %1090 = vmatpush2.bf16.msra.mxu0 0
    %1091 = vmatprep.subr.bf16.mxu0 0
    %1092 = vmatpush2.bf16.msra.mxu0 0
    %1093 = vmatprep.subr.bf16.mxu0 0
    %1094 = vmatpush2.bf16.msra.mxu0 0
    %1095 = vmatprep.subr.bf16.mxu0 0
    %1096 = vmatpush2.bf16.msra.mxu0 0
    %1097 = vmatprep.subr.bf16.mxu0 0
    %1098 = vmatpush2.bf16.msra.mxu0 0
    %1099 = vmatprep.subr.bf16.mxu0 0
    %1100 = vmatpush2.bf16.msra.mxu0 0
    %1101 = vmatprep.subr.bf16.mxu0 0
    %1102 = vmatpush2.bf16.msra.mxu0 0
    %1103 = vmatprep.mubr.bf16.mxu0 0
    %1104 = vmatmul.mubr.bf16.gmra.mxu0 %v969
    %v1105 = vpop.f32.mrf.mxu0
    %v1106 = vadd.f32 0.0, %v1105
    %v1107 = vpop.f32.mrf.mxu0
    %v1108 = vadd.f32 0.0, %v1107
    %v1109 = vpop.f32.mrf.mxu0
    %v1110 = vpop.f32.mrf.mxu0
    %1111 = vdwg.mxu0
    %1112 = vst [vmem:[#allocation2] sm:$0x3f] %v1024
    %1113 = vst [vmem:[#allocation2 + $0x8] sm:$0x3f] %v1026
    %1114 = vst [vmem:[#allocation2 + $0x10] sm:$0x3f] %v1065
    %1115 = vst [vmem:[#allocation2 + $0x18] sm:$0x3f] %v1067
    %1116 = vst [vmem:[#allocation2 + $0x20] sm:$0x3f] %v1106
    %vm1117 = vcmask 373760
    %1118 = vst.msk [vmem:[#allocation2 + $0x28] sm:$0x3f] %vm1117, %v1108
    %v1119 = vld [vmem:[#allocation2] sm:$0x3f]
    %v1120 = vld [vmem:[#allocation2 + $0x8] sm:$0x3f]
    %v1121 = vld [vmem:[#allocation2 + $0x10] sm:$0x3f]
    %v1122 = vld [vmem:[#allocation2 + $0x18] sm:$0x3f]
    %v1123 = vld [vmem:[#allocation2 + $0x20] sm:$0x3f]
    %v1124 = vld [vmem:[#allocation2 + $0x28] sm:$0x3f]
    %v1125 = vpack.c.bf16 %v1119, %v1119
    %v1126 = vpack.c.bf16 %v1120, %v1120
    %v1127 = vpack.c.bf16 %v1121, %v1121
    %v1128 = vpack.c.bf16 %v1122, %v1122
    %v1129 = vpack.c.bf16 %v1123, %v1123
    %v1130 = vpack.c.bf16 %v1124, %v1124
    %v1137 = vunpack.c.l.b16 %v1125
    %v1138 = vunpack.c.l.b16 %v1126
    %v1139 = vunpack.c.l.b16 %v1127
    %v1140 = vunpack.c.l.b16 %v1128
    %v1141 = vunpack.c.l.b16 %v1129
    %v1142 = vunpack.c.l.b16 %v1130
    %v1143 = vpack.c.b16 %v1138, %v1137
    %v1144 = vpack.c.b16 %v1140, %v1139
    %v1145 = vpack.c.b16 %v1142, %v1141
    %1149 = vst [vmem:[#allocation4] sm:$0x77] %v1143
    %1150 = vst [vmem:[#allocation4 + $0x8] sm:$0x77] %v1144
    %vm1151 = vcmask 1042432
    %vm1152 = vcmask 63492
    %vm1153 = vmor %vm1152, %vm1151
    %1154 = vst.msk [vmem:[#allocation4 + $0x10] sm:$0x77] %vm1153, %v1145
    %v1155 = vld [vmem:[#allocation2] sm:$0x3f]
    %v1156 = vld [vmem:[#allocation2 + $0x8] sm:$0x3f]
    %v1157 = vld [vmem:[#allocation2 + $0x10] sm:$0x3f]
    %v1158 = vld [vmem:[#allocation2 + $0x18] sm:$0x3f]
    %v1159 = vld [vmem:[#allocation2 + $0x20] sm:$0x3f]
    %v1160 = vld [vmem:[#allocation2 + $0x28] sm:$0x3f]
    %v1161 = vpack.c.bf16 %v1155, %v1155
    %v1162 = vpack.c.bf16 %v1156, %v1156
    %v1163 = vpack.c.bf16 %v1157, %v1157
    %v1164 = vpack.c.bf16 %v1158, %v1158
    %v1165 = vpack.c.bf16 %v1159, %v1159
    %v1166 = vpack.c.bf16 %v1160, %v1160
    %v1173 = vunpack.c.l.b16 %v1161
    %v1174 = vunpack.c.l.b16 %v1162
    %v1175 = vunpack.c.l.b16 %v1163
    %v1176 = vunpack.c.l.b16 %v1164
    %v1177 = vunpack.c.l.b16 %v1165
    %v1178 = vunpack.c.l.b16 %v1166
    %v1179 = vpack.c.b16 %v1174, %v1173
    %v1180 = vpack.c.b16 %v1176, %v1175
    %v1181 = vpack.c.b16 %v1178, %v1177
    %1182 = vrot.lane.b32.xlu0 %v1179, 127
    %v1183 = vpop.permute.xlu0 %1182
    %1184 = vrot.lane.b32.xlu0 %v1180, 127
    %v1185 = vpop.permute.xlu0 %1184
    %1186 = vrot.lane.b32.xlu0 %v1181, 127
    %v1187 = vpop.permute.xlu0 %1186
    %v1188 = vrot.slane %v1183, 4
    %v1189 = vrot.slane %v1185, 4
    %v1190 = vrot.slane %v1187, 4
    %vm1191 = vcmask 1043456
    %v1192 = vsel %vm1191, %v1188, %v1189
    %vm1193 = vcmask 1039360
    %v1194 = vsel %vm1193, %v1183, %v1192
    %v1195 = vsel %vm1191, %v1189, %v1190
    %v1196 = vsel %vm1193, %v1185, %v1195
    %v1197 = vsel %vm1193, %v1187, %v1190
    %1201 = vst [vmem:[#allocation4 + $0x18] sm:$0x77] %v1194
    %1202 = vst [vmem:[#allocation4 + $0x20] sm:$0x77] %v1196
    %1203 = vst.msk [vmem:[#allocation4 + $0x28] sm:$0x77] %vm1153, %v1197
    %v1204 = vld [vmem:[#allocation2] sm:$0x3f]
    %v1205 = vld [vmem:[#allocation2 + $0x8] sm:$0x3f]
    %v1206 = vld [vmem:[#allocation2 + $0x10] sm:$0x3f]
    %v1207 = vld [vmem:[#allocation2 + $0x18] sm:$0x3f]
    %v1208 = vld [vmem:[#allocation2 + $0x20] sm:$0x3f]
    %v1209 = vld [vmem:[#allocation2 + $0x28] sm:$0x3f]
    %v1210 = vpack.c.bf16 %v1204, %v1204
    %v1211 = vpack.c.bf16 %v1205, %v1205
    %v1212 = vpack.c.bf16 %v1206, %v1206
    %v1213 = vpack.c.bf16 %v1207, %v1207
    %v1214 = vpack.c.bf16 %v1208, %v1208
    %v1215 = vpack.c.bf16 %v1209, %v1209
    %v1222 = vunpack.c.l.b16 %v1210
    %v1223 = vunpack.c.l.b16 %v1211
    %v1224 = vunpack.c.l.b16 %v1212
    %v1225 = vunpack.c.l.b16 %v1213
    %v1226 = vunpack.c.l.b16 %v1214
    %v1227 = vunpack.c.l.b16 %v1215
    %v1228 = vpack.c.b16 %v1223, %v1222
    %v1229 = vpack.c.b16 %v1225, %v1224
    %v1230 = vpack.c.b16 %v1227, %v1226
    %1231 = vrot.lane.b32.xlu0 %v1228, 126
    %v1232 = vpop.permute.xlu0 %1231
    %1233 = vrot.lane.b32.xlu0 %v1229, 126
    %v1234 = vpop.permute.xlu0 %1233
    %1235 = vrot.lane.b32.xlu0 %v1230, 126
    %v1236 = vpop.permute.xlu0 %1235
    %v1237 = vrot.slane %v1232, 4
    %v1238 = vrot.slane %v1234, 4
    %v1239 = vrot.slane %v1236, 4
    %v1240 = vsel %vm1191, %v1237, %v1238
    %vm1241 = vcmask 1031168
    %v1242 = vsel %vm1241, %v1232, %v1240
    %v1243 = vsel %vm1191, %v1238, %v1239
    %v1244 = vsel %vm1241, %v1234, %v1243
    %v1245 = vsel %vm1241, %v1236, %v1239
    %1249 = vst [vmem:[#allocation4 + $0x30] sm:$0x77] %v1242
    %1250 = vst [vmem:[#allocation4 + $0x38] sm:$0x77] %v1244
    %1251 = vst.msk [vmem:[#allocation4 + $0x40] sm:$0x77] %vm1153, %v1245
    %v1252 = vld [vmem:[#allocation2] sm:$0x3f]
    %v1253 = vld [vmem:[#allocation2 + $0x8] sm:$0x3f]
    %v1254 = vld [vmem:[#allocation2 + $0x10] sm:$0x3f]
    %v1255 = vld [vmem:[#allocation2 + $0x18] sm:$0x3f]
    %v1256 = vld [vmem:[#allocation2 + $0x20] sm:$0x3f]
    %v1257 = vld [vmem:[#allocation2 + $0x28] sm:$0x3f]
    %v1258 = vpack.c.bf16 %v1252, %v1252
    %v1259 = vpack.c.bf16 %v1253, %v1253
    %v1260 = vpack.c.bf16 %v1254, %v1254
    %v1261 = vpack.c.bf16 %v1255, %v1255
    %v1262 = vpack.c.bf16 %v1256, %v1256
    %v1263 = vpack.c.bf16 %v1257, %v1257
    %v1270 = vunpack.c.l.b16 %v1258
    %v1271 = vunpack.c.l.b16 %v1259
    %v1272 = vunpack.c.l.b16 %v1260
    %v1273 = vunpack.c.l.b16 %v1261
    %v1274 = vunpack.c.l.b16 %v1262
    %v1275 = vunpack.c.l.b16 %v1263
    %v1276 = vpack.c.b16 %v1271, %v1270
    %v1277 = vpack.c.b16 %v1273, %v1272
    %v1278 = vpack.c.b16 %v1275, %v1274
    %1279 = vrot.lane.b32.xlu0 %v1276, 110
    %v1280 = vpop.permute.xlu0 %1279
    %1281 = vrot.lane.b32.xlu0 %v1277, 110
    %v1282 = vpop.permute.xlu0 %1281
    %1283 = vrot.lane.b32.xlu0 %v1278, 110
    %v1284 = vpop.permute.xlu0 %1283
    %v1285 = vrot.slane %v1280, 4
    %v1286 = vrot.slane %v1282, 4
    %v1287 = vrot.slane %v1284, 4
    %v1288 = vsel %vm1191, %v1285, %v1286
    %vm1289 = vcmask 900096
    %v1290 = vsel %vm1289, %v1280, %v1288
    %v1291 = vsel %vm1191, %v1286, %v1287
    %v1292 = vsel %vm1289, %v1282, %v1291
    %v1293 = vsel %vm1289, %v1284, %v1287
    %1297 = vst [vmem:[#allocation4 + $0x48] sm:$0x77] %v1290
    %1298 = vst [vmem:[#allocation4 + $0x50] sm:$0x77] %v1292
    %1299 = vst.msk [vmem:[#allocation4 + $0x58] sm:$0x77] %vm1153, %v1293
    %v1300 = vld [vmem:[#allocation2] sm:$0x3f]
    %v1301 = vld [vmem:[#allocation2 + $0x8] sm:$0x3f]
    %v1302 = vld [vmem:[#allocation2 + $0x10] sm:$0x3f]
    %v1303 = vld [vmem:[#allocation2 + $0x18] sm:$0x3f]
    %v1304 = vld [vmem:[#allocation2 + $0x20] sm:$0x3f]
    %v1305 = vld [vmem:[#allocation2 + $0x28] sm:$0x3f]
    %v1306 = vpack.c.bf16 %v1300, %v1300
    %v1307 = vpack.c.bf16 %v1301, %v1301
    %v1308 = vpack.c.bf16 %v1302, %v1302
    %v1309 = vpack.c.bf16 %v1303, %v1303
    %v1310 = vpack.c.bf16 %v1304, %v1304
    %v1311 = vpack.c.bf16 %v1305, %v1305
    %v1318 = vunpack.c.l.b16 %v1306
    %v1319 = vunpack.c.l.b16 %v1307
    %v1320 = vunpack.c.l.b16 %v1308
    %v1321 = vunpack.c.l.b16 %v1309
    %v1322 = vunpack.c.l.b16 %v1310
    %v1323 = vunpack.c.l.b16 %v1311
    %v1324 = vpack.c.b16 %v1319, %v1318
    %v1325 = vpack.c.b16 %v1321, %v1320
    %v1326 = vpack.c.b16 %v1323, %v1322
    %1327 = vrot.lane.b32.xlu0 %v1324, 109
    %v1328 = vpop.permute.xlu0 %1327
    %1329 = vrot.lane.b32.xlu0 %v1325, 109
    %v1330 = vpop.permute.xlu0 %1329
    %1331 = vrot.lane.b32.xlu0 %v1326, 109
    %v1332 = vpop.permute.xlu0 %1331
    %v1333 = vrot.slane %v1328, 4
    %v1334 = vrot.slane %v1330, 4
    %v1335 = vrot.slane %v1332, 4
    %v1336 = vsel %vm1191, %v1333, %v1334
    %vm1337 = vcmask 891904
    %v1338 = vsel %vm1337, %v1328, %v1336
    %v1339 = vsel %vm1191, %v1334, %v1335
    %v1340 = vsel %vm1337, %v1330, %v1339
    %v1341 = vsel %vm1337, %v1332, %v1335
    %1345 = vst [vmem:[#allocation4 + $0x60] sm:$0x77] %v1338
    %1346 = vst [vmem:[#allocation4 + $0x68] sm:$0x77] %v1340
    %1347 = vst.msk [vmem:[#allocation4 + $0x70] sm:$0x77] %vm1153, %v1341
    %v1348 = vld [vmem:[#allocation2] sm:$0x3f]
    %v1349 = vld [vmem:[#allocation2 + $0x8] sm:$0x3f]
    %v1350 = vld [vmem:[#allocation2 + $0x10] sm:$0x3f]
    %v1351 = vld [vmem:[#allocation2 + $0x18] sm:$0x3f]
    %v1352 = vld [vmem:[#allocation2 + $0x20] sm:$0x3f]
    %v1353 = vld [vmem:[#allocation2 + $0x28] sm:$0x3f]
    %v1354 = vpack.c.bf16 %v1348, %v1348
    %v1355 = vpack.c.bf16 %v1349, %v1349
    %v1356 = vpack.c.bf16 %v1350, %v1350
    %v1357 = vpack.c.bf16 %v1351, %v1351
    %v1358 = vpack.c.bf16 %v1352, %v1352
    %v1359 = vpack.c.bf16 %v1353, %v1353
    %v1366 = vunpack.c.l.b16 %v1354
    %v1367 = vunpack.c.l.b16 %v1355
    %v1368 = vunpack.c.l.b16 %v1356
    %v1369 = vunpack.c.l.b16 %v1357
    %v1370 = vunpack.c.l.b16 %v1358
    %v1371 = vunpack.c.l.b16 %v1359
    %v1372 = vpack.c.b16 %v1367, %v1366
    %v1373 = vpack.c.b16 %v1369, %v1368
    %v1374 = vpack.c.b16 %v1371, %v1370
    %1375 = vrot.lane.b32.xlu0 %v1372, 108
    %v1376 = vpop.permute.xlu0 %1375
    %1377 = vrot.lane.b32.xlu0 %v1373, 108
    %v1378 = vpop.permute.xlu0 %1377
    %1379 = vrot.lane.b32.xlu0 %v1374, 108
    %v1380 = vpop.permute.xlu0 %1379
    %v1381 = vrot.slane %v1376, 4
    %v1382 = vrot.slane %v1378, 4
    %v1383 = vrot.slane %v1380, 4
    %v1384 = vsel %vm1191, %v1381, %v1382
    %vm1385 = vcmask 883712
    %v1386 = vsel %vm1385, %v1376, %v1384
    %v1387 = vsel %vm1191, %v1382, %v1383
    %v1388 = vsel %vm1385, %v1378, %v1387
    %v1389 = vsel %vm1385, %v1380, %v1383
    %1393 = vst [vmem:[#allocation4 + $0x78] sm:$0x77] %v1386
    %1394 = vst [vmem:[#allocation4 + $0x80] sm:$0x77] %v1388
    %1395 = vst.msk [vmem:[#allocation4 + $0x88] sm:$0x77] %vm1153, %v1389
    %v1396 = vld [vmem:[#allocation2] sm:$0x3f]
    %v1397 = vld [vmem:[#allocation2 + $0x8] sm:$0x3f]
    %v1398 = vld [vmem:[#allocation2 + $0x10] sm:$0x3f]
    %v1399 = vld [vmem:[#allocation2 + $0x18] sm:$0x3f]
    %v1400 = vld [vmem:[#allocation2 + $0x20] sm:$0x3f]
    %v1401 = vld [vmem:[#allocation2 + $0x28] sm:$0x3f]
    %v1402 = vpack.c.bf16 %v1396, %v1396
    %v1403 = vpack.c.bf16 %v1397, %v1397
    %v1404 = vpack.c.bf16 %v1398, %v1398
    %v1405 = vpack.c.bf16 %v1399, %v1399
    %v1406 = vpack.c.bf16 %v1400, %v1400
    %v1407 = vpack.c.bf16 %v1401, %v1401
    %v1414 = vunpack.c.l.b16 %v1402
    %v1415 = vunpack.c.l.b16 %v1403
    %v1416 = vunpack.c.l.b16 %v1404
    %v1417 = vunpack.c.l.b16 %v1405
    %v1418 = vunpack.c.l.b16 %v1406
    %v1419 = vunpack.c.l.b16 %v1407
    %v1420 = vpack.c.b16 %v1415, %v1414
    %v1421 = vpack.c.b16 %v1417, %v1416
    %v1422 = vpack.c.b16 %v1419, %v1418
    %1423 = vrot.lane.b32.xlu0 %v1420, 92
    %v1424 = vpop.permute.xlu0 %1423
    %1425 = vrot.lane.b32.xlu0 %v1421, 92
    %v1426 = vpop.permute.xlu0 %1425
    %1427 = vrot.lane.b32.xlu0 %v1422, 92
    %v1428 = vpop.permute.xlu0 %1427
    %v1429 = vrot.slane %v1424, 4
    %v1430 = vrot.slane %v1426, 4
    %v1431 = vrot.slane %v1428, 4
    %v1432 = vsel %vm1191, %v1429, %v1430
    %vm1433 = vcmask 752640
    %v1434 = vsel %vm1433, %v1424, %v1432
    %v1435 = vsel %vm1191, %v1430, %v1431
    %v1436 = vsel %vm1433, %v1426, %v1435
    %v1437 = vsel %vm1433, %v1428, %v1431
    %1441 = vst [vmem:[#allocation4 + $0x90] sm:$0x77] %v1434
    %1442 = vst [vmem:[#allocation4 + $0x98] sm:$0x77] %v1436
    %1443 = vst.msk [vmem:[#allocation4 + $0xa0] sm:$0x77] %vm1153, %v1437
    %v1444 = vld [vmem:[#allocation2] sm:$0x3f]
    %v1445 = vld [vmem:[#allocation2 + $0x8] sm:$0x3f]
    %v1446 = vld [vmem:[#allocation2 + $0x10] sm:$0x3f]
    %v1447 = vld [vmem:[#allocation2 + $0x18] sm:$0x3f]
    %v1448 = vld [vmem:[#allocation2 + $0x20] sm:$0x3f]
    %v1449 = vld [vmem:[#allocation2 + $0x28] sm:$0x3f]
    %v1450 = vpack.c.bf16 %v1444, %v1444
    %v1451 = vpack.c.bf16 %v1445, %v1445
    %v1452 = vpack.c.bf16 %v1446, %v1446
    %v1453 = vpack.c.bf16 %v1447, %v1447
    %v1454 = vpack.c.bf16 %v1448, %v1448
    %v1455 = vpack.c.bf16 %v1449, %v1449
    %v1462 = vunpack.c.l.b16 %v1450
    %v1463 = vunpack.c.l.b16 %v1451
    %v1464 = vunpack.c.l.b16 %v1452
    %v1465 = vunpack.c.l.b16 %v1453
    %v1466 = vunpack.c.l.b16 %v1454
    %v1467 = vunpack.c.l.b16 %v1455
    %v1468 = vpack.c.b16 %v1463, %v1462
    %v1469 = vpack.c.b16 %v1465, %v1464
    %v1470 = vpack.c.b16 %v1467, %v1466
    %1471 = vrot.lane.b32.xlu0 %v1468, 91
    %v1472 = vpop.permute.xlu0 %1471
    %1473 = vrot.lane.b32.xlu0 %v1469, 91
    %v1474 = vpop.permute.xlu0 %1473
    %1475 = vrot.lane.b32.xlu0 %v1470, 91
    %v1476 = vpop.permute.xlu0 %1475
    %v1477 = vrot.slane %v1472, 4
    %v1478 = vrot.slane %v1474, 4
    %v1479 = vrot.slane %v1476, 4
    %v1480 = vsel %vm1191, %v1477, %v1478
    %vm1481 = vcmask 744448
    %v1482 = vsel %vm1481, %v1472, %v1480
    %v1483 = vsel %vm1191, %v1478, %v1479
    %v1484 = vsel %vm1481, %v1474, %v1483
    %v1485 = vsel %vm1481, %v1476, %v1479
    %1489 = vst [vmem:[#allocation4 + $0xa8] sm:$0x77] %v1482
    %1490 = vst [vmem:[#allocation4 + $0xb0] sm:$0x77] %v1484
    %1491 = vst.msk [vmem:[#allocation4 + $0xb8] sm:$0x77] %vm1153, %v1485
    %v1492 = vld [vmem:[#allocation2] sm:$0x3f]
    %v1493 = vld [vmem:[#allocation2 + $0x8] sm:$0x3f]
    %v1494 = vld [vmem:[#allocation2 + $0x10] sm:$0x3f]
    %v1495 = vld [vmem:[#allocation2 + $0x18] sm:$0x3f]
    %v1496 = vld [vmem:[#allocation2 + $0x20] sm:$0x3f]
    %v1497 = vld [vmem:[#allocation2 + $0x28] sm:$0x3f]
    %v1498 = vpack.c.bf16 %v1492, %v1492
    %v1499 = vpack.c.bf16 %v1493, %v1493
    %v1500 = vpack.c.bf16 %v1494, %v1494
    %v1501 = vpack.c.bf16 %v1495, %v1495
    %v1502 = vpack.c.bf16 %v1496, %v1496
    %v1503 = vpack.c.bf16 %v1497, %v1497
    %v1510 = vunpack.c.l.b16 %v1498
    %v1511 = vunpack.c.l.b16 %v1499
    %v1512 = vunpack.c.l.b16 %v1500
    %v1513 = vunpack.c.l.b16 %v1501
    %v1514 = vunpack.c.l.b16 %v1502
    %v1515 = vunpack.c.l.b16 %v1503
    %v1516 = vpack.c.b16 %v1511, %v1510
    %v1517 = vpack.c.b16 %v1513, %v1512
    %v1518 = vpack.c.b16 %v1515, %v1514
    %1519 = vrot.lane.b32.xlu0 %v1516, 90
    %v1520 = vpop.permute.xlu0 %1519
    %1521 = vrot.lane.b32.xlu0 %v1517, 90
    %v1522 = vpop.permute.xlu0 %1521
    %1523 = vrot.lane.b32.xlu0 %v1518, 90
    %v1524 = vpop.permute.xlu0 %1523
    %v1525 = vrot.slane %v1520, 4
    %v1526 = vrot.slane %v1522, 4
    %v1527 = vrot.slane %v1524, 4
    %v1528 = vsel %vm1191, %v1525, %v1526
    %vm1529 = vcmask 736256
    %v1530 = vsel %vm1529, %v1520, %v1528
    %v1531 = vsel %vm1191, %v1526, %v1527
    %v1532 = vsel %vm1529, %v1522, %v1531
    %v1533 = vsel %vm1529, %v1524, %v1527
    %1537 = vst [vmem:[#allocation4 + $0xc0] sm:$0x77] %v1530
    %1538 = vst [vmem:[#allocation4 + $0xc8] sm:$0x77] %v1532
    %1539 = vst.msk [vmem:[#allocation4 + $0xd0] sm:$0x77] %vm1153, %v1533
    %v1540 = vld [vmem:[%s14] sm:$0x3]
    %v1541 = vld [vmem:[#allocation4] sm:$0xff]
    %v1542 = vld [vmem:[#allocation4 + $0x8] sm:$0xff]
    %v1543 = vld [vmem:[#allocation4 + $0x10] sm:$0xff]
    %v1544 = vld [vmem:[#allocation4 + $0x18] sm:$0xff]
    %v1545 = vld [vmem:[#allocation4 + $0x20] sm:$0xff]
    %v1546 = vld [vmem:[#allocation4 + $0x28] sm:$0xff]
    %v1547 = vld [vmem:[#allocation4 + $0x30] sm:$0xff]
    %v1548 = vld [vmem:[#allocation4 + $0x38] sm:$0xff]
    %v1549 = vld [vmem:[#allocation4 + $0x40] sm:$0xff]
    %v1550 = vld [vmem:[#allocation4 + $0x48] sm:$0xff]
    %v1551 = vld [vmem:[#allocation4 + $0x50] sm:$0xff]
    %v1552 = vld [vmem:[#allocation4 + $0x58] sm:$0xff]
    %v1553 = vld [vmem:[#allocation4 + $0x60] sm:$0xff]
    %v1554 = vld [vmem:[#allocation4 + $0x68] sm:$0xff]
    %v1555 = vld [vmem:[#allocation4 + $0x70] sm:$0xff]
    %v1556 = vld [vmem:[#allocation4 + $0x78] sm:$0xff]
    %v1557 = vld [vmem:[#allocation4 + $0x80] sm:$0xff]
    %v1558 = vld [vmem:[#allocation4 + $0x88] sm:$0xff]
    %v1559 = vld [vmem:[#allocation4 + $0x90] sm:$0xff]
    %v1560 = vld [vmem:[#allocation4 + $0x98] sm:$0xff]
    %v1561 = vld [vmem:[#allocation4 + $0xa0] sm:$0xff]
    %v1562 = vld [vmem:[#allocation4 + $0xa8] sm:$0xff]
    %v1563 = vld [vmem:[#allocation4 + $0xb0] sm:$0xff]
    %v1564 = vld [vmem:[#allocation4 + $0xb8] sm:$0xff]
    %v1565 = vld [vmem:[#allocation4 + $0xc0] sm:$0xff]
    %v1566 = vld [vmem:[#allocation4 + $0xc8] sm:$0xff]
    %v1567 = vld [vmem:[#allocation4 + $0xd0] sm:$0xff]
    %v1568 = vld [vmem:[%s15] sm:$0xf]
    %1570 = vset.pattern.permute.xlu0 0
    %1571 = vperm.xlu0 %1570, %v1568
    %v1572 = vpop.permute.xlu0 %1571
    %v1601 = vunpack.c.l.b16 %v1541
    %v1602 = vunpack.c.h.b16 %v1541
    %v1603 = vunpack.c.l.b16 %v1542
    %v1604 = vunpack.c.h.b16 %v1542
    %v1605 = vunpack.c.l.b16 %v1543
    %v1606 = vunpack.c.h.b16 %v1543
    %v1607 = vunpack.c.l.b16 %v1544
    %v1608 = vunpack.c.h.b16 %v1544
    %v1609 = vunpack.c.l.b16 %v1545
    %v1610 = vunpack.c.h.b16 %v1545
    %v1611 = vunpack.c.l.b16 %v1546
    %v1612 = vunpack.c.h.b16 %v1546
    %v1613 = vunpack.c.l.b16 %v1547
    %v1614 = vunpack.c.h.b16 %v1547
    %v1615 = vunpack.c.l.b16 %v1548
    %v1616 = vunpack.c.h.b16 %v1548
    %v1617 = vunpack.c.l.b16 %v1549
    %v1618 = vunpack.c.h.b16 %v1549
    %v1619 = vunpack.c.l.b16 %v1550
    %v1620 = vunpack.c.h.b16 %v1550
    %v1621 = vunpack.c.l.b16 %v1551
    %v1622 = vunpack.c.h.b16 %v1551
    %v1623 = vunpack.c.l.b16 %v1552
    %v1624 = vunpack.c.h.b16 %v1552
    %v1625 = vunpack.c.l.b16 %v1553
    %v1626 = vunpack.c.h.b16 %v1553
    %v1627 = vunpack.c.l.b16 %v1554
    %v1628 = vunpack.c.h.b16 %v1554
    %v1629 = vunpack.c.l.b16 %v1555
    %v1630 = vunpack.c.h.b16 %v1555
    %v1631 = vunpack.c.l.b16 %v1556
    %v1632 = vunpack.c.h.b16 %v1556
    %v1633 = vunpack.c.l.b16 %v1557
    %v1634 = vunpack.c.h.b16 %v1557
    %v1635 = vunpack.c.l.b16 %v1558
    %v1636 = vunpack.c.h.b16 %v1558
    %v1637 = vunpack.c.l.b16 %v1559
    %v1638 = vunpack.c.h.b16 %v1559
    %v1639 = vunpack.c.l.b16 %v1560
    %v1640 = vunpack.c.h.b16 %v1560
    %v1641 = vunpack.c.l.b16 %v1561
    %v1642 = vunpack.c.h.b16 %v1561
    %v1643 = vunpack.c.l.b16 %v1562
    %v1644 = vunpack.c.h.b16 %v1562
    %v1645 = vunpack.c.l.b16 %v1563
    %v1646 = vunpack.c.h.b16 %v1563
    %v1647 = vunpack.c.l.b16 %v1564
    %v1648 = vunpack.c.h.b16 %v1564
    %v1649 = vunpack.c.l.b16 %v1565
    %v1650 = vunpack.c.h.b16 %v1565
    %v1651 = vunpack.c.l.b16 %v1566
    %v1652 = vunpack.c.h.b16 %v1566
    %v1653 = vunpack.c.l.b16 %v1567
    %v1654 = vunpack.c.h.b16 %v1567
    %v1655 = vpack.c.b16 %v1607, %v1601
    %v1656 = vpack.c.b16 %v1608, %v1602
    %v1657 = vpack.c.b16 %v1609, %v1603
    %v1658 = vpack.c.b16 %v1610, %v1604
    %v1659 = vpack.c.b16 %v1611, %v1605
    %v1660 = vpack.c.b16 %v1612, %v1606
    %v1661 = vpack.c.b16 %v1619, %v1613
    %v1662 = vpack.c.b16 %v1620, %v1614
    %v1663 = vpack.c.b16 %v1621, %v1615
    %v1664 = vpack.c.b16 %v1622, %v1616
    %v1665 = vpack.c.b16 %v1623, %v1617
    %v1666 = vpack.c.b16 %v1624, %v1618
    %v1667 = vpack.c.b16 %v1631, %v1625
    %v1668 = vpack.c.b16 %v1632, %v1626
    %v1669 = vpack.c.b16 %v1633, %v1627
    %v1670 = vpack.c.b16 %v1634, %v1628
    %v1671 = vpack.c.b16 %v1635, %v1629
    %v1672 = vpack.c.b16 %v1636, %v1630
    %v1673 = vpack.c.b16 %v1643, %v1637
    %v1674 = vpack.c.b16 %v1644, %v1638
    %v1675 = vpack.c.b16 %v1645, %v1639
    %v1676 = vpack.c.b16 %v1646, %v1640
    %v1677 = vpack.c.b16 %v1647, %v1641
    %v1678 = vpack.c.b16 %v1648, %v1642
    %v1679 = vpack.c.b16 %v1649, %v1649
    %v1680 = vpack.c.b16 %v1650, %v1650
    %v1681 = vpack.c.b16 %v1651, %v1651
    %v1682 = vpack.c.b16 %v1652, %v1652
    %v1683 = vpack.c.b16 %v1653, %v1653
    %v1684 = vpack.c.b16 %v1654, %v1654
    %v1710 = vsel %vm716, %v1540, 0
    %v1713 = vsel %vm103, %v1679, 0
    %v1716 = vsel %vm103, %v1680, 0
    %v1719 = vsel %vm103, %v1681, 0
    %v1722 = vsel %vm103, %v1682, 0
    %v1725 = vsel %vm103, %v1683, 0
    %v1728 = vsel %vm103, %v1684, 0
    %1730 = vmatprep.subr.bf16.mxu0 0
    %1731 = vmatpush1.bf16.msra.mxu0 0
    %1732 = vmatprep.subr.bf16.mxu0 0
    %1733 = vmatpush1.bf16.msra.mxu0 0
    %1734 = vmatprep.subr.bf16.mxu0 0
    %1735 = vmatpush1.bf16.msra.mxu0 0
    %1736 = vmatprep.subr.bf16.mxu0 %v1716
    %1737 = vmatpush1.bf16.msra.mxu0 %v1713
    %1738 = vmatprep.subr.bf16.mxu0 %v1674
    %1739 = vmatpush1.bf16.msra.mxu0 %v1673
    %1740 = vmatprep.subr.bf16.mxu0 %v1668
    %1741 = vmatpush1.bf16.msra.mxu0 %v1667
    %1742 = vmatprep.subr.bf16.mxu0 %v1662
    %1743 = vmatpush1.bf16.msra.mxu0 %v1661
    %1744 = vmatprep.subr.bf16.mxu0 %v1656
    %1745 = vmatpush1.bf16.msra.mxu0 %v1655
    %1746 = vmatprep.subr.bf16.mxu0 0
    %1747 = vmatpush2.bf16.msra.mxu0 0
    %1748 = vmatprep.subr.bf16.mxu0 0
    %1749 = vmatpush2.bf16.msra.mxu0 0
    %1750 = vmatprep.subr.bf16.mxu0 0
    %1751 = vmatpush2.bf16.msra.mxu0 0
    %1752 = vmatprep.subr.bf16.mxu0 0
    %1753 = vmatpush2.bf16.msra.mxu0 0
    %1754 = vmatprep.subr.bf16.mxu0 0
    %1755 = vmatpush2.bf16.msra.mxu0 0
    %1756 = vmatprep.subr.bf16.mxu0 0
    %1757 = vmatpush2.bf16.msra.mxu0 0
    %1758 = vmatprep.subr.bf16.mxu0 0
    %1759 = vmatpush2.bf16.msra.mxu0 0
    %1760 = vmatprep.subr.bf16.mxu0 0
    %1761 = vmatpush2.bf16.msra.mxu0 0
    %1762 = vmatprep.mubr.bf16.mxu0 0
    %1763 = vmatmul.mubr.bf16.gmra.mxu0 %v1710
    %v1764 = vpop.f32.mrf.mxu0
    %v1765 = vadd.f32 %v1572, %v1764
    %v1766 = vpop.f32.mrf.mxu0
    %v1767 = vadd.f32 %v1572, %v1766
    %v1768 = vpop.f32.mrf.mxu0
    %v1769 = vpop.f32.mrf.mxu0
    %1770 = vdwg.mxu0
    %1771 = vmatprep.subr.bf16.mxu0 0
    %1772 = vmatpush1.bf16.msra.mxu0 0
    %1773 = vmatprep.subr.bf16.mxu0 0
    %1774 = vmatpush1.bf16.msra.mxu0 0
    %1775 = vmatprep.subr.bf16.mxu0 0
    %1776 = vmatpush1.bf16.msra.mxu0 0
    %1777 = vmatprep.subr.bf16.mxu0 %v1722
    %1778 = vmatpush1.bf16.msra.mxu0 %v1719
    %1779 = vmatprep.subr.bf16.mxu0 %v1676
    %1780 = vmatpush1.bf16.msra.mxu0 %v1675
    %1781 = vmatprep.subr.bf16.mxu0 %v1670
    %1782 = vmatpush1.bf16.msra.mxu0 %v1669
    %1783 = vmatprep.subr.bf16.mxu0 %v1664
    %1784 = vmatpush1.bf16.msra.mxu0 %v1663
    %1785 = vmatprep.subr.bf16.mxu0 %v1658
    %1786 = vmatpush1.bf16.msra.mxu0 %v1657
    %1787 = vmatprep.subr.bf16.mxu0 0
    %1788 = vmatpush2.bf16.msra.mxu0 0
    %1789 = vmatprep.subr.bf16.mxu0 0
    %1790 = vmatpush2.bf16.msra.mxu0 0
    %1791 = vmatprep.subr.bf16.mxu0 0
    %1792 = vmatpush2.bf16.msra.mxu0 0
    %1793 = vmatprep.subr.bf16.mxu0 0
    %1794 = vmatpush2.bf16.msra.mxu0 0
    %1795 = vmatprep.subr.bf16.mxu0 0
    %1796 = vmatpush2.bf16.msra.mxu0 0
    %1797 = vmatprep.subr.bf16.mxu0 0
    %1798 = vmatpush2.bf16.msra.mxu0 0
    %1799 = vmatprep.subr.bf16.mxu0 0
    %1800 = vmatpush2.bf16.msra.mxu0 0
    %1801 = vmatprep.subr.bf16.mxu0 0
    %1802 = vmatpush2.bf16.msra.mxu0 0
    %1803 = vmatprep.mubr.bf16.mxu0 0
    %1804 = vmatmul.mubr.bf16.gmra.mxu0 %v1710
    %v1805 = vpop.f32.mrf.mxu0
    %v1806 = vadd.f32 %v1572, %v1805
    %v1807 = vpop.f32.mrf.mxu0
    %v1808 = vadd.f32 %v1572, %v1807
    %v1809 = vpop.f32.mrf.mxu0
    %v1810 = vpop.f32.mrf.mxu0
    %1811 = vdwg.mxu0
    %1812 = vmatprep.subr.bf16.mxu0 0
    %1813 = vmatpush1.bf16.msra.mxu0 0
    %1814 = vmatprep.subr.bf16.mxu0 0
    %1815 = vmatpush1.bf16.msra.mxu0 0
    %1816 = vmatprep.subr.bf16.mxu0 0
    %1817 = vmatpush1.bf16.msra.mxu0 0
    %1818 = vmatprep.subr.bf16.mxu0 %v1728
    %1819 = vmatpush1.bf16.msra.mxu0 %v1725
    %1820 = vmatprep.subr.bf16.mxu0 %v1678
    %1821 = vmatpush1.bf16.msra.mxu0 %v1677
    %1822 = vmatprep.subr.bf16.mxu0 %v1672
    %1823 = vmatpush1.bf16.msra.mxu0 %v1671
    %1824 = vmatprep.subr.bf16.mxu0 %v1666
    %1825 = vmatpush1.bf16.msra.mxu0 %v1665
    %1826 = vmatprep.subr.bf16.mxu0 %v1660
    %1827 = vmatpush1.bf16.msra.mxu0 %v1659
    %1828 = vmatprep.subr.bf16.mxu0 0
    %1829 = vmatpush2.bf16.msra.mxu0 0
    %1830 = vmatprep.subr.bf16.mxu0 0
    %1831 = vmatpush2.bf16.msra.mxu0 0
    %1832 = vmatprep.subr.bf16.mxu0 0
    %1833 = vmatpush2.bf16.msra.mxu0 0
    %1834 = vmatprep.subr.bf16.mxu0 0
    %1835 = vmatpush2.bf16.msra.mxu0 0
    %1836 = vmatprep.subr.bf16.mxu0 0
    %1837 = vmatpush2.bf16.msra.mxu0 0
    %1838 = vmatprep.subr.bf16.mxu0 0
    %1839 = vmatpush2.bf16.msra.mxu0 0
    %1840 = vmatprep.subr.bf16.mxu0 0
    %1841 = vmatpush2.bf16.msra.mxu0 0
    %1842 = vmatprep.subr.bf16.mxu0 0
    %1843 = vmatpush2.bf16.msra.mxu0 0
    %1844 = vmatprep.mubr.bf16.mxu0 0
    %1845 = vmatmul.mubr.bf16.gmra.mxu0 %v1710
    %v1846 = vpop.f32.mrf.mxu0
    %v1847 = vadd.f32 %v1572, %v1846
    %v1848 = vpop.f32.mrf.mxu0
    %v1849 = vadd.f32 %v1572, %v1848
    %v1850 = vpop.f32.mrf.mxu0
    %v1851 = vpop.f32.mrf.mxu0
    %1852 = vdwg.mxu0
    %v1853 = vmul.f32 %v1765, 0.2
    %v1854 = vmul.f32 %v1767, 0.2
    %v1855 = vmul.f32 %v1806, 0.2
    %v1856 = vmul.f32 %v1808, 0.2
    %v1857 = vmul.f32 %v1847, 0.2
    %v1858 = vmul.f32 %v1849, 0.2
    %v1859 = vmax.f32 %v1765, %v1853
    %v1860 = vmax.f32 %v1767, %v1854
    %v1861 = vmax.f32 %v1806, %v1855
    %v1862 = vmax.f32 %v1808, %v1856
    %v1863 = vmax.f32 %v1847, %v1857
    %v1864 = vmax.f32 %v1849, %v1858
    %v1865 = vld [vmem:[%s18] sm:$0x3f]
    %v1867 = vlaneseq
    %v1868 = vshrl.u32 %v1867, 7
    %v1869 = vsub.s32 0, %v1868
    %v1870 = vrot.slane %v1865, %v1869
    %v1871 = vlaneseq
    %v1872 = vshrl.u32 %v1871, 7
    %v1873 = vsub.s32 1, %v1872
    %v1874 = vrot.slane %v1865, %v1873
    %v1875 = vlaneseq
    %v1876 = vshrl.u32 %v1875, 7
    %v1877 = vsub.s32 2, %v1876
    %v1878 = vrot.slane %v1865, %v1877
    %v1879 = vlaneseq
    %v1880 = vshrl.u32 %v1879, 7
    %v1881 = vsub.s32 3, %v1880
    %v1882 = vrot.slane %v1865, %v1881
    %v1883 = vlaneseq
    %v1884 = vshrl.u32 %v1883, 7
    %v1885 = vsub.s32 4, %v1884
    %v1886 = vrot.slane %v1865, %v1885
    %v1887 = vlaneseq
    %v1888 = vshrl.u32 %v1887, 7
    %v1889 = vsub.s32 5, %v1888
    %v1890 = vrot.slane %v1865, %v1889
    %v1897 = vmul.f32 %v1859, %v1870
    %v1898 = vmul.f32 %v1860, %v1874
    %v1899 = vmul.f32 %v1861, %v1878
    %v1900 = vmul.f32 %v1862, %v1882
    %v1901 = vmul.f32 %v1863, %v1886
    %v1902 = vmul.f32 %v1864, %v1890
    %v1903 = vsel %vm103, %v1897, 0.0
    %v1904 = vsel %vm103, %v1898, 0.0
    %v1905 = vadd.f32 %v1903, %v1904
    %v1906 = vsel %vm103, %v1899, 0.0
    %v1907 = vadd.f32 %v1905, %v1906
    %v1908 = vsel %vm103, %v1900, 0.0
    %v1909 = vadd.f32 %v1907, %v1908
    %v1910 = vsel %vm103, %v1901, 0.0
    %v1911 = vadd.f32 %v1909, %v1910
    %vm1912 = vcmask 60416
    %v1913 = vsel %vm1912, %v1902, 0.0
    %v1914 = vadd.f32 %v1911, %v1913
    %1915 = vadd.xlane.f32.xlu0 %v1914
    %v1916 = vpop.xlane.xlu0 %1915
    %v1917 = vmul.f32 %v1916, 0.001953125
    %v1918 = vmul.f32 %v1897, %v1859
    %v1919 = vmul.f32 %v1898, %v1860
    %v1920 = vmul.f32 %v1899, %v1861
    %v1921 = vmul.f32 %v1900, %v1862
    %v1922 = vmul.f32 %v1901, %v1863
    %v1923 = vmul.f32 %v1902, %v1864
    %v1924 = vsel %vm103, %v1918, 0.0
    %v1925 = vsel %vm103, %v1919, 0.0
    %v1926 = vadd.f32 %v1924, %v1925
    %v1927 = vsel %vm103, %v1920, 0.0
    %v1928 = vadd.f32 %v1926, %v1927
    %v1929 = vsel %vm103, %v1921, 0.0
    %v1930 = vadd.f32 %v1928, %v1929
    %v1931 = vsel %vm103, %v1922, 0.0
    %v1932 = vadd.f32 %v1930, %v1931
    %v1933 = vsel %vm1912, %v1923, 0.0
    %v1934 = vadd.f32 %v1932, %v1933
    %1935 = vadd.xlane.f32.xlu0 %v1934
    %v1936 = vpop.xlane.xlu0 %1935
    %v1937 = vmul.f32 %v1936, 0.001953125
    %v1938 = vmul.f32 %v1917, %v1917
    %v1939 = vsub.f32 %v1937, %v1938
    %v1940 = vmax.f32 %v1939, 0.0
    %v1941 = vld [vmem:[%s16] sm:$0xf]
    %v1942 = vadd.f32 %v1940, 1e-05
    %v1943 = vrsqrt.pop %v1942
    %v1944 = vmul.f32 %v1941, %v1943
    %v1945 = vld [vmem:[%s17] sm:$0xf]
    %v1946 = vmul.f32 %v1917, %v1944
    %v1947 = vsub.f32 %v1945, %v1946
    %1949 = vset.pattern.permute.xlu0 0
    %1950 = vperm.xlu0 %1949, %v1944
    %v1951 = vpop.permute.xlu0 %1950
    %v1953 = vmul.f32 %v1859, %v1951
    %v1954 = vmul.f32 %v1860, %v1951
    %v1955 = vmul.f32 %v1861, %v1951
    %v1956 = vmul.f32 %v1862, %v1951
    %v1957 = vmul.f32 %v1863, %v1951
    %v1958 = vmul.f32 %v1864, %v1951
    %1960 = vset.pattern.permute.xlu0 0
    %1961 = vperm.xlu0 %1960, %v1947
    %v1962 = vpop.permute.xlu0 %1961
    %v1964 = vadd.f32 %v1953, %v1962
    %v1965 = vadd.f32 %v1954, %v1962
    %v1966 = vadd.f32 %v1955, %v1962
    %v1967 = vadd.f32 %v1956, %v1962
    %v1968 = vadd.f32 %v1957, %v1962
    %v1969 = vadd.f32 %v1958, %v1962
    %v1970 = vpack.c.bf16 %v1964, %v1964
    %v1971 = vpack.c.bf16 %v1965, %v1965
    %v1972 = vpack.c.bf16 %v1966, %v1966
    %v1973 = vpack.c.bf16 %v1967, %v1967
    %v1974 = vpack.c.bf16 %v1968, %v1968
    %v1975 = vpack.c.bf16 %v1969, %v1969
    %v1976 = vld [vmem:[#allocation8] sm:$0xff]
    %v1977 = vld [vmem:[#allocation8 + $0x8] sm:$0xff]
    %v1978 = vld [vmem:[#allocation8 + $0x10] sm:$0xff]
    %v1979 = vld [vmem:[#allocation8 + $0x18] sm:$0xff]
    %v1980 = vld [vmem:[#allocation8 + $0x20] sm:$0xff]
    %v1981 = vld [vmem:[#allocation8 + $0x28] sm:$0xff]
    %v1982 = vld [vmem:[#allocation8 + $0x30] sm:$0xff]
    %v1983 = vld [vmem:[#allocation8 + $0x38] sm:$0xff]
    %v1984 = vld [vmem:[#allocation8 + $0x40] sm:$0xff]
    %v1985 = vld [vmem:[#allocation8 + $0x48] sm:$0xff]
    %v1986 = vld [vmem:[#allocation8 + $0x50] sm:$0xff]
    %v1987 = vld [vmem:[#allocation8 + $0x58] sm:$0xff]
    %v1988 = vld [vmem:[#allocation8 + $0x60] sm:$0xff]
    %v1989 = vld [vmem:[#allocation8 + $0x68] sm:$0xff]
    %v1990 = vld [vmem:[#allocation8 + $0x70] sm:$0xff]
    %v1991 = vld [vmem:[#allocation8 + $0x78] sm:$0xff]
    %v1992 = vld [vmem:[#allocation8 + $0x80] sm:$0xff]
    %v1993 = vld [vmem:[#allocation8 + $0x88] sm:$0xff]
    %v1994 = vld [vmem:[#allocation8 + $0x90] sm:$0xff]
    %v1995 = vld [vmem:[#allocation8 + $0x98] sm:$0xff]
    %v1996 = vld [vmem:[#allocation8 + $0xa0] sm:$0xff]
    %v1997 = vld [vmem:[#allocation8 + $0xa8] sm:$0xff]
    %v1998 = vld [vmem:[#allocation8 + $0xb0] sm:$0xff]
    %v1999 = vld [vmem:[#allocation8 + $0xb8] sm:$0xff]
    %v2000 = vld [vmem:[#allocation8 + $0xc0] sm:$0xff]
    %v2001 = vld [vmem:[#allocation8 + $0xc8] sm:$0xff]
    %v2002 = vld [vmem:[#allocation8 + $0xd0] sm:$0xff]
    %v2003 = vld [vmem:[#allocation8 + $0xd8] sm:$0xff]
    %v2004 = vld [vmem:[#allocation8 + $0xe0] sm:$0xff]
    %v2005 = vld [vmem:[#allocation8 + $0xe8] sm:$0xff]
    %v2006 = vld [vmem:[#allocation8 + $0xf0] sm:$0xff]
    %v2007 = vld [vmem:[#allocation8 + $0xf8] sm:$0xff]
    %v2008 = vld [vmem:[#allocation8 + $0x100] sm:$0xff]
    %v2009 = vld [vmem:[#allocation8 + $0x108] sm:$0xff]
    %v2010 = vld [vmem:[#allocation8 + $0x110] sm:$0xff]
    %v2011 = vld [vmem:[#allocation8 + $0x118] sm:$0xff]
    %v2012 = vld [vmem:[#allocation8 + $0x120] sm:$0xff]
    %v2013 = vld [vmem:[#allocation8 + $0x128] sm:$0xff]
    %v2014 = vld [vmem:[#allocation8 + $0x130] sm:$0xff]
    %v2015 = vld [vmem:[#allocation8 + $0x138] sm:$0xff]
    %v2016 = vld [vmem:[#allocation8 + $0x140] sm:$0xff]
    %v2017 = vld [vmem:[#allocation8 + $0x148] sm:$0xff]
    %v2018 = vld [vmem:[#allocation8 + $0x150] sm:$0xff]
    %v2019 = vld [vmem:[#allocation8 + $0x158] sm:$0xff]
    %v2020 = vld [vmem:[#allocation8 + $0x160] sm:$0xff]
    %v2021 = vld [vmem:[#allocation8 + $0x168] sm:$0xff]
    %v2022 = vld [vmem:[#allocation8 + $0x170] sm:$0xff]
    %v2023 = vld [vmem:[#allocation8 + $0x178] sm:$0xff]
    %v2024 = vld [vmem:[#allocation8 + $0x180] sm:$0xff]
    %v2025 = vld [vmem:[#allocation8 + $0x188] sm:$0xff]
    %v2026 = vld [vmem:[#allocation8 + $0x190] sm:$0xff]
    %v2027 = vld [vmem:[#allocation8 + $0x198] sm:$0xff]
    %v2028 = vld [vmem:[#allocation8 + $0x1a0] sm:$0xff]
    %v2029 = vld [vmem:[#allocation8 + $0x1a8] sm:$0xff]
    %v2030 = vld [vmem:[#allocation8 + $0x1b0] sm:$0xff]
    %v2031 = vld [vmem:[#allocation8 + $0x1b8] sm:$0xff]
    %v2032 = vld [vmem:[#allocation8 + $0x1c0] sm:$0xff]
    %v2033 = vld [vmem:[#allocation8 + $0x1c8] sm:$0xff]
    %v2034 = vld [vmem:[#allocation8 + $0x1d0] sm:$0xff]
    %v2035 = vld [vmem:[#allocation8 + $0x1d8] sm:$0xff]
    %v2036 = vld [vmem:[#allocation8 + $0x1e0] sm:$0xff]
    %v2037 = vld [vmem:[#allocation8 + $0x1e8] sm:$0xff]
    %v2038 = vld [vmem:[#allocation8 + $0x1f0] sm:$0xff]
    %v2039 = vld [vmem:[#allocation8 + $0x1f8] sm:$0xff]
    %v2040 = vld [vmem:[#allocation8 + $0x200] sm:$0xff]
    %v2041 = vld [vmem:[#allocation8 + $0x208] sm:$0xff]
    %v2042 = vld [vmem:[#allocation8 + $0x210] sm:$0xff]
    %v2043 = vld [vmem:[#allocation8 + $0x218] sm:$0xff]
    %v2044 = vld [vmem:[#allocation8 + $0x220] sm:$0xff]
    %v2045 = vld [vmem:[#allocation8 + $0x228] sm:$0xff]
    %v2046 = vld [vmem:[#allocation8 + $0x230] sm:$0xff]
    %v2047 = vld [vmem:[#allocation8 + $0x238] sm:$0xff]
    %v2048 = vld [vmem:[#allocation8 + $0x240] sm:$0xff]
    %v2049 = vld [vmem:[#allocation8 + $0x248] sm:$0xff]
    %v2050 = vld [vmem:[#allocation8 + $0x250] sm:$0xff]
    %v2051 = vld [vmem:[#allocation8 + $0x258] sm:$0xff]
    %v2052 = vld [vmem:[#allocation8 + $0x260] sm:$0xff]
    %v2053 = vld [vmem:[#allocation8 + $0x268] sm:$0xff]
    %v2054 = vld [vmem:[#allocation8 + $0x270] sm:$0xff]
    %v2055 = vld [vmem:[#allocation8 + $0x278] sm:$0xff]
    %v2056 = vld [vmem:[#allocation8 + $0x280] sm:$0xff]
    %v2057 = vld [vmem:[#allocation8 + $0x288] sm:$0xff]
    %v2058 = vld [vmem:[#allocation8 + $0x290] sm:$0xff]
    %v2059 = vld [vmem:[#allocation8 + $0x298] sm:$0xff]
    %v2060 = vld [vmem:[#allocation8 + $0x2a0] sm:$0xff]
    %v2061 = vld [vmem:[#allocation8 + $0x2a8] sm:$0xff]
    %v2062 = vld [vmem:[#allocation8 + $0x2b0] sm:$0xff]
    %v2063 = vld [vmem:[#allocation8 + $0x2b8] sm:$0xff]
    %v2064 = vld [vmem:[#allocation8 + $0x2c0] sm:$0xff]
    %v2065 = vld [vmem:[#allocation8 + $0x2c8] sm:$0xff]
    %v2066 = vld [vmem:[#allocation8 + $0x2d0] sm:$0xff]
    %v2067 = vld [vmem:[#allocation8 + $0x2d8] sm:$0xff]
    %v2068 = vld [vmem:[#allocation8 + $0x2e0] sm:$0xff]
    %v2069 = vld [vmem:[#allocation8 + $0x2e8] sm:$0xff]
    %v2070 = vld [vmem:[#allocation8 + $0x2f0] sm:$0xff]
    %v2071 = vld [vmem:[#allocation8 + $0x2f8] sm:$0xff]
    %v2072 = vld [vmem:[#allocation8 + $0x300] sm:$0xff]
    %v2073 = vld [vmem:[#allocation8 + $0x308] sm:$0xff]
    %v2074 = vld [vmem:[#allocation8 + $0x310] sm:$0xff]
    %v2075 = vld [vmem:[#allocation8 + $0x318] sm:$0xff]
    %v2076 = vld [vmem:[#allocation8 + $0x320] sm:$0xff]
    %v2077 = vld [vmem:[#allocation8 + $0x328] sm:$0xff]
    %v2078 = vld [vmem:[#allocation8 + $0x330] sm:$0xff]
    %v2079 = vld [vmem:[#allocation8 + $0x338] sm:$0xff]
    %v2080 = vld [vmem:[#allocation8 + $0x340] sm:$0xff]
    %v2081 = vld [vmem:[#allocation8 + $0x348] sm:$0xff]
    %v2082 = vld [vmem:[#allocation8 + $0x350] sm:$0xff]
    %v2083 = vld [vmem:[#allocation8 + $0x358] sm:$0xff]
    %v2084 = vld [vmem:[#allocation8 + $0x360] sm:$0xff]
    %v2085 = vld [vmem:[#allocation8 + $0x368] sm:$0xff]
    %v2086 = vld [vmem:[#allocation8 + $0x370] sm:$0xff]
    %v2087 = vld [vmem:[#allocation8 + $0x378] sm:$0xff]
    %v2088 = vld [vmem:[#allocation8 + $0x380] sm:$0xff]
    %v2089 = vld [vmem:[#allocation8 + $0x388] sm:$0xff]
    %v2090 = vld [vmem:[#allocation8 + $0x390] sm:$0xff]
    %v2091 = vld [vmem:[#allocation8 + $0x398] sm:$0xff]
    %v2092 = vld [vmem:[#allocation8 + $0x3a0] sm:$0xff]
    %v2093 = vld [vmem:[#allocation8 + $0x3a8] sm:$0xff]
    %v2094 = vld [vmem:[#allocation8 + $0x3b0] sm:$0xff]
    %v2095 = vld [vmem:[#allocation8 + $0x3b8] sm:$0xff]
    %v2096 = vld [vmem:[#allocation8 + $0x3c0] sm:$0xff]
    %v2097 = vld [vmem:[#allocation8 + $0x3c8] sm:$0xff]
    %v2098 = vld [vmem:[#allocation8 + $0x3d0] sm:$0xff]
    %v2099 = vld [vmem:[#allocation8 + $0x3d8] sm:$0xff]
    %v2100 = vld [vmem:[#allocation8 + $0x3e0] sm:$0xff]
    %v2101 = vld [vmem:[#allocation8 + $0x3e8] sm:$0xff]
    %v2102 = vld [vmem:[#allocation8 + $0x3f0] sm:$0xff]
    %v2103 = vld [vmem:[#allocation8 + $0x3f8] sm:$0xff]
    %v2104 = vld [vmem:[#allocation8 + $0x400] sm:$0xff]
    %v2105 = vld [vmem:[#allocation8 + $0x408] sm:$0xff]
    %v2106 = vld [vmem:[#allocation8 + $0x410] sm:$0xff]
    %v2107 = vld [vmem:[#allocation8 + $0x418] sm:$0xff]
    %v2108 = vld [vmem:[#allocation8 + $0x420] sm:$0xff]
    %v2109 = vld [vmem:[#allocation8 + $0x428] sm:$0xff]
    %v2110 = vld [vmem:[#allocation8 + $0x430] sm:$0xff]
    %v2111 = vld [vmem:[#allocation8 + $0x438] sm:$0xff]
    %v2112 = vld [vmem:[#allocation8 + $0x440] sm:$0xff]
    %v2113 = vld [vmem:[#allocation8 + $0x448] sm:$0xff]
    %v2114 = vld [vmem:[#allocation8 + $0x450] sm:$0xff]
    %v2115 = vld [vmem:[#allocation8 + $0x458] sm:$0xff]
    %v2116 = vld [vmem:[#allocation8 + $0x460] sm:$0xff]
    %v2117 = vld [vmem:[#allocation8 + $0x468] sm:$0xff]
    %v2118 = vld [vmem:[#allocation8 + $0x470] sm:$0xff]
    %v2119 = vld [vmem:[#allocation8 + $0x478] sm:$0xff]
    %v2120 = vld [vmem:[#allocation8 + $0x480] sm:$0xff]
    %v2121 = vld [vmem:[#allocation8 + $0x488] sm:$0xff]
    %v2122 = vld [vmem:[#allocation8 + $0x490] sm:$0xff]
    %v2123 = vld [vmem:[#allocation8 + $0x498] sm:$0xff]
    %v2124 = vld [vmem:[#allocation8 + $0x4a0] sm:$0xff]
    %v2125 = vld [vmem:[#allocation8 + $0x4a8] sm:$0xff]
    %v2126 = vld [vmem:[#allocation8 + $0x4b0] sm:$0xff]
    %v2127 = vld [vmem:[#allocation8 + $0x4b8] sm:$0xff]
    %v2128 = vld [vmem:[#allocation8 + $0x4c0] sm:$0xff]
    %v2129 = vld [vmem:[#allocation8 + $0x4c8] sm:$0xff]
    %v2130 = vld [vmem:[#allocation8 + $0x4d0] sm:$0xff]
    %v2131 = vld [vmem:[#allocation8 + $0x4d8] sm:$0xff]
    %v2132 = vld [vmem:[#allocation8 + $0x4e0] sm:$0xff]
    %v2133 = vld [vmem:[#allocation8 + $0x4e8] sm:$0xff]
    %v2134 = vld [vmem:[#allocation8 + $0x4f0] sm:$0xff]
    %v2135 = vld [vmem:[#allocation8 + $0x4f8] sm:$0xff]
    %v2136 = vld [vmem:[#allocation8 + $0x500] sm:$0xff]
    %v2137 = vld [vmem:[#allocation8 + $0x508] sm:$0xff]
    %v2300 = vunpack.c.l.b16 %v1976
    %v2301 = vunpack.c.h.b16 %v1976
    %v2302 = vunpack.c.l.b16 %v1977
    %v2303 = vunpack.c.h.b16 %v1977
    %v2304 = vunpack.c.l.b16 %v1978
    %v2305 = vunpack.c.h.b16 %v1978
    %v2306 = vunpack.c.l.b16 %v1979
    %v2307 = vunpack.c.h.b16 %v1979
    %v2308 = vunpack.c.l.b16 %v1980
    %v2309 = vunpack.c.h.b16 %v1980
    %v2310 = vunpack.c.l.b16 %v1981
    %v2311 = vunpack.c.h.b16 %v1981
    %v2312 = vunpack.c.l.b16 %v1982
    %v2313 = vunpack.c.h.b16 %v1982
    %v2314 = vunpack.c.l.b16 %v1983
    %v2315 = vunpack.c.h.b16 %v1983
    %v2316 = vunpack.c.l.b16 %v1984
    %v2317 = vunpack.c.h.b16 %v1984
    %v2318 = vunpack.c.l.b16 %v1985
    %v2319 = vunpack.c.h.b16 %v1985
    %v2320 = vunpack.c.l.b16 %v1986
    %v2321 = vunpack.c.h.b16 %v1986
    %v2322 = vunpack.c.l.b16 %v1987
    %v2323 = vunpack.c.h.b16 %v1987
    %v2324 = vunpack.c.l.b16 %v1988
    %v2325 = vunpack.c.h.b16 %v1988
    %v2326 = vunpack.c.l.b16 %v1989
    %v2327 = vunpack.c.h.b16 %v1989
    %v2328 = vunpack.c.l.b16 %v1990
    %v2329 = vunpack.c.h.b16 %v1990
    %v2330 = vunpack.c.l.b16 %v1991
    %v2331 = vunpack.c.h.b16 %v1991
    %v2332 = vunpack.c.l.b16 %v1992
    %v2333 = vunpack.c.h.b16 %v1992
    %v2334 = vunpack.c.l.b16 %v1993
    %v2335 = vunpack.c.h.b16 %v1993
    %v2336 = vunpack.c.l.b16 %v1994
    %v2337 = vunpack.c.h.b16 %v1994
    %v2338 = vunpack.c.l.b16 %v1995
    %v2339 = vunpack.c.h.b16 %v1995
    %v2340 = vunpack.c.l.b16 %v1996
    %v2341 = vunpack.c.h.b16 %v1996
    %v2342 = vunpack.c.l.b16 %v1997
    %v2343 = vunpack.c.h.b16 %v1997
    %v2344 = vunpack.c.l.b16 %v1998
    %v2345 = vunpack.c.h.b16 %v1998
    %v2346 = vunpack.c.l.b16 %v1999
    %v2347 = vunpack.c.h.b16 %v1999
    %v2348 = vunpack.c.l.b16 %v2000
    %v2349 = vunpack.c.h.b16 %v2000
    %v2350 = vunpack.c.l.b16 %v2001
    %v2351 = vunpack.c.h.b16 %v2001
    %v2352 = vunpack.c.l.b16 %v2002
    %v2353 = vunpack.c.h.b16 %v2002
    %v2354 = vunpack.c.l.b16 %v2003
    %v2355 = vunpack.c.h.b16 %v2003
    %v2356 = vunpack.c.l.b16 %v2004
    %v2357 = vunpack.c.h.b16 %v2004
    %v2358 = vunpack.c.l.b16 %v2005
    %v2359 = vunpack.c.h.b16 %v2005
    %v2360 = vunpack.c.l.b16 %v2006
    %v2361 = vunpack.c.h.b16 %v2006
    %v2362 = vunpack.c.l.b16 %v2007
    %v2363 = vunpack.c.h.b16 %v2007
    %v2364 = vunpack.c.l.b16 %v2008
    %v2365 = vunpack.c.h.b16 %v2008
    %v2366 = vunpack.c.l.b16 %v2009
    %v2367 = vunpack.c.h.b16 %v2009
    %v2368 = vunpack.c.l.b16 %v2010
    %v2369 = vunpack.c.h.b16 %v2010
    %v2370 = vunpack.c.l.b16 %v2011
    %v2371 = vunpack.c.h.b16 %v2011
    %v2372 = vunpack.c.l.b16 %v2012
    %v2373 = vunpack.c.h.b16 %v2012
    %v2374 = vunpack.c.l.b16 %v2013
    %v2375 = vunpack.c.h.b16 %v2013
    %v2376 = vunpack.c.l.b16 %v2014
    %v2377 = vunpack.c.h.b16 %v2014
    %v2378 = vunpack.c.l.b16 %v2015
    %v2379 = vunpack.c.h.b16 %v2015
    %v2380 = vunpack.c.l.b16 %v2016
    %v2381 = vunpack.c.h.b16 %v2016
    %v2382 = vunpack.c.l.b16 %v2017
    %v2383 = vunpack.c.h.b16 %v2017
    %v2384 = vunpack.c.l.b16 %v2018
    %v2385 = vunpack.c.h.b16 %v2018
    %v2386 = vunpack.c.l.b16 %v2019
    %v2387 = vunpack.c.h.b16 %v2019
    %v2388 = vunpack.c.l.b16 %v2020
    %v2389 = vunpack.c.h.b16 %v2020
    %v2390 = vunpack.c.l.b16 %v2021
    %v2391 = vunpack.c.h.b16 %v2021
    %v2392 = vunpack.c.l.b16 %v2022
    %v2393 = vunpack.c.h.b16 %v2022
    %v2394 = vunpack.c.l.b16 %v2023
    %v2395 = vunpack.c.h.b16 %v2023
    %v2396 = vunpack.c.l.b16 %v2024
    %v2397 = vunpack.c.h.b16 %v2024
    %v2398 = vunpack.c.l.b16 %v2025
    %v2399 = vunpack.c.h.b16 %v2025
    %v2400 = vunpack.c.l.b16 %v2026
    %v2401 = vunpack.c.h.b16 %v2026
    %v2402 = vunpack.c.l.b16 %v2027
    %v2403 = vunpack.c.h.b16 %v2027
    %v2404 = vunpack.c.l.b16 %v2028
    %v2405 = vunpack.c.h.b16 %v2028
    %v2406 = vunpack.c.l.b16 %v2029
    %v2407 = vunpack.c.h.b16 %v2029
    %v2408 = vunpack.c.l.b16 %v2030
    %v2409 = vunpack.c.h.b16 %v2030
    %v2410 = vunpack.c.l.b16 %v2031
    %v2411 = vunpack.c.h.b16 %v2031
    %v2412 = vunpack.c.l.b16 %v2032
    %v2413 = vunpack.c.h.b16 %v2032
    %v2414 = vunpack.c.l.b16 %v2033
    %v2415 = vunpack.c.h.b16 %v2033
    %v2416 = vunpack.c.l.b16 %v2034
    %v2417 = vunpack.c.h.b16 %v2034
    %v2418 = vunpack.c.l.b16 %v2035
    %v2419 = vunpack.c.h.b16 %v2035
    %v2420 = vunpack.c.l.b16 %v2036
    %v2421 = vunpack.c.h.b16 %v2036
    %v2422 = vunpack.c.l.b16 %v2037
    %v2423 = vunpack.c.h.b16 %v2037
    %v2424 = vunpack.c.l.b16 %v2038
    %v2425 = vunpack.c.h.b16 %v2038
    %v2426 = vunpack.c.l.b16 %v2039
    %v2427 = vunpack.c.h.b16 %v2039
    %v2428 = vunpack.c.l.b16 %v2040
    %v2429 = vunpack.c.h.b16 %v2040
    %v2430 = vunpack.c.l.b16 %v2041
    %v2431 = vunpack.c.h.b16 %v2041
    %v2432 = vunpack.c.l.b16 %v2042
    %v2433 = vunpack.c.h.b16 %v2042
    %v2434 = vunpack.c.l.b16 %v2043
    %v2435 = vunpack.c.h.b16 %v2043
    %v2436 = vunpack.c.l.b16 %v2044
    %v2437 = vunpack.c.h.b16 %v2044
    %v2438 = vunpack.c.l.b16 %v2045
    %v2439 = vunpack.c.h.b16 %v2045
    %v2440 = vunpack.c.l.b16 %v2046
    %v2441 = vunpack.c.h.b16 %v2046
    %v2442 = vunpack.c.l.b16 %v2047
    %v2443 = vunpack.c.h.b16 %v2047
    %v2444 = vunpack.c.l.b16 %v2048
    %v2445 = vunpack.c.h.b16 %v2048
    %v2446 = vunpack.c.l.b16 %v2049
    %v2447 = vunpack.c.h.b16 %v2049
    %v2448 = vunpack.c.l.b16 %v2050
    %v2449 = vunpack.c.h.b16 %v2050
    %v2450 = vunpack.c.l.b16 %v2051
    %v2451 = vunpack.c.h.b16 %v2051
    %v2452 = vunpack.c.l.b16 %v2052
    %v2453 = vunpack.c.h.b16 %v2052
    %v2454 = vunpack.c.l.b16 %v2053
    %v2455 = vunpack.c.h.b16 %v2053
    %v2456 = vunpack.c.l.b16 %v2054
    %v2457 = vunpack.c.h.b16 %v2054
    %v2458 = vunpack.c.l.b16 %v2055
    %v2459 = vunpack.c.h.b16 %v2055
    %v2460 = vunpack.c.l.b16 %v2056
    %v2461 = vunpack.c.h.b16 %v2056
    %v2462 = vunpack.c.l.b16 %v2057
    %v2463 = vunpack.c.h.b16 %v2057
    %v2464 = vunpack.c.l.b16 %v2058
    %v2465 = vunpack.c.h.b16 %v2058
    %v2466 = vunpack.c.l.b16 %v2059
    %v2467 = vunpack.c.h.b16 %v2059
    %v2468 = vunpack.c.l.b16 %v2060
    %v2469 = vunpack.c.h.b16 %v2060
    %v2470 = vunpack.c.l.b16 %v2061
    %v2471 = vunpack.c.h.b16 %v2061
    %v2472 = vunpack.c.l.b16 %v2062
    %v2473 = vunpack.c.h.b16 %v2062
    %v2474 = vunpack.c.l.b16 %v2063
    %v2475 = vunpack.c.h.b16 %v2063
    %v2476 = vunpack.c.l.b16 %v2064
    %v2477 = vunpack.c.h.b16 %v2064
    %v2478 = vunpack.c.l.b16 %v2065
    %v2479 = vunpack.c.h.b16 %v2065
    %v2480 = vunpack.c.l.b16 %v2066
    %v2481 = vunpack.c.h.b16 %v2066
    %v2482 = vunpack.c.l.b16 %v2067
    %v2483 = vunpack.c.h.b16 %v2067
    %v2484 = vunpack.c.l.b16 %v2068
    %v2485 = vunpack.c.h.b16 %v2068
    %v2486 = vunpack.c.l.b16 %v2069
    %v2487 = vunpack.c.h.b16 %v2069
    %v2488 = vunpack.c.l.b16 %v2070
    %v2489 = vunpack.c.h.b16 %v2070
    %v2490 = vunpack.c.l.b16 %v2071
    %v2491 = vunpack.c.h.b16 %v2071
    %v2492 = vunpack.c.l.b16 %v2072
    %v2493 = vunpack.c.h.b16 %v2072
    %v2494 = vunpack.c.l.b16 %v2073
    %v2495 = vunpack.c.h.b16 %v2073
    %v2496 = vunpack.c.l.b16 %v2074
    %v2497 = vunpack.c.h.b16 %v2074
    %v2498 = vunpack.c.l.b16 %v2075
    %v2499 = vunpack.c.h.b16 %v2075
    %v2500 = vunpack.c.l.b16 %v2076
    %v2501 = vunpack.c.h.b16 %v2076
    %v2502 = vunpack.c.l.b16 %v2077
    %v2503 = vunpack.c.h.b16 %v2077
    %v2504 = vunpack.c.l.b16 %v2078
    %v2505 = vunpack.c.h.b16 %v2078
    %v2506 = vunpack.c.l.b16 %v2079
    %v2507 = vunpack.c.h.b16 %v2079
    %v2508 = vunpack.c.l.b16 %v2080
    %v2509 = vunpack.c.h.b16 %v2080
    %v2510 = vunpack.c.l.b16 %v2081
    %v2511 = vunpack.c.h.b16 %v2081
    %v2512 = vunpack.c.l.b16 %v2082
    %v2513 = vunpack.c.h.b16 %v2082
    %v2514 = vunpack.c.l.b16 %v2083
    %v2515 = vunpack.c.h.b16 %v2083
    %v2516 = vunpack.c.l.b16 %v2084
    %v2517 = vunpack.c.h.b16 %v2084
    %v2518 = vunpack.c.l.b16 %v2085
    %v2519 = vunpack.c.h.b16 %v2085
    %v2520 = vunpack.c.l.b16 %v2086
    %v2521 = vunpack.c.h.b16 %v2086
    %v2522 = vunpack.c.l.b16 %v2087
    %v2523 = vunpack.c.h.b16 %v2087
    %v2524 = vunpack.c.l.b16 %v2088
    %v2525 = vunpack.c.h.b16 %v2088
    %v2526 = vunpack.c.l.b16 %v2089
    %v2527 = vunpack.c.h.b16 %v2089
    %v2528 = vunpack.c.l.b16 %v2090
    %v2529 = vunpack.c.h.b16 %v2090
    %v2530 = vunpack.c.l.b16 %v2091
    %v2531 = vunpack.c.h.b16 %v2091
    %v2532 = vunpack.c.l.b16 %v2092
    %v2533 = vunpack.c.h.b16 %v2092
    %v2534 = vunpack.c.l.b16 %v2093
    %v2535 = vunpack.c.h.b16 %v2093
    %v2536 = vunpack.c.l.b16 %v2094
    %v2537 = vunpack.c.h.b16 %v2094
    %v2538 = vunpack.c.l.b16 %v2095
    %v2539 = vunpack.c.h.b16 %v2095
    %v2540 = vunpack.c.l.b16 %v2096
    %v2541 = vunpack.c.h.b16 %v2096
    %v2542 = vunpack.c.l.b16 %v2097
    %v2543 = vunpack.c.h.b16 %v2097
    %v2544 = vunpack.c.l.b16 %v2098
    %v2545 = vunpack.c.h.b16 %v2098
    %v2546 = vunpack.c.l.b16 %v2099
    %v2547 = vunpack.c.h.b16 %v2099
    %v2548 = vunpack.c.l.b16 %v2100
    %v2549 = vunpack.c.h.b16 %v2100
    %v2550 = vunpack.c.l.b16 %v2101
    %v2551 = vunpack.c.h.b16 %v2101
    %v2552 = vunpack.c.l.b16 %v2102
    %v2553 = vunpack.c.h.b16 %v2102
    %v2554 = vunpack.c.l.b16 %v2103
    %v2555 = vunpack.c.h.b16 %v2103
    %v2556 = vunpack.c.l.b16 %v2104
    %v2557 = vunpack.c.h.b16 %v2104
    %v2558 = vunpack.c.l.b16 %v2105
    %v2559 = vunpack.c.h.b16 %v2105
    %v2560 = vunpack.c.l.b16 %v2106
    %v2561 = vunpack.c.h.b16 %v2106
    %v2562 = vunpack.c.l.b16 %v2107
    %v2563 = vunpack.c.h.b16 %v2107
    %v2564 = vunpack.c.l.b16 %v2108
    %v2565 = vunpack.c.h.b16 %v2108
    %v2566 = vunpack.c.l.b16 %v2109
    %v2567 = vunpack.c.h.b16 %v2109
    %v2568 = vunpack.c.l.b16 %v2110
    %v2569 = vunpack.c.h.b16 %v2110
    %v2570 = vunpack.c.l.b16 %v2111
    %v2571 = vunpack.c.h.b16 %v2111
    %v2572 = vunpack.c.l.b16 %v2112
    %v2573 = vunpack.c.h.b16 %v2112
    %v2574 = vunpack.c.l.b16 %v2113
    %v2575 = vunpack.c.h.b16 %v2113
    %v2576 = vunpack.c.l.b16 %v2114
    %v2577 = vunpack.c.h.b16 %v2114
    %v2578 = vunpack.c.l.b16 %v2115
    %v2579 = vunpack.c.h.b16 %v2115
    %v2580 = vunpack.c.l.b16 %v2116
    %v2581 = vunpack.c.h.b16 %v2116
    %v2582 = vunpack.c.l.b16 %v2117
    %v2583 = vunpack.c.h.b16 %v2117
    %v2584 = vunpack.c.l.b16 %v2118
    %v2585 = vunpack.c.h.b16 %v2118
    %v2586 = vunpack.c.l.b16 %v2119
    %v2587 = vunpack.c.h.b16 %v2119
    %v2588 = vunpack.c.l.b16 %v2120
    %v2589 = vunpack.c.h.b16 %v2120
    %v2590 = vunpack.c.l.b16 %v2121
    %v2591 = vunpack.c.h.b16 %v2121
    %v2592 = vunpack.c.l.b16 %v2122
    %v2593 = vunpack.c.h.b16 %v2122
    %v2594 = vunpack.c.l.b16 %v2123
    %v2595 = vunpack.c.h.b16 %v2123
    %v2596 = vunpack.c.l.b16 %v2124
    %v2597 = vunpack.c.h.b16 %v2124
    %v2598 = vunpack.c.l.b16 %v2125
    %v2599 = vunpack.c.h.b16 %v2125
    %v2600 = vunpack.c.l.b16 %v2126
    %v2601 = vunpack.c.h.b16 %v2126
    %v2602 = vunpack.c.l.b16 %v2127
    %v2603 = vunpack.c.h.b16 %v2127
    %v2604 = vunpack.c.l.b16 %v2128
    %v2605 = vunpack.c.h.b16 %v2128
    %v2606 = vunpack.c.l.b16 %v2129
    %v2607 = vunpack.c.h.b16 %v2129
    %v2608 = vunpack.c.l.b16 %v2130
    %v2609 = vunpack.c.h.b16 %v2130
    %v2610 = vunpack.c.l.b16 %v2131
    %v2611 = vunpack.c.h.b16 %v2131
    %v2612 = vunpack.c.l.b16 %v2132
    %v2613 = vunpack.c.h.b16 %v2132
    %v2614 = vunpack.c.l.b16 %v2133
    %v2615 = vunpack.c.h.b16 %v2133
    %v2616 = vunpack.c.l.b16 %v2134
    %v2617 = vunpack.c.h.b16 %v2134
    %v2618 = vunpack.c.l.b16 %v2135
    %v2619 = vunpack.c.h.b16 %v2135
    %v2620 = vunpack.c.l.b16 %v2136
    %v2621 = vunpack.c.h.b16 %v2136
    %v2622 = vunpack.c.l.b16 %v2137
    %v2623 = vunpack.c.h.b16 %v2137
    %v2624 = vpack.c.b16 %v2304, %v2300
    %v2625 = vpack.c.b16 %v2305, %v2301
    %v2626 = vpack.c.b16 %v2306, %v2302
    %v2627 = vpack.c.b16 %v2307, %v2303
    %v2628 = vpack.c.b16 %v2312, %v2308
    %v2629 = vpack.c.b16 %v2313, %v2309
    %v2630 = vpack.c.b16 %v2314, %v2310
    %v2631 = vpack.c.b16 %v2315, %v2311
    %v2632 = vpack.c.b16 %v2320, %v2316
    %v2633 = vpack.c.b16 %v2321, %v2317
    %v2634 = vpack.c.b16 %v2322, %v2318
    %v2635 = vpack.c.b16 %v2323, %v2319
    %v2636 = vpack.c.b16 %v2328, %v2324
    %v2637 = vpack.c.b16 %v2329, %v2325
    %v2638 = vpack.c.b16 %v2330, %v2326
    %v2639 = vpack.c.b16 %v2331, %v2327
    %v2640 = vpack.c.b16 %v2336, %v2332
    %v2641 = vpack.c.b16 %v2337, %v2333
    %v2642 = vpack.c.b16 %v2338, %v2334
    %v2643 = vpack.c.b16 %v2339, %v2335
    %v2644 = vpack.c.b16 %v2344, %v2340
    %v2645 = vpack.c.b16 %v2345, %v2341
    %v2646 = vpack.c.b16 %v2346, %v2342
    %v2647 = vpack.c.b16 %v2347, %v2343
    %v2648 = vpack.c.b16 %v2352, %v2348
    %v2649 = vpack.c.b16 %v2353, %v2349
    %v2650 = vpack.c.b16 %v2354, %v2350
    %v2651 = vpack.c.b16 %v2355, %v2351
    %v2652 = vpack.c.b16 %v2360, %v2356
    %v2653 = vpack.c.b16 %v2361, %v2357
    %v2654 = vpack.c.b16 %v2362, %v2358
    %v2655 = vpack.c.b16 %v2363, %v2359
    %v2656 = vpack.c.b16 %v2368, %v2364
    %v2657 = vpack.c.b16 %v2369, %v2365
    %v2658 = vpack.c.b16 %v2370, %v2366
    %v2659 = vpack.c.b16 %v2371, %v2367
    %v2660 = vpack.c.b16 %v2376, %v2372
    %v2661 = vpack.c.b16 %v2377, %v2373
    %v2662 = vpack.c.b16 %v2378, %v2374
    %v2663 = vpack.c.b16 %v2379, %v2375
    %v2664 = vpack.c.b16 %v2384, %v2380
    %v2665 = vpack.c.b16 %v2385, %v2381
    %v2666 = vpack.c.b16 %v2386, %v2382
    %v2667 = vpack.c.b16 %v2387, %v2383
    %v2668 = vpack.c.b16 %v2392, %v2388
    %v2669 = vpack.c.b16 %v2393, %v2389
    %v2670 = vpack.c.b16 %v2394, %v2390
    %v2671 = vpack.c.b16 %v2395, %v2391
    %v2672 = vpack.c.b16 %v2400, %v2396
    %v2673 = vpack.c.b16 %v2401, %v2397
    %v2674 = vpack.c.b16 %v2402, %v2398
    %v2675 = vpack.c.b16 %v2403, %v2399
    %v2676 = vpack.c.b16 %v2408, %v2404
    %v2677 = vpack.c.b16 %v2409, %v2405
    %v2678 = vpack.c.b16 %v2410, %v2406
    %v2679 = vpack.c.b16 %v2411, %v2407
    %v2680 = vpack.c.b16 %v2416, %v2412
    %v2681 = vpack.c.b16 %v2417, %v2413
    %v2682 = vpack.c.b16 %v2418, %v2414
    %v2683 = vpack.c.b16 %v2419, %v2415
    %v2684 = vpack.c.b16 %v2424, %v2420
    %v2685 = vpack.c.b16 %v2425, %v2421
    %v2686 = vpack.c.b16 %v2426, %v2422
    %v2687 = vpack.c.b16 %v2427, %v2423
    %v2688 = vpack.c.b16 %v2432, %v2428
    %v2689 = vpack.c.b16 %v2433, %v2429
    %v2690 = vpack.c.b16 %v2434, %v2430
    %v2691 = vpack.c.b16 %v2435, %v2431
    %v2692 = vpack.c.b16 %v2440, %v2436
    %v2693 = vpack.c.b16 %v2441, %v2437
    %v2694 = vpack.c.b16 %v2442, %v2438
    %v2695 = vpack.c.b16 %v2443, %v2439
    %v2696 = vpack.c.b16 %v2448, %v2444
    %v2697 = vpack.c.b16 %v2449, %v2445
    %v2698 = vpack.c.b16 %v2450, %v2446
    %v2699 = vpack.c.b16 %v2451, %v2447
    %v2700 = vpack.c.b16 %v2456, %v2452
    %v2701 = vpack.c.b16 %v2457, %v2453
    %v2702 = vpack.c.b16 %v2458, %v2454
    %v2703 = vpack.c.b16 %v2459, %v2455
    %v2704 = vpack.c.b16 %v2464, %v2460
    %v2705 = vpack.c.b16 %v2465, %v2461
    %v2706 = vpack.c.b16 %v2466, %v2462
    %v2707 = vpack.c.b16 %v2467, %v2463
    %v2708 = vpack.c.b16 %v2472, %v2468
    %v2709 = vpack.c.b16 %v2473, %v2469
    %v2710 = vpack.c.b16 %v2474, %v2470
    %v2711 = vpack.c.b16 %v2475, %v2471
    %v2712 = vpack.c.b16 %v2480, %v2476
    %v2713 = vpack.c.b16 %v2481, %v2477
    %v2714 = vpack.c.b16 %v2482, %v2478
    %v2715 = vpack.c.b16 %v2483, %v2479
    %v2716 = vpack.c.b16 %v2488, %v2484
    %v2717 = vpack.c.b16 %v2489, %v2485
    %v2718 = vpack.c.b16 %v2490, %v2486
    %v2719 = vpack.c.b16 %v2491, %v2487
    %v2720 = vpack.c.b16 %v2496, %v2492
    %v2721 = vpack.c.b16 %v2497, %v2493
    %v2722 = vpack.c.b16 %v2498, %v2494
    %v2723 = vpack.c.b16 %v2499, %v2495
    %v2724 = vpack.c.b16 %v2504, %v2500
    %v2725 = vpack.c.b16 %v2505, %v2501
    %v2726 = vpack.c.b16 %v2506, %v2502
    %v2727 = vpack.c.b16 %v2507, %v2503
    %v2728 = vpack.c.b16 %v2512, %v2508
    %v2729 = vpack.c.b16 %v2513, %v2509
    %v2730 = vpack.c.b16 %v2514, %v2510
    %v2731 = vpack.c.b16 %v2515, %v2511
    %v2732 = vpack.c.b16 %v2520, %v2516
    %v2733 = vpack.c.b16 %v2521, %v2517
    %v2734 = vpack.c.b16 %v2522, %v2518
    %v2735 = vpack.c.b16 %v2523, %v2519
    %v2736 = vpack.c.b16 %v2528, %v2524
    %v2737 = vpack.c.b16 %v2529, %v2525
    %v2738 = vpack.c.b16 %v2530, %v2526
    %v2739 = vpack.c.b16 %v2531, %v2527
    %v2740 = vpack.c.b16 %v2536, %v2532
    %v2741 = vpack.c.b16 %v2537, %v2533
    %v2742 = vpack.c.b16 %v2538, %v2534
    %v2743 = vpack.c.b16 %v2539, %v2535
    %v2744 = vpack.c.b16 %v2544, %v2540
    %v2745 = vpack.c.b16 %v2545, %v2541
    %v2746 = vpack.c.b16 %v2546, %v2542
    %v2747 = vpack.c.b16 %v2547, %v2543
    %v2748 = vpack.c.b16 %v2552, %v2548
    %v2749 = vpack.c.b16 %v2553, %v2549
    %v2750 = vpack.c.b16 %v2554, %v2550
    %v2751 = vpack.c.b16 %v2555, %v2551
    %v2752 = vpack.c.b16 %v2560, %v2556
    %v2753 = vpack.c.b16 %v2561, %v2557
    %v2754 = vpack.c.b16 %v2562, %v2558
    %v2755 = vpack.c.b16 %v2563, %v2559
    %v2756 = vpack.c.b16 %v2568, %v2564
    %v2757 = vpack.c.b16 %v2569, %v2565
    %v2758 = vpack.c.b16 %v2570, %v2566
    %v2759 = vpack.c.b16 %v2571, %v2567
    %v2760 = vpack.c.b16 %v2576, %v2572
    %v2761 = vpack.c.b16 %v2577, %v2573
    %v2762 = vpack.c.b16 %v2578, %v2574
    %v2763 = vpack.c.b16 %v2579, %v2575
    %v2764 = vpack.c.b16 %v2584, %v2580
    %v2765 = vpack.c.b16 %v2585, %v2581
    %v2766 = vpack.c.b16 %v2586, %v2582
    %v2767 = vpack.c.b16 %v2587, %v2583
    %v2768 = vpack.c.b16 %v2592, %v2588
    %v2769 = vpack.c.b16 %v2593, %v2589
    %v2770 = vpack.c.b16 %v2594, %v2590
    %v2771 = vpack.c.b16 %v2595, %v2591
    %v2772 = vpack.c.b16 %v2600, %v2596
    %v2773 = vpack.c.b16 %v2601, %v2597
    %v2774 = vpack.c.b16 %v2602, %v2598
    %v2775 = vpack.c.b16 %v2603, %v2599
    %v2776 = vpack.c.b16 %v2608, %v2604
    %v2777 = vpack.c.b16 %v2609, %v2605
    %v2778 = vpack.c.b16 %v2610, %v2606
    %v2779 = vpack.c.b16 %v2611, %v2607
    %v2780 = vpack.c.b16 %v2616, %v2612
    %v2781 = vpack.c.b16 %v2617, %v2613
    %v2782 = vpack.c.b16 %v2618, %v2614
    %v2783 = vpack.c.b16 %v2619, %v2615
    %v2784 = vpack.c.b16 %v2620, %v2620
    %v2785 = vpack.c.b16 %v2621, %v2621
    %v2786 = vpack.c.b16 %v2622, %v2622
    %v2787 = vpack.c.b16 %v2623, %v2623
    %vm2948 = vcmask 64512
    %v2950 = vsel %vm2948, %v1975, 0
    %v2953 = vsel %vm103, %v2784, 0
    %v2956 = vsel %vm103, %v2785, 0
    %v2959 = vsel %vm103, %v2786, 0
    %v2962 = vsel %vm103, %v2787, 0
    %2964 = vmatprep.subr.bf16.mxu0 %v2653
    %2965 = vmatpush1.bf16.msra.mxu0 %v2652
    %2966 = vmatprep.subr.bf16.mxu0 %v2649
    %2967 = vmatpush1.bf16.msra.mxu0 %v2648
    %2968 = vmatprep.subr.bf16.mxu0 %v2645
    %2969 = vmatpush1.bf16.msra.mxu0 %v2644
    %2970 = vmatprep.subr.bf16.mxu0 %v2641
    %2971 = vmatpush1.bf16.msra.mxu0 %v2640
    %2972 = vmatprep.subr.bf16.mxu0 %v2637
    %2973 = vmatpush1.bf16.msra.mxu0 %v2636
    %2974 = vmatprep.subr.bf16.mxu0 %v2633
    %2975 = vmatpush1.bf16.msra.mxu0 %v2632
    %2976 = vmatprep.subr.bf16.mxu0 %v2629
    %2977 = vmatpush1.bf16.msra.mxu0 %v2628
    %2978 = vmatprep.subr.bf16.mxu0 %v2625
    %2979 = vmatpush1.bf16.msra.mxu0 %v2624
    %2980 = vmatprep.subr.bf16.mxu0 %v2685
    %2981 = vmatpush2.bf16.msra.mxu0 %v2684
    %2982 = vmatprep.subr.bf16.mxu0 %v2681
    %2983 = vmatpush2.bf16.msra.mxu0 %v2680
    %2984 = vmatprep.subr.bf16.mxu0 %v2677
    %2985 = vmatpush2.bf16.msra.mxu0 %v2676
    %2986 = vmatprep.subr.bf16.mxu0 %v2673
    %2987 = vmatpush2.bf16.msra.mxu0 %v2672
    %2988 = vmatprep.subr.bf16.mxu0 %v2669
    %2989 = vmatpush2.bf16.msra.mxu0 %v2668
    %2990 = vmatprep.subr.bf16.mxu0 %v2665
    %2991 = vmatpush2.bf16.msra.mxu0 %v2664
    %2992 = vmatprep.subr.bf16.mxu0 %v2661
    %2993 = vmatpush2.bf16.msra.mxu0 %v2660
    %2994 = vmatprep.subr.bf16.mxu0 %v2657
    %2995 = vmatpush2.bf16.msra.mxu0 %v2656
    %2996 = vmatprep.mubr.bf16.mxu0 %v1971
    %2997 = vmatmul.mubr.bf16.gmra.mxu0 %v1970
    %v2998 = vpop.f32.mrf.mxu0
    %v2999 = vadd.f32 0.0, %v2998
    %v3000 = vpop.f32.mrf.mxu0
    %v3001 = vadd.f32 0.0, %v3000
    %v3002 = vpop.f32.mrf.mxu0
    %v3003 = vpop.f32.mrf.mxu0
    %3004 = vdwg.mxu0
    %3005 = vmatprep.subr.bf16.mxu0 %v2717
    %3006 = vmatpush1.bf16.msra.mxu0 %v2716
    %3007 = vmatprep.subr.bf16.mxu0 %v2713
    %3008 = vmatpush1.bf16.msra.mxu0 %v2712
    %3009 = vmatprep.subr.bf16.mxu0 %v2709
    %3010 = vmatpush1.bf16.msra.mxu0 %v2708
    %3011 = vmatprep.subr.bf16.mxu0 %v2705
    %3012 = vmatpush1.bf16.msra.mxu0 %v2704
    %3013 = vmatprep.subr.bf16.mxu0 %v2701
    %3014 = vmatpush1.bf16.msra.mxu0 %v2700
    %3015 = vmatprep.subr.bf16.mxu0 %v2697
    %3016 = vmatpush1.bf16.msra.mxu0 %v2696
    %3017 = vmatprep.subr.bf16.mxu0 %v2693
    %3018 = vmatpush1.bf16.msra.mxu0 %v2692
    %3019 = vmatprep.subr.bf16.mxu0 %v2689
    %3020 = vmatpush1.bf16.msra.mxu0 %v2688
    %3021 = vmatprep.subr.bf16.mxu0 %v2749
    %3022 = vmatpush2.bf16.msra.mxu0 %v2748
    %3023 = vmatprep.subr.bf16.mxu0 %v2745
    %3024 = vmatpush2.bf16.msra.mxu0 %v2744
    %3025 = vmatprep.subr.bf16.mxu0 %v2741
    %3026 = vmatpush2.bf16.msra.mxu0 %v2740
    %3027 = vmatprep.subr.bf16.mxu0 %v2737
    %3028 = vmatpush2.bf16.msra.mxu0 %v2736
    %3029 = vmatprep.subr.bf16.mxu0 %v2733
    %3030 = vmatpush2.bf16.msra.mxu0 %v2732
    %3031 = vmatprep.subr.bf16.mxu0 %v2729
    %3032 = vmatpush2.bf16.msra.mxu0 %v2728
    %3033 = vmatprep.subr.bf16.mxu0 %v2725
    %3034 = vmatpush2.bf16.msra.mxu0 %v2724
    %3035 = vmatprep.subr.bf16.mxu0 %v2721
    %3036 = vmatpush2.bf16.msra.mxu0 %v2720
    %3037 = vmatprep.mubr.bf16.mxu0 %v1973
    %3038 = vmatmul.mubr.bf16.gmra.mxu0 %v1972
    %v3039 = vpop.f32.mrf.mxu0
    %v3040 = vadd.f32 %v2999, %v3039
    %v3041 = vpop.f32.mrf.mxu0
    %v3042 = vadd.f32 %v3001, %v3041
    %v3043 = vpop.f32.mrf.mxu0
    %v3044 = vpop.f32.mrf.mxu0
    %3045 = vdwg.mxu0
    %3046 = vmatprep.subr.bf16.mxu0 %v2781
    %3047 = vmatpush1.bf16.msra.mxu0 %v2780
    %3048 = vmatprep.subr.bf16.mxu0 %v2777
    %3049 = vmatpush1.bf16.msra.mxu0 %v2776
    %3050 = vmatprep.subr.bf16.mxu0 %v2773
    %3051 = vmatpush1.bf16.msra.mxu0 %v2772
    %3052 = vmatprep.subr.bf16.mxu0 %v2769
    %3053 = vmatpush1.bf16.msra.mxu0 %v2768
    %3054 = vmatprep.subr.bf16.mxu0 %v2765
    %3055 = vmatpush1.bf16.msra.mxu0 %v2764
    %3056 = vmatprep.subr.bf16.mxu0 %v2761
    %3057 = vmatpush1.bf16.msra.mxu0 %v2760
    %3058 = vmatprep.subr.bf16.mxu0 %v2757
    %3059 = vmatpush1.bf16.msra.mxu0 %v2756
    %3060 = vmatprep.subr.bf16.mxu0 %v2753
    %3061 = vmatpush1.bf16.msra.mxu0 %v2752
    %3062 = vmatprep.subr.bf16.mxu0 0
    %3063 = vmatpush2.bf16.msra.mxu0 0
    %3064 = vmatprep.subr.bf16.mxu0 0
    %3065 = vmatpush2.bf16.msra.mxu0 0
    %3066 = vmatprep.subr.bf16.mxu0 0
    %3067 = vmatpush2.bf16.msra.mxu0 0
    %3068 = vmatprep.subr.bf16.mxu0 0
    %3069 = vmatpush2.bf16.msra.mxu0 0
    %3070 = vmatprep.subr.bf16.mxu0 0
    %3071 = vmatpush2.bf16.msra.mxu0 0
    %3072 = vmatprep.subr.bf16.mxu0 0
    %3073 = vmatpush2.bf16.msra.mxu0 0
    %3074 = vmatprep.subr.bf16.mxu0 0
    %3075 = vmatpush2.bf16.msra.mxu0 0
    %3076 = vmatprep.subr.bf16.mxu0 %v2956
    %3077 = vmatpush2.bf16.msra.mxu0 %v2953
    %3078 = vmatprep.mubr.bf16.mxu0 %v2950
    %3079 = vmatmul.mubr.bf16.gmra.mxu0 %v1974
    %v3080 = vpop.f32.mrf.mxu0
    %v3081 = vadd.f32 %v3040, %v3080
    %v3082 = vpop.f32.mrf.mxu0
    %v3083 = vadd.f32 %v3042, %v3082
    %v3084 = vpop.f32.mrf.mxu0
    %v3085 = vpop.f32.mrf.mxu0
    %3086 = vdwg.mxu0
    %3087 = vmatprep.subr.bf16.mxu0 %v2655
    %3088 = vmatpush1.bf16.msra.mxu0 %v2654
    %3089 = vmatprep.subr.bf16.mxu0 %v2651
    %3090 = vmatpush1.bf16.msra.mxu0 %v2650
    %3091 = vmatprep.subr.bf16.mxu0 %v2647
    %3092 = vmatpush1.bf16.msra.mxu0 %v2646
    %3093 = vmatprep.subr.bf16.mxu0 %v2643
    %3094 = vmatpush1.bf16.msra.mxu0 %v2642
    %3095 = vmatprep.subr.bf16.mxu0 %v2639
    %3096 = vmatpush1.bf16.msra.mxu0 %v2638
    %3097 = vmatprep.subr.bf16.mxu0 %v2635
    %3098 = vmatpush1.bf16.msra.mxu0 %v2634
    %3099 = vmatprep.subr.bf16.mxu0 %v2631
    %3100 = vmatpush1.bf16.msra.mxu0 %v2630
    %3101 = vmatprep.subr.bf16.mxu0 %v2627
    %3102 = vmatpush1.bf16.msra.mxu0 %v2626
    %3103 = vmatprep.subr.bf16.mxu0 %v2687
    %3104 = vmatpush2.bf16.msra.mxu0 %v2686
    %3105 = vmatprep.subr.bf16.mxu0 %v2683
    %3106 = vmatpush2.bf16.msra.mxu0 %v2682
    %3107 = vmatprep.subr.bf16.mxu0 %v2679
    %3108 = vmatpush2.bf16.msra.mxu0 %v2678
    %3109 = vmatprep.subr.bf16.mxu0 %v2675
    %3110 = vmatpush2.bf16.msra.mxu0 %v2674
    %3111 = vmatprep.subr.bf16.mxu0 %v2671
    %3112 = vmatpush2.bf16.msra.mxu0 %v2670
    %3113 = vmatprep.subr.bf16.mxu0 %v2667
    %3114 = vmatpush2.bf16.msra.mxu0 %v2666
    %3115 = vmatprep.subr.bf16.mxu0 %v2663
    %3116 = vmatpush2.bf16.msra.mxu0 %v2662
    %3117 = vmatprep.subr.bf16.mxu0 %v2659
    %3118 = vmatpush2.bf16.msra.mxu0 %v2658
    %3119 = vmatprep.mubr.bf16.mxu0 %v1971
    %3120 = vmatmul.mubr.bf16.gmra.mxu0 %v1970
    %v3121 = vpop.f32.mrf.mxu0
    %v3122 = vadd.f32 0.0, %v3121
    %v3123 = vpop.f32.mrf.mxu0
    %v3124 = vadd.f32 0.0, %v3123
    %v3125 = vpop.f32.mrf.mxu0
    %v3126 = vpop.f32.mrf.mxu0
    %3127 = vdwg.mxu0
    %3128 = vmatprep.subr.bf16.mxu0 %v2719
    %3129 = vmatpush1.bf16.msra.mxu0 %v2718
    %3130 = vmatprep.subr.bf16.mxu0 %v2715
    %3131 = vmatpush1.bf16.msra.mxu0 %v2714
    %3132 = vmatprep.subr.bf16.mxu0 %v2711
    %3133 = vmatpush1.bf16.msra.mxu0 %v2710
    %3134 = vmatprep.subr.bf16.mxu0 %v2707
    %3135 = vmatpush1.bf16.msra.mxu0 %v2706
    %3136 = vmatprep.subr.bf16.mxu0 %v2703
    %3137 = vmatpush1.bf16.msra.mxu0 %v2702
    %3138 = vmatprep.subr.bf16.mxu0 %v2699
    %3139 = vmatpush1.bf16.msra.mxu0 %v2698
    %3140 = vmatprep.subr.bf16.mxu0 %v2695
    %3141 = vmatpush1.bf16.msra.mxu0 %v2694
    %3142 = vmatprep.subr.bf16.mxu0 %v2691
    %3143 = vmatpush1.bf16.msra.mxu0 %v2690
    %3144 = vmatprep.subr.bf16.mxu0 %v2751
    %3145 = vmatpush2.bf16.msra.mxu0 %v2750
    %3146 = vmatprep.subr.bf16.mxu0 %v2747
    %3147 = vmatpush2.bf16.msra.mxu0 %v2746
    %3148 = vmatprep.subr.bf16.mxu0 %v2743
    %3149 = vmatpush2.bf16.msra.mxu0 %v2742
    %3150 = vmatprep.subr.bf16.mxu0 %v2739
    %3151 = vmatpush2.bf16.msra.mxu0 %v2738
    %3152 = vmatprep.subr.bf16.mxu0 %v2735
    %3153 = vmatpush2.bf16.msra.mxu0 %v2734
    %3154 = vmatprep.subr.bf16.mxu0 %v2731
    %3155 = vmatpush2.bf16.msra.mxu0 %v2730
    %3156 = vmatprep.subr.bf16.mxu0 %v2727
    %3157 = vmatpush2.bf16.msra.mxu0 %v2726
    %3158 = vmatprep.subr.bf16.mxu0 %v2723
    %3159 = vmatpush2.bf16.msra.mxu0 %v2722
    %3160 = vmatprep.mubr.bf16.mxu0 %v1973
    %3161 = vmatmul.mubr.bf16.gmra.mxu0 %v1972
    %v3162 = vpop.f32.mrf.mxu0
    %v3163 = vadd.f32 %v3122, %v3162
    %v3164 = vpop.f32.mrf.mxu0
    %v3165 = vadd.f32 %v3124, %v3164
    %v3166 = vpop.f32.mrf.mxu0
    %v3167 = vpop.f32.mrf.mxu0
    %3168 = vdwg.mxu0
    %3169 = vmatprep.subr.bf16.mxu0 %v2783
    %3170 = vmatpush1.bf16.msra.mxu0 %v2782
    %3171 = vmatprep.subr.bf16.mxu0 %v2779
    %3172 = vmatpush1.bf16.msra.mxu0 %v2778
    %3173 = vmatprep.subr.bf16.mxu0 %v2775
    %3174 = vmatpush1.bf16.msra.mxu0 %v2774
    %3175 = vmatprep.subr.bf16.mxu0 %v2771
    %3176 = vmatpush1.bf16.msra.mxu0 %v2770
    %3177 = vmatprep.subr.bf16.mxu0 %v2767
    %3178 = vmatpush1.bf16.msra.mxu0 %v2766
    %3179 = vmatprep.subr.bf16.mxu0 %v2763
    %3180 = vmatpush1.bf16.msra.mxu0 %v2762
    %3181 = vmatprep.subr.bf16.mxu0 %v2759
    %3182 = vmatpush1.bf16.msra.mxu0 %v2758
    %3183 = vmatprep.subr.bf16.mxu0 %v2755
    %3184 = vmatpush1.bf16.msra.mxu0 %v2754
    %3185 = vmatprep.subr.bf16.mxu0 0
    %3186 = vmatpush2.bf16.msra.mxu0 0
    %3187 = vmatprep.subr.bf16.mxu0 0
    %3188 = vmatpush2.bf16.msra.mxu0 0
    %3189 = vmatprep.subr.bf16.mxu0 0
    %3190 = vmatpush2.bf16.msra.mxu0 0
    %3191 = vmatprep.subr.bf16.mxu0 0
    %3192 = vmatpush2.bf16.msra.mxu0 0
    %3193 = vmatprep.subr.bf16.mxu0 0
    %3194 = vmatpush2.bf16.msra.mxu0 0
    %3195 = vmatprep.subr.bf16.mxu0 0
    %3196 = vmatpush2.bf16.msra.mxu0 0
    %3197 = vmatprep.subr.bf16.mxu0 0
    %3198 = vmatpush2.bf16.msra.mxu0 0
    %3199 = vmatprep.subr.bf16.mxu0 %v2962
    %3200 = vmatpush2.bf16.msra.mxu0 %v2959
    %3201 = vmatprep.mubr.bf16.mxu0 %v2950
    %3202 = vmatmul.mubr.bf16.gmra.mxu0 %v1974
    %v3203 = vpop.f32.mrf.mxu0
    %v3204 = vadd.f32 %v3163, %v3203
    %v3205 = vpop.f32.mrf.mxu0
    %v3206 = vadd.f32 %v3165, %v3205
    %v3207 = vpop.f32.mrf.mxu0
    %v3208 = vpop.f32.mrf.mxu0
    %3209 = vdwg.mxu0
    %3210 = vst [vmem:[#allocation3] sm:$0xf] %v3081
    %3211 = vst [vmem:[#allocation3 + $0x8] sm:$0xf] %v3083
    %3212 = vst [vmem:[#allocation3 + $0x10] sm:$0xf] %v3204
    %3213 = vst [vmem:[#allocation3 + $0x18] sm:$0xf] %v3206
    %v3214 = vld [vmem:[%s20] sm:$0x3]
    %v3215 = vld [vmem:[#allocation3] sm:$0xf]
    %v3216 = vld [vmem:[#allocation3 + $0x8] sm:$0xf]
    %v3217 = vld [vmem:[#allocation3 + $0x10] sm:$0xf]
    %v3218 = vld [vmem:[#allocation3 + $0x18] sm:$0xf]
    %v3219 = vpack.c.bf16 %v3215, %v3215
    %v3220 = vpack.c.bf16 %v3216, %v3216
    %v3221 = vpack.c.bf16 %v3217, %v3217
    %v3222 = vpack.c.bf16 %v3218, %v3218
    %v3223 = vld [vmem:[%s21] sm:$0x7]
    %3225 = vset.pattern.permute.xlu0 0
    %3226 = vperm.xlu0 %3225, %v3223
    %v3227 = vpop.permute.xlu0 %3226
    %vm3229 = vcmask 31744
    %v3231 = vsel %vm3229, %v3214, 0
    %vm3233 = vcmask 1041408
    %v3235 = vsel %vm3233, %v3219, 0
    %v3238 = vsel %vm3233, %v3220, 0
    %v3241 = vsel %vm3233, %v3221, 0
    %v3244 = vsel %vm3233, %v3222, 0
    %3246 = vmatprep.subr.bf16.mxu0 0
    %3247 = vmatpush1.bf16.msra.mxu0 0
    %3248 = vmatprep.subr.bf16.mxu0 0
    %3249 = vmatpush1.bf16.msra.mxu0 0
    %3250 = vmatprep.subr.bf16.mxu0 0
    %3251 = vmatpush1.bf16.msra.mxu0 0
    %3252 = vmatprep.subr.bf16.mxu0 0
    %3253 = vmatpush1.bf16.msra.mxu0 0
    %3254 = vmatprep.subr.bf16.mxu0 0
    %3255 = vmatpush1.bf16.msra.mxu0 0
    %3256 = vmatprep.subr.bf16.mxu0 0
    %3257 = vmatpush1.bf16.msra.mxu0 0
    %3258 = vmatprep.subr.bf16.mxu0 0
    %3259 = vmatpush1.bf16.msra.mxu0 0
    %3260 = vmatprep.subr.bf16.mxu0 %v3238
    %3261 = vmatpush1.bf16.msra.mxu0 %v3235
    %3262 = vmatprep.subr.bf16.mxu0 0
    %3263 = vmatpush2.bf16.msra.mxu0 0
    %3264 = vmatprep.subr.bf16.mxu0 0
    %3265 = vmatpush2.bf16.msra.mxu0 0
    %3266 = vmatprep.subr.bf16.mxu0 0
    %3267 = vmatpush2.bf16.msra.mxu0 0
    %3268 = vmatprep.subr.bf16.mxu0 0
    %3269 = vmatpush2.bf16.msra.mxu0 0
    %3270 = vmatprep.subr.bf16.mxu0 0
    %3271 = vmatpush2.bf16.msra.mxu0 0
    %3272 = vmatprep.subr.bf16.mxu0 0
    %3273 = vmatpush2.bf16.msra.mxu0 0
    %3274 = vmatprep.subr.bf16.mxu0 0
    %3275 = vmatpush2.bf16.msra.mxu0 0
    %3276 = vmatprep.subr.bf16.mxu0 0
    %3277 = vmatpush2.bf16.msra.mxu0 0
    %3278 = vmatprep.mubr.bf16.mxu0 0
    %3279 = vmatmul.mubr.bf16.gmra.mxu0 %v3231
    %v3280 = vpop.f32.mrf.mxu0
    %v3281 = vadd.f32 %v3227, %v3280
    %v3282 = vpop.f32.mrf.mxu0
    %v3283 = vadd.f32 %v3227, %v3282
    %v3284 = vpop.f32.mrf.mxu0
    %v3285 = vpop.f32.mrf.mxu0
    %3286 = vdwg.mxu0
    %3287 = vmatprep.subr.bf16.mxu0 0
    %3288 = vmatpush1.bf16.msra.mxu0 0
    %3289 = vmatprep.subr.bf16.mxu0 0
    %3290 = vmatpush1.bf16.msra.mxu0 0
    %3291 = vmatprep.subr.bf16.mxu0 0
    %3292 = vmatpush1.bf16.msra.mxu0 0
    %3293 = vmatprep.subr.bf16.mxu0 0
    %3294 = vmatpush1.bf16.msra.mxu0 0
    %3295 = vmatprep.subr.bf16.mxu0 0
    %3296 = vmatpush1.bf16.msra.mxu0 0
    %3297 = vmatprep.subr.bf16.mxu0 0
    %3298 = vmatpush1.bf16.msra.mxu0 0
    %3299 = vmatprep.subr.bf16.mxu0 0
    %3300 = vmatpush1.bf16.msra.mxu0 0
    %3301 = vmatprep.subr.bf16.mxu0 %v3244
    %3302 = vmatpush1.bf16.msra.mxu0 %v3241
    %3303 = vmatprep.subr.bf16.mxu0 0
    %3304 = vmatpush2.bf16.msra.mxu0 0
    %3305 = vmatprep.subr.bf16.mxu0 0
    %3306 = vmatpush2.bf16.msra.mxu0 0
    %3307 = vmatprep.subr.bf16.mxu0 0
    %3308 = vmatpush2.bf16.msra.mxu0 0
    %3309 = vmatprep.subr.bf16.mxu0 0
    %3310 = vmatpush2.bf16.msra.mxu0 0
    %3311 = vmatprep.subr.bf16.mxu0 0
    %3312 = vmatpush2.bf16.msra.mxu0 0
    %3313 = vmatprep.subr.bf16.mxu0 0
    %3314 = vmatpush2.bf16.msra.mxu0 0
    %3315 = vmatprep.subr.bf16.mxu0 0
    %3316 = vmatpush2.bf16.msra.mxu0 0
    %3317 = vmatprep.subr.bf16.mxu0 0
    %3318 = vmatpush2.bf16.msra.mxu0 0
    %3319 = vmatprep.mubr.bf16.mxu0 0
    %3320 = vmatmul.mubr.bf16.gmra.mxu0 %v3231
    %v3321 = vpop.f32.mrf.mxu0
    %v3322 = vadd.f32 %v3227, %v3321
    %v3323 = vpop.f32.mrf.mxu0
    %v3324 = vadd.f32 %v3227, %v3323
    %v3325 = vpop.f32.mrf.mxu0
    %v3326 = vpop.f32.mrf.mxu0
    %3327 = vdwg.mxu0
    %v3328 = vxor.u32 %v3281, 2147483648
    %v3329 = vxor.u32 %v3283, 2147483648
    %v3330 = vxor.u32 %v3322, 2147483648
    %v3331 = vxor.u32 %v3324, 2147483648
    %v3332 = vmul.f32 %v3328, 1.442695
    %v3333 = vpow.pop %v3332
    %v3334 = vmul.f32 %v3329, 1.442695
    %v3335 = vpow.pop %v3334
    %v3336 = vmul.f32 %v3330, 1.442695
    %v3337 = vpow.pop %v3336
    %v3338 = vmul.f32 %v3331, 1.442695
    %v3339 = vpow.pop %v3338
    %v3340 = vadd.f32 %v3333, 1.0
    %v3341 = vadd.f32 %v3335, 1.0
    %v3342 = vadd.f32 %v3337, 1.0
    %v3343 = vadd.f32 %v3339, 1.0
    %v3344 = vrcp.pop %v3340
    %v3345 = vmul.f32 1.0, %v3344
    %v3346 = vrcp.pop %v3341
    %v3347 = vmul.f32 1.0, %v3346
    %v3348 = vrcp.pop %v3342
    %v3349 = vmul.f32 1.0, %v3348
    %v3350 = vrcp.pop %v3343
    %v3351 = vmul.f32 1.0, %v3350
    %3352 = vst [vmem:[#allocation10] sm:$0x7] %v3345
    %3353 = vst [vmem:[#allocation10 + $0x8] sm:$0x7] %v3347
    %v3356 = vrot.slane %v3349, 5
    %v3357 = vrot.slane %v3351, 5
    %3360 = vst [vmem:[#allocation10] sm:$0x38] %v3356
    %3361 = vst [vmem:[#allocation10 + $0x8] sm:$0x38] %v3357
    // Predicated region
    $region98: #{tpu_custom_call.1} parent=1 // pred_check
      _
    $region99: #{tpu_custom_call.1} parent=1 // pred_check_branch
      %3363 = sbr.rel (0) target = $region101
    $region100: #{tpu_custom_call.1} parent=1 // pred_region
      %s3365 = ssub.s32 256, 256
      %3366 = vsyncadd [#allocation7], %s3365
      %s3368 = sshll.u32 [#allocation10], 4
      %s3369 = int_to_ptr.vmem [resolvable:$true] %s3368
      %3371 = dma.vmem_to_hbm [thread:$0]  %s3369, 256, %s22, [#allocation7]
    $region101: #{tpu_custom_call.1} parent=1 // pred_fallthru
      _
    // Predicated region
    $region102: #{tpu_custom_call.1} parent=1 // pred_check
      _
    $region103: #{tpu_custom_call.1} parent=1 // pred_check_branch
      %3373 = sbr.rel (0) target = $region105
    $region104: #{tpu_custom_call.1} parent=1 // pred_region
      %3374 = dma.done [#allocation7], 256
    $region105: #{tpu_custom_call.1} parent=1 // pred_fallthru
      _
    %3375 = vsyncpa [#allocation6], 1
    %3376 = vsyncpa [#allocation9], 1
    %3377 = vsyncpa [#allocation7], 1

</llo_original>
